<compile_context>
chip_gen: v7x
topology: tpu7x:2x2x1
jax: 0.10.0
libtpu: 0.0.40
codegen_flags: <defaults>
</compile_context>

<pallas_src>
import functools

import jax
import jax.numpy as jnp
import numpy as np
from jax.experimental import pallas as pl
from jax.experimental.pallas import tpu as pltpu

BN_EPS = 1e-5


def _lin_bn_prelu(x, w_ref, v_ref, a):
    """Linear (bf16 operands, f32 acc) -> BatchNorm1d (training-mode batch
    stats, one-pass variance) -> PReLU.  v_ref rows: [bias, gamma, beta]."""
    h = jnp.dot(x.astype(jnp.bfloat16), w_ref[...],
                preferred_element_type=jnp.float32) + v_ref[0:1, :]
    mean = jnp.mean(h, axis=0, keepdims=True)
    var = jnp.mean(h * h, axis=0, keepdims=True) - mean * mean
    hn = (h - mean) * jax.lax.rsqrt(var + BN_EPS) * v_ref[1:2, :] + v_ref[2:3, :]
    return jnp.where(hn >= 0.0, hn, a * hn)


def vae_kernel(
    # inputs
    x_ref, eps_ref, prelu_ref,
    ew1, ev1, ew2, ev2, ew3, ev3,
    wml, bml,
    dw1, dv1, dw2, dv2, dw3, dv3,
    dw4, db4,
    # outputs
    recon_ref, mulogvar_ref,
):
    x = x_ref[...]
    L = eps_ref.shape[1]

    # ---- encoder ----
    h = _lin_bn_prelu(x, ew1, ev1, prelu_ref[0])
    h = _lin_bn_prelu(h, ew2, ev2, prelu_ref[1])
    h = _lin_bn_prelu(h, ew3, ev3, prelu_ref[2])

    # fused mu||logvar projection: one (B, 2L) matmul instead of two (B, L)
    ml = jnp.dot(h.astype(jnp.bfloat16), wml[...],
                 preferred_element_type=jnp.float32) + bml[...]
    mu = ml[:, :L]
    logvar = ml[:, L:]

    # ---- reparameterize ----
    z = mu + eps_ref[...] * jnp.exp(0.5 * logvar)

    # ---- decoder ----
    d = _lin_bn_prelu(z, dw1, dv1, prelu_ref[3])
    d = _lin_bn_prelu(d, dw2, dv2, prelu_ref[4])
    d = _lin_bn_prelu(d, dw3, dv3, prelu_ref[5])
    recon = jax.nn.sigmoid(
        jnp.dot(d.astype(jnp.bfloat16), dw4[...],
                preferred_element_type=jnp.float32) + db4[...]
    )

    recon_ref[...] = recon
    mulogvar_ref[...] = ml


# ---------------------------------------------------------------------------
# Parameter construction / packing
# ---------------------------------------------------------------------------

def init_params(key, input_neurons, latent_width, hidden_width):
    """PyTorch-style init: Linear W,b ~ U(-1/sqrt(fan_in), +1/sqrt(fan_in)),
    BatchNorm gamma=1 beta=0, PReLU a=0.25 (one per PReLU module)."""
    H = hidden_width
    enc_dims = [(input_neurons, H), (H, 2 * H), (2 * H, 4 * H)]
    dec_dims = [(latent_width, 4 * H), (4 * H, 2 * H), (2 * H, H), (H, input_neurons)]

    def linear(k, fi, fo):
        kw, kb = jax.random.split(k)
        bound = 1.0 / np.sqrt(fi)
        w = jax.random.uniform(kw, (fi, fo), jnp.float32, -bound, bound)
        b = jax.random.uniform(kb, (fo,), jnp.float32, -bound, bound)
        return w, b

    keys = iter(jax.random.split(key, 16))

    enc = []
    for fi, fo in enc_dims:
        w, b = linear(next(keys), fi, fo)
        enc.append(dict(w=w, b=b,
                        gamma=jnp.ones((fo,), jnp.float32),
                        beta=jnp.zeros((fo,), jnp.float32)))

    w21, b21 = linear(next(keys), 4 * H, latent_width)
    w22, b22 = linear(next(keys), 4 * H, latent_width)

    dec = []
    for fi, fo in dec_dims[:3]:
        w, b = linear(next(keys), fi, fo)
        dec.append(dict(w=w, b=b,
                        gamma=jnp.ones((fo,), jnp.float32),
                        beta=jnp.zeros((fo,), jnp.float32)))
    w4, b4 = linear(next(keys), *dec_dims[3])

    prelu = jnp.full((6,), 0.25, jnp.float32)  # 3 encoder + 3 decoder PReLUs
    params = dict(enc=enc, fc21=(w21, b21), fc22=(w22, b22), dec=dec, out=(w4, b4))
    return prelu, params


def _pack_params(params):
    """bf16-cast weights once; pack (b, gamma, beta) into one (3, fo) array per
    BN layer; fuse fc21/fc22 into one projection."""
    packed = []
    for layer in params["enc"]:
        packed.append(layer["w"].astype(jnp.bfloat16))
        packed.append(jnp.stack([layer["b"], layer["gamma"], layer["beta"]], axis=0))

    w21, b21 = params["fc21"]
    w22, b22 = params["fc22"]
    packed.append(jnp.concatenate([w21, w22], axis=1).astype(jnp.bfloat16))
    packed.append(jnp.concatenate([b21, b22], axis=0)[None, :])

    for layer in params["dec"]:
        packed.append(layer["w"].astype(jnp.bfloat16))
        packed.append(jnp.stack([layer["b"], layer["gamma"], layer["beta"]], axis=0))

    w4, b4 = params["out"]
    packed.append(w4.astype(jnp.bfloat16))
    packed.append(b4[None, :])
    return packed


# ---------------------------------------------------------------------------
# Wrapper
# ---------------------------------------------------------------------------

@functools.partial(jax.jit, static_argnums=(4,))
def vae_forward(x, eps, prelu, params, input_neurons):
    x = x.reshape(-1, input_neurons)  # mirrors x.view(-1, input_neurons)
    B = x.shape[0]
    L = eps.shape[1]
    H = params["enc"][0]["w"].shape[1]
    D = input_neurons

    packed = _pack_params(params)
    args = [x, eps, prelu] + packed

    vmem = pl.BlockSpec(memory_space=pltpu.MemorySpace.VMEM)
    smem = pl.BlockSpec(memory_space=pltpu.MemorySpace.SMEM)
    in_specs = [vmem, vmem, smem] + [vmem] * len(packed)

    out_shape = (
        jax.ShapeDtypeStruct((B, D), jnp.float32),       # recon
        jax.ShapeDtypeStruct((B, 2 * L), jnp.float32),   # mu || logvar
    )
    out_specs = (vmem, vmem)

    # advisory cost estimate for XLA's scheduler
    mm_dims = [(D, H), (H, 2 * H), (2 * H, 4 * H), (4 * H, 2 * L),
               (L, 4 * H), (4 * H, 2 * H), (2 * H, H), (H, D)]
    flops = 2 * B * sum(fi * fo for fi, fo in mm_dims)
    transcendentals = B * (L + D) + 14 * H
    param_bytes = sum(int(np.prod(p.shape)) * p.dtype.itemsize for p in packed)
    bytes_accessed = param_bytes + 4 * (B * D + B * L) + 4 * (B * D + B * 2 * L)

    recon, mulogvar = pl.pallas_call(
        vae_kernel,
        out_shape=out_shape,
        in_specs=in_specs,
        out_specs=out_specs,
        cost_estimate=pl.CostEstimate(
            flops=flops, transcendentals=transcendentals,
            bytes_accessed=bytes_accessed),
    )(*args)

    mu = mulogvar[:, :L]
    logvar = mulogvar[:, L:]
    return recon, mu, logvar


# ---------------------------------------------------------------------------
# Pure-JAX reference (mirrors kernel math: bf16 matmul operands, f32 acc,
# one-pass variance) for correctness checking.
# ---------------------------------------------------------------------------

def vae_reference(x, eps, prelu, params, input_neurons):
    x = x.reshape(-1, input_neurons)

    def mm(a, w):
        return jnp.dot(a.astype(jnp.bfloat16), w.astype(jnp.bfloat16),
                       preferred_element_type=jnp.float32)

    def lbp(h, layer, a):
        h = mm(h, layer["w"]) + layer["b"][None, :]
        m = jnp.mean(h, axis=0, keepdims=True)
        v = jnp.mean(h * h, axis=0, keepdims=True) - m * m
        hn = (h - m) * jax.lax.rsqrt(v + BN_EPS) * layer["gamma"][None, :] \
            + layer["beta"][None, :]
        return jnp.where(hn >= 0.0, hn, a * hn)

    h = x
    for i, layer in enumerate(params["enc"]):
        h = lbp(h, layer, prelu[i])
    w21, b21 = params["fc21"]
    w22, b22 = params["fc22"]
    mu = mm(h, w21) + b21[None, :]
    logvar = mm(h, w22) + b22[None, :]
    z = mu + eps * jnp.exp(0.5 * logvar)
    d = z
    for i, layer in enumerate(params["dec"]):
        d = lbp(d, layer, prelu[3 + i])
    w4, b4 = params["out"]
    recon = jax.nn.sigmoid(mm(d, w4) + b4[None, :])
    return recon, mu, logvar


if __name__ == "__main__":
    # Small feature dims, batch large enough (128) to fill MXU rows.
    INPUT_NEURONS = 64
    LATENT = 16
    HIDDEN = 32
    BATCH = 128

    key = jax.random.PRNGKey(0)
    k_param, k_x, k_eps = jax.random.split(key, 3)

    prelu, params = init_params(k_param, INPUT_NEURONS, LATENT, HIDDEN)
    x = jax.random.uniform(k_x, (BATCH, INPUT_NEURONS), jnp.float32)
    eps = jax.random.normal(k_eps, (BATCH, LATENT), jnp.float32)

    recon, mu, logvar = vae_forward(x, eps, prelu, params, INPUT_NEURONS)
    jax.block_until_ready((recon, mu, logvar))

    r_ref, mu_ref, lv_ref = vae_reference(x, eps, prelu, params, INPUT_NEURONS)
    np.testing.assert_allclose(np.asarray(recon), np.asarray(r_ref),
                               rtol=5e-3, atol=5e-3)
    np.testing.assert_allclose(np.asarray(mu), np.asarray(mu_ref),
                               rtol=5e-3, atol=5e-3)
    np.testing.assert_allclose(np.asarray(logvar), np.asarray(lv_ref),
                               rtol=5e-3, atol=5e-3)

    print("KERNEL_OK")
</pallas_src>

<mosaic_0001>
module attributes {stable_mosaic.version = 11 : i64} {
  func.func @vae_kernel(%arg0: memref<128x64xf32, #tpu.memory_space<vmem>>, %arg1: memref<128x16xf32, #tpu.memory_space<vmem>>, %arg2: memref<6xf32, #tpu.memory_space<smem>>, %arg3: memref<64x32xbf16, #tpu.memory_space<vmem>>, %arg4: memref<3x32xf32, #tpu.memory_space<vmem>>, %arg5: memref<32x64xbf16, #tpu.memory_space<vmem>>, %arg6: memref<3x64xf32, #tpu.memory_space<vmem>>, %arg7: memref<64x128xbf16, #tpu.memory_space<vmem>>, %arg8: memref<3x128xf32, #tpu.memory_space<vmem>>, %arg9: memref<128x32xbf16, #tpu.memory_space<vmem>>, %arg10: memref<1x32xf32, #tpu.memory_space<vmem>>, %arg11: memref<16x128xbf16, #tpu.memory_space<vmem>>, %arg12: memref<3x128xf32, #tpu.memory_space<vmem>>, %arg13: memref<128x64xbf16, #tpu.memory_space<vmem>>, %arg14: memref<3x64xf32, #tpu.memory_space<vmem>>, %arg15: memref<64x32xbf16, #tpu.memory_space<vmem>>, %arg16: memref<3x32xf32, #tpu.memory_space<vmem>>, %arg17: memref<32x64xbf16, #tpu.memory_space<vmem>>, %arg18: memref<1x64xf32, #tpu.memory_space<vmem>>, %arg19: memref<128x64xf32, #tpu.memory_space<vmem>>, %arg20: memref<128x32xf32, #tpu.memory_space<vmem>>) attributes {dimension_semantics = [], scalar_prefetch = 0 : i64, scratch_operands = 0 : i64, tpu.core_type = #tpu.core_type<tc>} {
    %c0 = arith.constant 0 : index
    %c0_0 = arith.constant 0 : index
    %0 = vector.load %arg0[%c0, %c0_0] : memref<128x64xf32, #tpu.memory_space<vmem>>, vector<128x64xf32>
    %c0_1 = arith.constant 0 : index
    %1 = memref.load %arg2[%c0_1] : memref<6xf32, #tpu.memory_space<smem>>
    %2 = arith.truncf %0 : vector<128x64xf32> to vector<128x64xbf16>
    %c0_2 = arith.constant 0 : index
    %c0_3 = arith.constant 0 : index
    %3 = vector.load %arg3[%c0_2, %c0_3] : memref<64x32xbf16, #tpu.memory_space<vmem>>, vector<64x32xbf16>
    %cst = arith.constant dense<0.000000e+00> : vector<128x32xf32>
    %4 = tpu.matmul %2, %3, %cst {dimension_numbers = #tpu.dot_dimension_numbers<[1], [0], [0], [1], [0, 0, 1, 1], [], []>} : vector<128x64xbf16>, vector<64x32xbf16>, vector<128x32xf32> -> vector<128x32xf32>
    %c0_4 = arith.constant 0 : index
    %c0_5 = arith.constant 0 : index
    %5 = vector.load %arg4[%c0_4, %c0_5] : memref<3x32xf32, #tpu.memory_space<vmem>>, vector<1x32xf32>
    %6 = vector.broadcast %5 : vector<1x32xf32> to vector<128x32xf32>
    %7 = arith.addf %4, %6 : vector<128x32xf32>
    %cst_6 = arith.constant dense<0.000000e+00> : vector<32xf32>
    %8 = vector.multi_reduction <add>, %7, %cst_6 [0] : vector<128x32xf32> to vector<32xf32>
    %9 = vector.shape_cast %8 : vector<32xf32> to vector<1x32xf32>
    %cst_7 = arith.constant 1.280000e+02 : f32
    %10 = vector.broadcast %cst_7 : f32 to vector<1x32xf32>
    %11 = arith.divf %9, %10 : vector<1x32xf32>
    %12 = arith.mulf %7, %7 : vector<128x32xf32>
    %cst_8 = arith.constant dense<0.000000e+00> : vector<32xf32>
    %13 = vector.multi_reduction <add>, %12, %cst_8 [0] : vector<128x32xf32> to vector<32xf32>
    %14 = vector.shape_cast %13 : vector<32xf32> to vector<1x32xf32>
    %cst_9 = arith.constant 1.280000e+02 : f32
    %15 = vector.broadcast %cst_9 : f32 to vector<1x32xf32>
    %16 = arith.divf %14, %15 : vector<1x32xf32>
    %17 = arith.mulf %11, %11 : vector<1x32xf32>
    %18 = arith.subf %16, %17 : vector<1x32xf32>
    %19 = vector.broadcast %11 : vector<1x32xf32> to vector<128x32xf32>
    %20 = arith.subf %7, %19 : vector<128x32xf32>
    %cst_10 = arith.constant 9.99999974E-6 : f32
    %21 = vector.broadcast %cst_10 : f32 to vector<1x32xf32>
    %22 = arith.addf %18, %21 : vector<1x32xf32>
    %23 = math.rsqrt %22 : vector<1x32xf32>
    %24 = vector.broadcast %23 : vector<1x32xf32> to vector<128x32xf32>
    %25 = arith.mulf %20, %24 : vector<128x32xf32>
    %c1 = arith.constant 1 : index
    %c0_11 = arith.constant 0 : index
    %26 = vector.load %arg4[%c1, %c0_11] : memref<3x32xf32, #tpu.memory_space<vmem>>, vector<1x32xf32>
    %27 = vector.broadcast %26 : vector<1x32xf32> to vector<128x32xf32>
    %28 = arith.mulf %25, %27 : vector<128x32xf32>
    %c2 = arith.constant 2 : index
    %c0_12 = arith.constant 0 : index
    %29 = vector.load %arg4[%c2, %c0_12] : memref<3x32xf32, #tpu.memory_space<vmem>>, vector<1x32xf32>
    %30 = vector.broadcast %29 : vector<1x32xf32> to vector<128x32xf32>
    %31 = arith.addf %28, %30 : vector<128x32xf32>
    %cst_13 = arith.constant 0.000000e+00 : f32
    %32 = vector.broadcast %cst_13 : f32 to vector<128x32xf32>
    %33 = arith.cmpf oge, %31, %32 : vector<128x32xf32>
    %34 = vector.broadcast %1 : f32 to vector<128x32xf32>
    %35 = arith.mulf %34, %31 : vector<128x32xf32>
    %36 = arith.select %33, %31, %35 : vector<128x32xi1>, vector<128x32xf32>
    %c1_14 = arith.constant 1 : index
    %37 = memref.load %arg2[%c1_14] : memref<6xf32, #tpu.memory_space<smem>>
    %38 = arith.truncf %36 : vector<128x32xf32> to vector<128x32xbf16>
    %c0_15 = arith.constant 0 : index
    %c0_16 = arith.constant 0 : index
    %39 = vector.load %arg5[%c0_15, %c0_16] : memref<32x64xbf16, #tpu.memory_space<vmem>>, vector<32x64xbf16>
    %cst_17 = arith.constant dense<0.000000e+00> : vector<128x64xf32>
    %40 = tpu.matmul %38, %39, %cst_17 {dimension_numbers = #tpu.dot_dimension_numbers<[1], [0], [0], [1], [0, 0, 1, 1], [], []>} : vector<128x32xbf16>, vector<32x64xbf16>, vector<128x64xf32> -> vector<128x64xf32>
    %c0_18 = arith.constant 0 : index
    %c0_19 = arith.constant 0 : index
    %41 = vector.load %arg6[%c0_18, %c0_19] : memref<3x64xf32, #tpu.memory_space<vmem>>, vector<1x64xf32>
    %42 = vector.broadcast %41 : vector<1x64xf32> to vector<128x64xf32>
    %43 = arith.addf %40, %42 : vector<128x64xf32>
    %cst_20 = arith.constant dense<0.000000e+00> : vector<64xf32>
    %44 = vector.multi_reduction <add>, %43, %cst_20 [0] : vector<128x64xf32> to vector<64xf32>
    %45 = vector.shape_cast %44 : vector<64xf32> to vector<1x64xf32>
    %cst_21 = arith.constant 1.280000e+02 : f32
    %46 = vector.broadcast %cst_21 : f32 to vector<1x64xf32>
    %47 = arith.divf %45, %46 : vector<1x64xf32>
    %48 = arith.mulf %43, %43 : vector<128x64xf32>
    %cst_22 = arith.constant dense<0.000000e+00> : vector<64xf32>
    %49 = vector.multi_reduction <add>, %48, %cst_22 [0] : vector<128x64xf32> to vector<64xf32>
    %50 = vector.shape_cast %49 : vector<64xf32> to vector<1x64xf32>
    %cst_23 = arith.constant 1.280000e+02 : f32
    %51 = vector.broadcast %cst_23 : f32 to vector<1x64xf32>
    %52 = arith.divf %50, %51 : vector<1x64xf32>
    %53 = arith.mulf %47, %47 : vector<1x64xf32>
    %54 = arith.subf %52, %53 : vector<1x64xf32>
    %55 = vector.broadcast %47 : vector<1x64xf32> to vector<128x64xf32>
    %56 = arith.subf %43, %55 : vector<128x64xf32>
    %cst_24 = arith.constant 9.99999974E-6 : f32
    %57 = vector.broadcast %cst_24 : f32 to vector<1x64xf32>
    %58 = arith.addf %54, %57 : vector<1x64xf32>
    %59 = math.rsqrt %58 : vector<1x64xf32>
    %60 = vector.broadcast %59 : vector<1x64xf32> to vector<128x64xf32>
    %61 = arith.mulf %56, %60 : vector<128x64xf32>
    %c1_25 = arith.constant 1 : index
    %c0_26 = arith.constant 0 : index
    %62 = vector.load %arg6[%c1_25, %c0_26] : memref<3x64xf32, #tpu.memory_space<vmem>>, vector<1x64xf32>
    %63 = vector.broadcast %62 : vector<1x64xf32> to vector<128x64xf32>
    %64 = arith.mulf %61, %63 : vector<128x64xf32>
    %c2_27 = arith.constant 2 : index
    %c0_28 = arith.constant 0 : index
    %65 = vector.load %arg6[%c2_27, %c0_28] : memref<3x64xf32, #tpu.memory_space<vmem>>, vector<1x64xf32>
    %66 = vector.broadcast %65 : vector<1x64xf32> to vector<128x64xf32>
    %67 = arith.addf %64, %66 : vector<128x64xf32>
    %cst_29 = arith.constant 0.000000e+00 : f32
    %68 = vector.broadcast %cst_29 : f32 to vector<128x64xf32>
    %69 = arith.cmpf oge, %67, %68 : vector<128x64xf32>
    %70 = vector.broadcast %37 : f32 to vector<128x64xf32>
    %71 = arith.mulf %70, %67 : vector<128x64xf32>
    %72 = arith.select %69, %67, %71 : vector<128x64xi1>, vector<128x64xf32>
    %c2_30 = arith.constant 2 : index
    %73 = memref.load %arg2[%c2_30] : memref<6xf32, #tpu.memory_space<smem>>
    %74 = arith.truncf %72 : vector<128x64xf32> to vector<128x64xbf16>
    %c0_31 = arith.constant 0 : index
    %c0_32 = arith.constant 0 : index
    %75 = vector.load %arg7[%c0_31, %c0_32] : memref<64x128xbf16, #tpu.memory_space<vmem>>, vector<64x128xbf16>
    %cst_33 = arith.constant dense<0.000000e+00> : vector<128x128xf32>
    %76 = tpu.matmul %74, %75, %cst_33 {dimension_numbers = #tpu.dot_dimension_numbers<[1], [0], [0], [1], [0, 0, 1, 1], [], []>} : vector<128x64xbf16>, vector<64x128xbf16>, vector<128x128xf32> -> vector<128x128xf32>
    %c0_34 = arith.constant 0 : index
    %c0_35 = arith.constant 0 : index
    %77 = vector.load %arg8[%c0_34, %c0_35] : memref<3x128xf32, #tpu.memory_space<vmem>>, vector<1x128xf32>
    %78 = vector.broadcast %77 : vector<1x128xf32> to vector<128x128xf32>
    %79 = arith.addf %76, %78 : vector<128x128xf32>
    %cst_36 = arith.constant dense<0.000000e+00> : vector<128xf32>
    %80 = vector.multi_reduction <add>, %79, %cst_36 [0] : vector<128x128xf32> to vector<128xf32>
    %81 = vector.shape_cast %80 : vector<128xf32> to vector<1x128xf32>
    %cst_37 = arith.constant 1.280000e+02 : f32
    %82 = vector.broadcast %cst_37 : f32 to vector<1x128xf32>
    %83 = arith.divf %81, %82 : vector<1x128xf32>
    %84 = arith.mulf %79, %79 : vector<128x128xf32>
    %cst_38 = arith.constant dense<0.000000e+00> : vector<128xf32>
    %85 = vector.multi_reduction <add>, %84, %cst_38 [0] : vector<128x128xf32> to vector<128xf32>
    %86 = vector.shape_cast %85 : vector<128xf32> to vector<1x128xf32>
    %cst_39 = arith.constant 1.280000e+02 : f32
    %87 = vector.broadcast %cst_39 : f32 to vector<1x128xf32>
    %88 = arith.divf %86, %87 : vector<1x128xf32>
    %89 = arith.mulf %83, %83 : vector<1x128xf32>
    %90 = arith.subf %88, %89 : vector<1x128xf32>
    %91 = vector.broadcast %83 : vector<1x128xf32> to vector<128x128xf32>
    %92 = arith.subf %79, %91 : vector<128x128xf32>
    %cst_40 = arith.constant 9.99999974E-6 : f32
    %93 = vector.broadcast %cst_40 : f32 to vector<1x128xf32>
    %94 = arith.addf %90, %93 : vector<1x128xf32>
    %95 = math.rsqrt %94 : vector<1x128xf32>
    %96 = vector.broadcast %95 : vector<1x128xf32> to vector<128x128xf32>
    %97 = arith.mulf %92, %96 : vector<128x128xf32>
    %c1_41 = arith.constant 1 : index
    %c0_42 = arith.constant 0 : index
    %98 = vector.load %arg8[%c1_41, %c0_42] : memref<3x128xf32, #tpu.memory_space<vmem>>, vector<1x128xf32>
    %99 = vector.broadcast %98 : vector<1x128xf32> to vector<128x128xf32>
    %100 = arith.mulf %97, %99 : vector<128x128xf32>
    %c2_43 = arith.constant 2 : index
    %c0_44 = arith.constant 0 : index
    %101 = vector.load %arg8[%c2_43, %c0_44] : memref<3x128xf32, #tpu.memory_space<vmem>>, vector<1x128xf32>
    %102 = vector.broadcast %101 : vector<1x128xf32> to vector<128x128xf32>
    %103 = arith.addf %100, %102 : vector<128x128xf32>
    %cst_45 = arith.constant 0.000000e+00 : f32
    %104 = vector.broadcast %cst_45 : f32 to vector<128x128xf32>
    %105 = arith.cmpf oge, %103, %104 : vector<128x128xf32>
    %106 = vector.broadcast %73 : f32 to vector<128x128xf32>
    %107 = arith.mulf %106, %103 : vector<128x128xf32>
    %108 = arith.select %105, %103, %107 : vector<128x128xi1>, vector<128x128xf32>
    %109 = arith.truncf %108 : vector<128x128xf32> to vector<128x128xbf16>
    %c0_46 = arith.constant 0 : index
    %c0_47 = arith.constant 0 : index
    %110 = vector.load %arg9[%c0_46, %c0_47] : memref<128x32xbf16, #tpu.memory_space<vmem>>, vector<128x32xbf16>
    %cst_48 = arith.constant dense<0.000000e+00> : vector<128x32xf32>
    %111 = tpu.matmul %109, %110, %cst_48 {dimension_numbers = #tpu.dot_dimension_numbers<[1], [0], [0], [1], [0, 0, 1, 1], [], []>} : vector<128x128xbf16>, vector<128x32xbf16>, vector<128x32xf32> -> vector<128x32xf32>
    %c0_49 = arith.constant 0 : index
    %c0_50 = arith.constant 0 : index
    %112 = vector.load %arg10[%c0_49, %c0_50] : memref<1x32xf32, #tpu.memory_space<vmem>>, vector<1x32xf32>
    %113 = vector.broadcast %112 : vector<1x32xf32> to vector<128x32xf32>
    %114 = arith.addf %111, %113 : vector<128x32xf32>
    %115 = vector.extract_strided_slice %114 {offsets = [0, 0], sizes = [128, 16], strides = [1, 1]} : vector<128x32xf32> to vector<128x16xf32>
    %116 = vector.extract_strided_slice %114 {offsets = [0, 16], sizes = [128, 16], strides = [1, 1]} : vector<128x32xf32> to vector<128x16xf32>
    %c0_51 = arith.constant 0 : index
    %c0_52 = arith.constant 0 : index
    %117 = vector.load %arg1[%c0_51, %c0_52] : memref<128x16xf32, #tpu.memory_space<vmem>>, vector<128x16xf32>
    %cst_53 = arith.constant 5.000000e-01 : f32
    %118 = vector.broadcast %cst_53 : f32 to vector<128x16xf32>
    %119 = arith.mulf %118, %116 : vector<128x16xf32>
    %120 = math.exp %119 : vector<128x16xf32>
    %121 = arith.mulf %117, %120 : vector<128x16xf32>
    %122 = arith.addf %115, %121 : vector<128x16xf32>
    %c3 = arith.constant 3 : index
    %123 = memref.load %arg2[%c3] : memref<6xf32, #tpu.memory_space<smem>>
    %124 = arith.truncf %122 : vector<128x16xf32> to vector<128x16xbf16>
    %c0_54 = arith.constant 0 : index
    %c0_55 = arith.constant 0 : index
    %125 = vector.load %arg11[%c0_54, %c0_55] : memref<16x128xbf16, #tpu.memory_space<vmem>>, vector<16x128xbf16>
    %cst_56 = arith.constant dense<0.000000e+00> : vector<128x128xf32>
    %126 = tpu.matmul %124, %125, %cst_56 {dimension_numbers = #tpu.dot_dimension_numbers<[1], [0], [0], [1], [0, 0, 1, 1], [], []>} : vector<128x16xbf16>, vector<16x128xbf16>, vector<128x128xf32> -> vector<128x128xf32>
    %c0_57 = arith.constant 0 : index
    %c0_58 = arith.constant 0 : index
    %127 = vector.load %arg12[%c0_57, %c0_58] : memref<3x128xf32, #tpu.memory_space<vmem>>, vector<1x128xf32>
    %128 = vector.broadcast %127 : vector<1x128xf32> to vector<128x128xf32>
    %129 = arith.addf %126, %128 : vector<128x128xf32>
    %cst_59 = arith.constant dense<0.000000e+00> : vector<128xf32>
    %130 = vector.multi_reduction <add>, %129, %cst_59 [0] : vector<128x128xf32> to vector<128xf32>
    %131 = vector.shape_cast %130 : vector<128xf32> to vector<1x128xf32>
    %cst_60 = arith.constant 1.280000e+02 : f32
    %132 = vector.broadcast %cst_60 : f32 to vector<1x128xf32>
    %133 = arith.divf %131, %132 : vector<1x128xf32>
    %134 = arith.mulf %129, %129 : vector<128x128xf32>
    %cst_61 = arith.constant dense<0.000000e+00> : vector<128xf32>
    %135 = vector.multi_reduction <add>, %134, %cst_61 [0] : vector<128x128xf32> to vector<128xf32>
    %136 = vector.shape_cast %135 : vector<128xf32> to vector<1x128xf32>
    %cst_62 = arith.constant 1.280000e+02 : f32
    %137 = vector.broadcast %cst_62 : f32 to vector<1x128xf32>
    %138 = arith.divf %136, %137 : vector<1x128xf32>
    %139 = arith.mulf %133, %133 : vector<1x128xf32>
    %140 = arith.subf %138, %139 : vector<1x128xf32>
    %141 = vector.broadcast %133 : vector<1x128xf32> to vector<128x128xf32>
    %142 = arith.subf %129, %141 : vector<128x128xf32>
    %cst_63 = arith.constant 9.99999974E-6 : f32
    %143 = vector.broadcast %cst_63 : f32 to vector<1x128xf32>
    %144 = arith.addf %140, %143 : vector<1x128xf32>
    %145 = math.rsqrt %144 : vector<1x128xf32>
    %146 = vector.broadcast %145 : vector<1x128xf32> to vector<128x128xf32>
    %147 = arith.mulf %142, %146 : vector<128x128xf32>
    %c1_64 = arith.constant 1 : index
    %c0_65 = arith.constant 0 : index
    %148 = vector.load %arg12[%c1_64, %c0_65] : memref<3x128xf32, #tpu.memory_space<vmem>>, vector<1x128xf32>
    %149 = vector.broadcast %148 : vector<1x128xf32> to vector<128x128xf32>
    %150 = arith.mulf %147, %149 : vector<128x128xf32>
    %c2_66 = arith.constant 2 : index
    %c0_67 = arith.constant 0 : index
    %151 = vector.load %arg12[%c2_66, %c0_67] : memref<3x128xf32, #tpu.memory_space<vmem>>, vector<1x128xf32>
    %152 = vector.broadcast %151 : vector<1x128xf32> to vector<128x128xf32>
    %153 = arith.addf %150, %152 : vector<128x128xf32>
    %cst_68 = arith.constant 0.000000e+00 : f32
    %154 = vector.broadcast %cst_68 : f32 to vector<128x128xf32>
    %155 = arith.cmpf oge, %153, %154 : vector<128x128xf32>
    %156 = vector.broadcast %123 : f32 to vector<128x128xf32>
    %157 = arith.mulf %156, %153 : vector<128x128xf32>
    %158 = arith.select %155, %153, %157 : vector<128x128xi1>, vector<128x128xf32>
    %c4 = arith.constant 4 : index
    %159 = memref.load %arg2[%c4] : memref<6xf32, #tpu.memory_space<smem>>
    %160 = arith.truncf %158 : vector<128x128xf32> to vector<128x128xbf16>
    %c0_69 = arith.constant 0 : index
    %c0_70 = arith.constant 0 : index
    %161 = vector.load %arg13[%c0_69, %c0_70] : memref<128x64xbf16, #tpu.memory_space<vmem>>, vector<128x64xbf16>
    %cst_71 = arith.constant dense<0.000000e+00> : vector<128x64xf32>
    %162 = tpu.matmul %160, %161, %cst_71 {dimension_numbers = #tpu.dot_dimension_numbers<[1], [0], [0], [1], [0, 0, 1, 1], [], []>} : vector<128x128xbf16>, vector<128x64xbf16>, vector<128x64xf32> -> vector<128x64xf32>
    %c0_72 = arith.constant 0 : index
    %c0_73 = arith.constant 0 : index
    %163 = vector.load %arg14[%c0_72, %c0_73] : memref<3x64xf32, #tpu.memory_space<vmem>>, vector<1x64xf32>
    %164 = vector.broadcast %163 : vector<1x64xf32> to vector<128x64xf32>
    %165 = arith.addf %162, %164 : vector<128x64xf32>
    %cst_74 = arith.constant dense<0.000000e+00> : vector<64xf32>
    %166 = vector.multi_reduction <add>, %165, %cst_74 [0] : vector<128x64xf32> to vector<64xf32>
    %167 = vector.shape_cast %166 : vector<64xf32> to vector<1x64xf32>
    %cst_75 = arith.constant 1.280000e+02 : f32
    %168 = vector.broadcast %cst_75 : f32 to vector<1x64xf32>
    %169 = arith.divf %167, %168 : vector<1x64xf32>
    %170 = arith.mulf %165, %165 : vector<128x64xf32>
    %cst_76 = arith.constant dense<0.000000e+00> : vector<64xf32>
    %171 = vector.multi_reduction <add>, %170, %cst_76 [0] : vector<128x64xf32> to vector<64xf32>
    %172 = vector.shape_cast %171 : vector<64xf32> to vector<1x64xf32>
    %cst_77 = arith.constant 1.280000e+02 : f32
    %173 = vector.broadcast %cst_77 : f32 to vector<1x64xf32>
    %174 = arith.divf %172, %173 : vector<1x64xf32>
    %175 = arith.mulf %169, %169 : vector<1x64xf32>
    %176 = arith.subf %174, %175 : vector<1x64xf32>
    %177 = vector.broadcast %169 : vector<1x64xf32> to vector<128x64xf32>
    %178 = arith.subf %165, %177 : vector<128x64xf32>
    %cst_78 = arith.constant 9.99999974E-6 : f32
    %179 = vector.broadcast %cst_78 : f32 to vector<1x64xf32>
    %180 = arith.addf %176, %179 : vector<1x64xf32>
    %181 = math.rsqrt %180 : vector<1x64xf32>
    %182 = vector.broadcast %181 : vector<1x64xf32> to vector<128x64xf32>
    %183 = arith.mulf %178, %182 : vector<128x64xf32>
    %c1_79 = arith.constant 1 : index
    %c0_80 = arith.constant 0 : index
    %184 = vector.load %arg14[%c1_79, %c0_80] : memref<3x64xf32, #tpu.memory_space<vmem>>, vector<1x64xf32>
    %185 = vector.broadcast %184 : vector<1x64xf32> to vector<128x64xf32>
    %186 = arith.mulf %183, %185 : vector<128x64xf32>
    %c2_81 = arith.constant 2 : index
    %c0_82 = arith.constant 0 : index
    %187 = vector.load %arg14[%c2_81, %c0_82] : memref<3x64xf32, #tpu.memory_space<vmem>>, vector<1x64xf32>
    %188 = vector.broadcast %187 : vector<1x64xf32> to vector<128x64xf32>
    %189 = arith.addf %186, %188 : vector<128x64xf32>
    %cst_83 = arith.constant 0.000000e+00 : f32
    %190 = vector.broadcast %cst_83 : f32 to vector<128x64xf32>
    %191 = arith.cmpf oge, %189, %190 : vector<128x64xf32>
    %192 = vector.broadcast %159 : f32 to vector<128x64xf32>
    %193 = arith.mulf %192, %189 : vector<128x64xf32>
    %194 = arith.select %191, %189, %193 : vector<128x64xi1>, vector<128x64xf32>
    %c5 = arith.constant 5 : index
    %195 = memref.load %arg2[%c5] : memref<6xf32, #tpu.memory_space<smem>>
    %196 = arith.truncf %194 : vector<128x64xf32> to vector<128x64xbf16>
    %c0_84 = arith.constant 0 : index
    %c0_85 = arith.constant 0 : index
    %197 = vector.load %arg15[%c0_84, %c0_85] : memref<64x32xbf16, #tpu.memory_space<vmem>>, vector<64x32xbf16>
    %cst_86 = arith.constant dense<0.000000e+00> : vector<128x32xf32>
    %198 = tpu.matmul %196, %197, %cst_86 {dimension_numbers = #tpu.dot_dimension_numbers<[1], [0], [0], [1], [0, 0, 1, 1], [], []>} : vector<128x64xbf16>, vector<64x32xbf16>, vector<128x32xf32> -> vector<128x32xf32>
    %c0_87 = arith.constant 0 : index
    %c0_88 = arith.constant 0 : index
    %199 = vector.load %arg16[%c0_87, %c0_88] : memref<3x32xf32, #tpu.memory_space<vmem>>, vector<1x32xf32>
    %200 = vector.broadcast %199 : vector<1x32xf32> to vector<128x32xf32>
    %201 = arith.addf %198, %200 : vector<128x32xf32>
    %cst_89 = arith.constant dense<0.000000e+00> : vector<32xf32>
    %202 = vector.multi_reduction <add>, %201, %cst_89 [0] : vector<128x32xf32> to vector<32xf32>
    %203 = vector.shape_cast %202 : vector<32xf32> to vector<1x32xf32>
    %cst_90 = arith.constant 1.280000e+02 : f32
    %204 = vector.broadcast %cst_90 : f32 to vector<1x32xf32>
    %205 = arith.divf %203, %204 : vector<1x32xf32>
    %206 = arith.mulf %201, %201 : vector<128x32xf32>
    %cst_91 = arith.constant dense<0.000000e+00> : vector<32xf32>
    %207 = vector.multi_reduction <add>, %206, %cst_91 [0] : vector<128x32xf32> to vector<32xf32>
    %208 = vector.shape_cast %207 : vector<32xf32> to vector<1x32xf32>
    %cst_92 = arith.constant 1.280000e+02 : f32
    %209 = vector.broadcast %cst_92 : f32 to vector<1x32xf32>
    %210 = arith.divf %208, %209 : vector<1x32xf32>
    %211 = arith.mulf %205, %205 : vector<1x32xf32>
    %212 = arith.subf %210, %211 : vector<1x32xf32>
    %213 = vector.broadcast %205 : vector<1x32xf32> to vector<128x32xf32>
    %214 = arith.subf %201, %213 : vector<128x32xf32>
    %cst_93 = arith.constant 9.99999974E-6 : f32
    %215 = vector.broadcast %cst_93 : f32 to vector<1x32xf32>
    %216 = arith.addf %212, %215 : vector<1x32xf32>
    %217 = math.rsqrt %216 : vector<1x32xf32>
    %218 = vector.broadcast %217 : vector<1x32xf32> to vector<128x32xf32>
    %219 = arith.mulf %214, %218 : vector<128x32xf32>
    %c1_94 = arith.constant 1 : index
    %c0_95 = arith.constant 0 : index
    %220 = vector.load %arg16[%c1_94, %c0_95] : memref<3x32xf32, #tpu.memory_space<vmem>>, vector<1x32xf32>
    %221 = vector.broadcast %220 : vector<1x32xf32> to vector<128x32xf32>
    %222 = arith.mulf %219, %221 : vector<128x32xf32>
    %c2_96 = arith.constant 2 : index
    %c0_97 = arith.constant 0 : index
    %223 = vector.load %arg16[%c2_96, %c0_97] : memref<3x32xf32, #tpu.memory_space<vmem>>, vector<1x32xf32>
    %224 = vector.broadcast %223 : vector<1x32xf32> to vector<128x32xf32>
    %225 = arith.addf %222, %224 : vector<128x32xf32>
    %cst_98 = arith.constant 0.000000e+00 : f32
    %226 = vector.broadcast %cst_98 : f32 to vector<128x32xf32>
    %227 = arith.cmpf oge, %225, %226 : vector<128x32xf32>
    %228 = vector.broadcast %195 : f32 to vector<128x32xf32>
    %229 = arith.mulf %228, %225 : vector<128x32xf32>
    %230 = arith.select %227, %225, %229 : vector<128x32xi1>, vector<128x32xf32>
    %231 = arith.truncf %230 : vector<128x32xf32> to vector<128x32xbf16>
    %c0_99 = arith.constant 0 : index
    %c0_100 = arith.constant 0 : index
    %232 = vector.load %arg17[%c0_99, %c0_100] : memref<32x64xbf16, #tpu.memory_space<vmem>>, vector<32x64xbf16>
    %cst_101 = arith.constant dense<0.000000e+00> : vector<128x64xf32>
    %233 = tpu.matmul %231, %232, %cst_101 {dimension_numbers = #tpu.dot_dimension_numbers<[1], [0], [0], [1], [0, 0, 1, 1], [], []>} : vector<128x32xbf16>, vector<32x64xbf16>, vector<128x64xf32> -> vector<128x64xf32>
    %c0_102 = arith.constant 0 : index
    %c0_103 = arith.constant 0 : index
    %234 = vector.load %arg18[%c0_102, %c0_103] : memref<1x64xf32, #tpu.memory_space<vmem>>, vector<1x64xf32>
    %235 = vector.broadcast %234 : vector<1x64xf32> to vector<128x64xf32>
    %236 = arith.addf %233, %235 : vector<128x64xf32>
    %237 = arith.negf %236 : vector<128x64xf32>
    %238 = math.exp %237 : vector<128x64xf32>
    %cst_104 = arith.constant 1.000000e+00 : f32
    %239 = vector.broadcast %cst_104 : f32 to vector<128x64xf32>
    %240 = arith.addf %239, %238 : vector<128x64xf32>
    %241 = arith.divf %239, %240 : vector<128x64xf32>
    %c0_105 = arith.constant 0 : index
    %c0_106 = arith.constant 0 : index
    %242 = vector.load %arg19[%c0_105, %c0_106] : memref<128x64xf32, #tpu.memory_space<vmem>>, vector<128x64xf32>
    tpu.vector_store %arg19[%c0_105, %c0_106], %241 {strides = array<i32>} : memref<128x64xf32, #tpu.memory_space<vmem>>, vector<128x64xf32>,
    %c0_107 = arith.constant 0 : index
    %c0_108 = arith.constant 0 : index
    %243 = vector.load %arg20[%c0_107, %c0_108] : memref<128x32xf32, #tpu.memory_space<vmem>>, vector<128x32xf32>
    tpu.vector_store %arg20[%c0_107, %c0_108], %114 {strides = array<i32>} : memref<128x32xf32, #tpu.memory_space<vmem>>, vector<128x32xf32>,
    return
  }
}

</mosaic_0001>

<llo_original>
// kernel: vae_forward.1
$region0: #{vae_forward.1}
  #allocation0 [shape = 'u32[]', space=smem, size = 0x4, offset = 0x4, fixed_abs, tag = 'smem constant byte address 0x4 - core index']
  #allocation1 [shape = 'u32[144,128]{1,0:T(1,128)}', space=vmem, size = 0x12000, scoped, tag = 'internal scratch']
  %s0 = inlined_call_operand.vmem [shape: f32[128,64], index: 0, kind: input, shape index: {}]
  %s1 = inlined_call_operand.vmem [shape: f32[128,16], index: 1, kind: input, shape index: {}]
  %s2 = inlined_call_operand.vmem [shape: f32[6], index: 2, kind: input, shape index: {}]
  %s3 = inlined_call_operand.vmem [shape: bf16[64,32], index: 3, kind: input, shape index: {}]
  %s4 = inlined_call_operand.vmem [shape: f32[3,32], index: 4, kind: input, shape index: {}]
  %s5 = inlined_call_operand.vmem [shape: bf16[32,64], index: 5, kind: input, shape index: {}]
  %s6 = inlined_call_operand.vmem [shape: f32[3,64], index: 6, kind: input, shape index: {}]
  %s7 = inlined_call_operand.vmem [shape: bf16[64,128], index: 7, kind: input, shape index: {}]
  %s8 = inlined_call_operand.vmem [shape: f32[3,128], index: 8, kind: input, shape index: {}]
  %s9 = inlined_call_operand.vmem [shape: bf16[128,32], index: 9, kind: input, shape index: {}]
  %s10 = inlined_call_operand.vmem [shape: f32[1,32], index: 10, kind: input, shape index: {}]
  %s11 = inlined_call_operand.vmem [shape: bf16[16,128], index: 11, kind: input, shape index: {}]
  %s12 = inlined_call_operand.vmem [shape: f32[3,128], index: 12, kind: input, shape index: {}]
  %s13 = inlined_call_operand.vmem [shape: bf16[128,64], index: 13, kind: input, shape index: {}]
  %s14 = inlined_call_operand.vmem [shape: f32[3,64], index: 14, kind: input, shape index: {}]
  %s15 = inlined_call_operand.vmem [shape: bf16[64,32], index: 15, kind: input, shape index: {}]
  %s16 = inlined_call_operand.vmem [shape: f32[3,32], index: 16, kind: input, shape index: {}]
  %s17 = inlined_call_operand.vmem [shape: bf16[32,64], index: 17, kind: input, shape index: {}]
  %s18 = inlined_call_operand.vmem [shape: f32[1,64], index: 18, kind: input, shape index: {}]
  %s19 = inlined_call_operand.vmem [shape: f32[128,64], index: 19, kind: output, shape index: {0}]
  %s20 = inlined_call_operand.vmem [shape: f32[128,32], index: 20, kind: output, shape index: {1}]
  %21 = xla_tuple %s19, %s20
  %s22 = sld [smem:[#allocation0]]
  $region98: #{vae_forward.1} parent=0
    _
  %s24 = ssub.s32 1, %s22
  %s25 = scalar_select 0, %s24, %s22
  $region1: #{vae_forward.1} parent=0
    #allocation2 [shape = 'u8[512]{0}', space=smem, size = 0x200, scoped, tag = 'input window, operand 2, single buffered']
    #allocation3 [shape = 's32[1]{0}', space=sflag, size = 0x4, scoped, tag = 'scoped memory for vae_forward.1']
    %26 = vsyncpa [#allocation3], 0
    // Predicated region
    $region2: #{vae_forward.1} parent=1 // pred_check
      _
    $region3: #{vae_forward.1} parent=1 // pred_check_branch
      %28 = sbr.rel (0) target = $region5
    $region4: #{vae_forward.1} parent=1 // pred_region
      _
    $region5: #{vae_forward.1} parent=1 // pred_fallthru
      _
    // Predicated region
    $region6: #{vae_forward.1} parent=1 // pred_check
      _
    $region7: #{vae_forward.1} parent=1 // pred_check_branch
      %30 = sbr.rel (0) target = $region9
    $region8: #{vae_forward.1} parent=1 // pred_region
      _
    $region9: #{vae_forward.1} parent=1 // pred_fallthru
      _
    // Predicated region
    $region10: #{vae_forward.1} parent=1 // pred_check
      _
    $region11: #{vae_forward.1} parent=1 // pred_check_branch
      %32 = sbr.rel (0) target = $region13
    $region12: #{vae_forward.1} parent=1 // pred_region
      %s34 = ssub.s32 16, 16
      %35 = vsyncadd [#allocation3], %s34
      %s37 = sshll.u32 %s2, 4
      %s38 = int_to_ptr.vmem [resolvable:$true] %s37
      %40 = dma.vmem_to_smem %s38, 16, [#allocation2], [#allocation3]
    $region13: #{vae_forward.1} parent=1 // pred_fallthru
      _
    // Predicated region
    $region14: #{vae_forward.1} parent=1 // pred_check
      _
    $region15: #{vae_forward.1} parent=1 // pred_check_branch
      %42 = sbr.rel (0) target = $region17
    $region16: #{vae_forward.1} parent=1 // pred_region
      _
    $region17: #{vae_forward.1} parent=1 // pred_fallthru
      _
    // Predicated region
    $region18: #{vae_forward.1} parent=1 // pred_check
      _
    $region19: #{vae_forward.1} parent=1 // pred_check_branch
      %44 = sbr.rel (0) target = $region21
    $region20: #{vae_forward.1} parent=1 // pred_region
      _
    $region21: #{vae_forward.1} parent=1 // pred_fallthru
      _
    // Predicated region
    $region22: #{vae_forward.1} parent=1 // pred_check
      _
    $region23: #{vae_forward.1} parent=1 // pred_check_branch
      %46 = sbr.rel (0) target = $region25
    $region24: #{vae_forward.1} parent=1 // pred_region
      _
    $region25: #{vae_forward.1} parent=1 // pred_fallthru
      _
    // Predicated region
    $region26: #{vae_forward.1} parent=1 // pred_check
      _
    $region27: #{vae_forward.1} parent=1 // pred_check_branch
      %48 = sbr.rel (0) target = $region29
    $region28: #{vae_forward.1} parent=1 // pred_region
      _
    $region29: #{vae_forward.1} parent=1 // pred_fallthru
      _
    // Predicated region
    $region30: #{vae_forward.1} parent=1 // pred_check
      _
    $region31: #{vae_forward.1} parent=1 // pred_check_branch
      %50 = sbr.rel (0) target = $region33
    $region32: #{vae_forward.1} parent=1 // pred_region
      _
    $region33: #{vae_forward.1} parent=1 // pred_fallthru
      _
    // Predicated region
    $region34: #{vae_forward.1} parent=1 // pred_check
      _
    $region35: #{vae_forward.1} parent=1 // pred_check_branch
      %52 = sbr.rel (0) target = $region37
    $region36: #{vae_forward.1} parent=1 // pred_region
      _
    $region37: #{vae_forward.1} parent=1 // pred_fallthru
      _
    // Predicated region
    $region38: #{vae_forward.1} parent=1 // pred_check
      _
    $region39: #{vae_forward.1} parent=1 // pred_check_branch
      %54 = sbr.rel (0) target = $region41
    $region40: #{vae_forward.1} parent=1 // pred_region
      _
    $region41: #{vae_forward.1} parent=1 // pred_fallthru
      _
    // Predicated region
    $region42: #{vae_forward.1} parent=1 // pred_check
      _
    $region43: #{vae_forward.1} parent=1 // pred_check_branch
      %56 = sbr.rel (0) target = $region45
    $region44: #{vae_forward.1} parent=1 // pred_region
      _
    $region45: #{vae_forward.1} parent=1 // pred_fallthru
      _
    // Predicated region
    $region46: #{vae_forward.1} parent=1 // pred_check
      _
    $region47: #{vae_forward.1} parent=1 // pred_check_branch
      %58 = sbr.rel (0) target = $region49
    $region48: #{vae_forward.1} parent=1 // pred_region
      _
    $region49: #{vae_forward.1} parent=1 // pred_fallthru
      _
    // Predicated region
    $region50: #{vae_forward.1} parent=1 // pred_check
      _
    $region51: #{vae_forward.1} parent=1 // pred_check_branch
      %60 = sbr.rel (0) target = $region53
    $region52: #{vae_forward.1} parent=1 // pred_region
      _
    $region53: #{vae_forward.1} parent=1 // pred_fallthru
      _
    // Predicated region
    $region54: #{vae_forward.1} parent=1 // pred_check
      _
    $region55: #{vae_forward.1} parent=1 // pred_check_branch
      %62 = sbr.rel (0) target = $region57
    $region56: #{vae_forward.1} parent=1 // pred_region
      _
    $region57: #{vae_forward.1} parent=1 // pred_fallthru
      _
    // Predicated region
    $region58: #{vae_forward.1} parent=1 // pred_check
      _
    $region59: #{vae_forward.1} parent=1 // pred_check_branch
      %64 = sbr.rel (0) target = $region61
    $region60: #{vae_forward.1} parent=1 // pred_region
      _
    $region61: #{vae_forward.1} parent=1 // pred_fallthru
      _
    // Predicated region
    $region62: #{vae_forward.1} parent=1 // pred_check
      _
    $region63: #{vae_forward.1} parent=1 // pred_check_branch
      %66 = sbr.rel (0) target = $region65
    $region64: #{vae_forward.1} parent=1 // pred_region
      _
    $region65: #{vae_forward.1} parent=1 // pred_fallthru
      _
    // Predicated region
    $region66: #{vae_forward.1} parent=1 // pred_check
      _
    $region67: #{vae_forward.1} parent=1 // pred_check_branch
      %68 = sbr.rel (0) target = $region69
    $region68: #{vae_forward.1} parent=1 // pred_region
      _
    $region69: #{vae_forward.1} parent=1 // pred_fallthru
      _
    // Predicated region
    $region70: #{vae_forward.1} parent=1 // pred_check
      _
    $region71: #{vae_forward.1} parent=1 // pred_check_branch
      %70 = sbr.rel (0) target = $region73
    $region72: #{vae_forward.1} parent=1 // pred_region
      _
    $region73: #{vae_forward.1} parent=1 // pred_fallthru
      _
    // Predicated region
    $region74: #{vae_forward.1} parent=1 // pred_check
      _
    $region75: #{vae_forward.1} parent=1 // pred_check_branch
      %72 = sbr.rel (0) target = $region77
    $region76: #{vae_forward.1} parent=1 // pred_region
      _
    $region77: #{vae_forward.1} parent=1 // pred_fallthru
      _
    // Predicated region
    $region78: #{vae_forward.1} parent=1 // pred_check
      _
    $region79: #{vae_forward.1} parent=1 // pred_check_branch
      %74 = sbr.rel (0) target = $region81
    $region80: #{vae_forward.1} parent=1 // pred_region
      %75 = dma.done [#allocation3], 16
    $region81: #{vae_forward.1} parent=1 // pred_fallthru
      _
    %76 = sfence
    %v78 = vld [vmem:[%s0] sm:$0xff]
    %v79 = vld [vmem:[%s0 + $0x8] sm:$0xff]
    %v80 = vld [vmem:[%s0 + $0x10] sm:$0xff]
    %v81 = vld [vmem:[%s0 + $0x18] sm:$0xff]
    %v82 = vld [vmem:[%s0 + $0x20] sm:$0xff]
    %v83 = vld [vmem:[%s0 + $0x28] sm:$0xff]
    %v84 = vld [vmem:[%s0 + $0x30] sm:$0xff]
    %v85 = vld [vmem:[%s0 + $0x38] sm:$0xff]
    %v86 = vld [vmem:[%s0 + $0x40] sm:$0xff]
    %v87 = vld [vmem:[%s0 + $0x48] sm:$0xff]
    %v88 = vld [vmem:[%s0 + $0x50] sm:$0xff]
    %v89 = vld [vmem:[%s0 + $0x58] sm:$0xff]
    %v90 = vld [vmem:[%s0 + $0x60] sm:$0xff]
    %v91 = vld [vmem:[%s0 + $0x68] sm:$0xff]
    %v92 = vld [vmem:[%s0 + $0x70] sm:$0xff]
    %v93 = vld [vmem:[%s0 + $0x78] sm:$0xff]
    %s94 = sld [smem:[#allocation2]]
    %v95 = vpack.c.bf16 %v79, %v78
    %v96 = vpack.c.bf16 %v81, %v80
    %v97 = vpack.c.bf16 %v83, %v82
    %v98 = vpack.c.bf16 %v85, %v84
    %v99 = vpack.c.bf16 %v87, %v86
    %v100 = vpack.c.bf16 %v89, %v88
    %v101 = vpack.c.bf16 %v91, %v90
    %v102 = vpack.c.bf16 %v93, %v92
    %v103 = vld [vmem:[%s3] sm:$0xf]
    %v104 = vld [vmem:[%s3 + $0x4] sm:$0xf]
    %v105 = vld [vmem:[%s3 + $0x8] sm:$0xf]
    %v106 = vld [vmem:[%s3 + $0xc] sm:$0xf]
    %v107 = vld [vmem:[%s3 + $0x10] sm:$0xf]
    %v108 = vld [vmem:[%s3 + $0x14] sm:$0xf]
    %v109 = vld [vmem:[%s3 + $0x18] sm:$0xf]
    %v110 = vld [vmem:[%s3 + $0x1c] sm:$0xf]
    %v111 = vld [vmem:[%s4] sm:$0x1]
    %v112 = vlaneseq
    %v113 = vshrl.u32 %v112, 7
    %v114 = vsub.s32 0, %v113
    %v115 = vrot.slane %v111, %v114
    %v124 = vunpack.c.l.b16 %v103
    %v125 = vunpack.c.l.b16 %v104
    %v126 = vunpack.c.l.b16 %v105
    %v127 = vunpack.c.l.b16 %v106
    %v128 = vunpack.c.l.b16 %v107
    %v129 = vunpack.c.l.b16 %v108
    %v130 = vunpack.c.l.b16 %v109
    %v131 = vunpack.c.l.b16 %v110
    %v132 = vpack.c.b16 %v125, %v124
    %v133 = vpack.c.b16 %v127, %v126
    %v134 = vpack.c.b16 %v129, %v128
    %v135 = vpack.c.b16 %v131, %v130
    %vm140 = vcmask 523264
    %v142 = vsel %vm140, %v95, 0
    %v145 = vsel %vm140, %v96, 0
    %v148 = vsel %vm140, %v97, 0
    %v151 = vsel %vm140, %v98, 0
    %v154 = vsel %vm140, %v99, 0
    %v157 = vsel %vm140, %v100, 0
    %v160 = vsel %vm140, %v101, 0
    %v163 = vsel %vm140, %v102, 0
    %165 = vmatprep.subr.bf16.mxu0 0
    %166 = vmatpush1.bf16.msra.mxu0 %v132
    %167 = vmatprep.subr.bf16.mxu0 0
    %168 = vmatpush1.bf16.msra.mxu0 %v133
    %169 = vmatprep.subr.bf16.mxu0 0
    %170 = vmatpush1.bf16.msra.mxu0 %v134
    %171 = vmatprep.subr.bf16.mxu0 0
    %172 = vmatpush1.bf16.msra.mxu0 %v135
    %173 = vmatprep.subr.bf16.mxu0 0
    %174 = vmatpush1.bf16.msra.mxu0 0
    %175 = vmatprep.subr.bf16.mxu0 0
    %176 = vmatpush1.bf16.msra.mxu0 0
    %177 = vmatprep.subr.bf16.mxu0 0
    %178 = vmatpush1.bf16.msra.mxu0 0
    %179 = vmatprep.subr.bf16.mxu0 0
    %180 = vmatpush1.bf16.msra.mxu0 0
    %181 = vmatprep.subr.bf16.mxu0 0
    %182 = vmatpush1.bf16.msra.mxu0 0
    %183 = vmatprep.subr.bf16.mxu0 0
    %184 = vmatpush1.bf16.msra.mxu0 0
    %185 = vmatprep.subr.bf16.mxu0 0
    %186 = vmatpush1.bf16.msra.mxu0 0
    %187 = vmatprep.subr.bf16.mxu0 0
    %188 = vmatpush1.bf16.msra.mxu0 0
    %189 = vmatprep.subr.bf16.mxu0 0
    %190 = vmatpush1.bf16.msra.mxu0 0
    %191 = vmatprep.subr.bf16.mxu0 0
    %192 = vmatpush1.bf16.msra.mxu0 0
    %193 = vmatprep.subr.bf16.mxu0 0
    %194 = vmatpush1.bf16.msra.mxu0 0
    %195 = vmatprep.subr.bf16.mxu0 0
    %196 = vmatpush1.bf16.msra.mxu0 0
    %197 = vmatprep.mubr.bf16.mxu0 0
    %198 = vmatmul.mubr.bf16.gmra.mrb[0].mxu0 %v142
    %v199 = vpop.f32.mrb[0].mxu0
    %v200 = vadd.f32 %v115, %v199
    %v201 = vpop.f32.mrb[0].mxu0
    %v202 = vpop.f32.mrb[0].mxu0
    %v203 = vadd.f32 %v115, %v202
    %v204 = vpop.f32.mrb[0].mxu0
    %205 = vmatprep.mubr.bf16.mxu0 0
    %206 = vmatmul.mubr.bf16.gmra.mrb[0].mxu0 %v145
    %v207 = vpop.f32.mrb[0].mxu0
    %v208 = vadd.f32 %v115, %v207
    %v209 = vpop.f32.mrb[0].mxu0
    %v210 = vpop.f32.mrb[0].mxu0
    %v211 = vadd.f32 %v115, %v210
    %v212 = vpop.f32.mrb[0].mxu0
    %213 = vmatprep.mubr.bf16.mxu0 0
    %214 = vmatmul.mubr.bf16.gmra.mrb[0].mxu0 %v148
    %v215 = vpop.f32.mrb[0].mxu0
    %v216 = vadd.f32 %v115, %v215
    %v217 = vpop.f32.mrb[0].mxu0
    %v218 = vpop.f32.mrb[0].mxu0
    %v219 = vadd.f32 %v115, %v218
    %v220 = vpop.f32.mrb[0].mxu0
    %221 = vmatprep.mubr.bf16.mxu0 0
    %222 = vmatmul.mubr.bf16.gmra.mrb[0].mxu0 %v151
    %v223 = vpop.f32.mrb[0].mxu0
    %v224 = vadd.f32 %v115, %v223
    %v225 = vpop.f32.mrb[0].mxu0
    %v226 = vpop.f32.mrb[0].mxu0
    %v227 = vadd.f32 %v115, %v226
    %v228 = vpop.f32.mrb[0].mxu0
    %229 = vmatprep.mubr.bf16.mxu0 0
    %230 = vmatmul.mubr.bf16.gmra.mrb[0].mxu0 %v154
    %v231 = vpop.f32.mrb[0].mxu0
    %v232 = vadd.f32 %v115, %v231
    %v233 = vpop.f32.mrb[0].mxu0
    %v234 = vpop.f32.mrb[0].mxu0
    %v235 = vadd.f32 %v115, %v234
    %v236 = vpop.f32.mrb[0].mxu0
    %237 = vmatprep.mubr.bf16.mxu0 0
    %238 = vmatmul.mubr.bf16.gmra.mrb[0].mxu0 %v157
    %v239 = vpop.f32.mrb[0].mxu0
    %v240 = vadd.f32 %v115, %v239
    %v241 = vpop.f32.mrb[0].mxu0
    %v242 = vpop.f32.mrb[0].mxu0
    %v243 = vadd.f32 %v115, %v242
    %v244 = vpop.f32.mrb[0].mxu0
    %245 = vmatprep.mubr.bf16.mxu0 0
    %246 = vmatmul.mubr.bf16.gmra.mrb[0].mxu0 %v160
    %v247 = vpop.f32.mrb[0].mxu0
    %v248 = vadd.f32 %v115, %v247
    %v249 = vpop.f32.mrb[0].mxu0
    %v250 = vpop.f32.mrb[0].mxu0
    %v251 = vadd.f32 %v115, %v250
    %v252 = vpop.f32.mrb[0].mxu0
    %253 = vmatprep.mubr.bf16.mxu0 0
    %254 = vmatmul.mubr.bf16.gmra.mrb[0].mxu0 %v163
    %v255 = vpop.f32.mrb[0].mxu0
    %v256 = vadd.f32 %v115, %v255
    %v257 = vpop.f32.mrb[0].mxu0
    %v258 = vpop.f32.mrb[0].mxu0
    %v259 = vadd.f32 %v115, %v258
    %v260 = vpop.f32.mrb[0].mxu0
    %261 = vdwg.mxu0
    %vm262 = vcmask 261120
    %v263 = vsel %vm262, %v200, 0.0
    %v264 = vsel %vm262, %v203, 0.0
    %v265 = vadd.f32 %v263, %v264
    %v266 = vsel %vm262, %v208, 0.0
    %v267 = vadd.f32 %v265, %v266
    %v268 = vsel %vm262, %v211, 0.0
    %v269 = vadd.f32 %v267, %v268
    %v270 = vsel %vm262, %v216, 0.0
    %v271 = vadd.f32 %v269, %v270
    %v272 = vsel %vm262, %v219, 0.0
    %v273 = vadd.f32 %v271, %v272
    %v274 = vsel %vm262, %v224, 0.0
    %v275 = vadd.f32 %v273, %v274
    %v276 = vsel %vm262, %v227, 0.0
    %v277 = vadd.f32 %v275, %v276
    %v278 = vsel %vm262, %v232, 0.0
    %v279 = vadd.f32 %v277, %v278
    %v280 = vsel %vm262, %v235, 0.0
    %v281 = vadd.f32 %v279, %v280
    %v282 = vsel %vm262, %v240, 0.0
    %v283 = vadd.f32 %v281, %v282
    %v284 = vsel %vm262, %v243, 0.0
    %v285 = vadd.f32 %v283, %v284
    %v286 = vsel %vm262, %v248, 0.0
    %v287 = vadd.f32 %v285, %v286
    %v288 = vsel %vm262, %v251, 0.0
    %v289 = vadd.f32 %v287, %v288
    %v290 = vsel %vm262, %v256, 0.0
    %v291 = vadd.f32 %v289, %v290
    %v292 = vsel %vm262, %v259, 0.0
    %v293 = vadd.f32 %v291, %v292
    %v294 = vrot.slane %v293, 4
    %v295 = vadd.f32 %v293, %v294
    %v296 = vrot.slane %v295, 2
    %v297 = vadd.f32 %v295, %v296
    %v298 = vrot.slane %v297, 1
    %v299 = vadd.f32 %v297, %v298
    %v300 = vrcp.pop 128.0
    %v301 = vmul.f32 %v299, %v300
    %v302 = vmul.f32 %v200, %v200
    %v303 = vmul.f32 %v203, %v203
    %v304 = vmul.f32 %v208, %v208
    %v305 = vmul.f32 %v211, %v211
    %v306 = vmul.f32 %v216, %v216
    %v307 = vmul.f32 %v219, %v219
    %v308 = vmul.f32 %v224, %v224
    %v309 = vmul.f32 %v227, %v227
    %v310 = vmul.f32 %v232, %v232
    %v311 = vmul.f32 %v235, %v235
    %v312 = vmul.f32 %v240, %v240
    %v313 = vmul.f32 %v243, %v243
    %v314 = vmul.f32 %v248, %v248
    %v315 = vmul.f32 %v251, %v251
    %v316 = vmul.f32 %v256, %v256
    %v317 = vmul.f32 %v259, %v259
    %v318 = vsel %vm262, %v302, 0.0
    %v319 = vsel %vm262, %v303, 0.0
    %v320 = vadd.f32 %v318, %v319
    %v321 = vsel %vm262, %v304, 0.0
    %v322 = vadd.f32 %v320, %v321
    %v323 = vsel %vm262, %v305, 0.0
    %v324 = vadd.f32 %v322, %v323
    %v325 = vsel %vm262, %v306, 0.0
    %v326 = vadd.f32 %v324, %v325
    %v327 = vsel %vm262, %v307, 0.0
    %v328 = vadd.f32 %v326, %v327
    %v329 = vsel %vm262, %v308, 0.0
    %v330 = vadd.f32 %v328, %v329
    %v331 = vsel %vm262, %v309, 0.0
    %v332 = vadd.f32 %v330, %v331
    %v333 = vsel %vm262, %v310, 0.0
    %v334 = vadd.f32 %v332, %v333
    %v335 = vsel %vm262, %v311, 0.0
    %v336 = vadd.f32 %v334, %v335
    %v337 = vsel %vm262, %v312, 0.0
    %v338 = vadd.f32 %v336, %v337
    %v339 = vsel %vm262, %v313, 0.0
    %v340 = vadd.f32 %v338, %v339
    %v341 = vsel %vm262, %v314, 0.0
    %v342 = vadd.f32 %v340, %v341
    %v343 = vsel %vm262, %v315, 0.0
    %v344 = vadd.f32 %v342, %v343
    %v345 = vsel %vm262, %v316, 0.0
    %v346 = vadd.f32 %v344, %v345
    %v347 = vsel %vm262, %v317, 0.0
    %v348 = vadd.f32 %v346, %v347
    %v349 = vrot.slane %v348, 4
    %v350 = vadd.f32 %v348, %v349
    %v351 = vrot.slane %v350, 2
    %v352 = vadd.f32 %v350, %v351
    %v353 = vrot.slane %v352, 1
    %v354 = vadd.f32 %v352, %v353
    %v355 = vmul.f32 %v354, %v300
    %v356 = vmul.f32 %v301, %v301
    %v357 = vsub.f32 %v355, %v356
    %v358 = vsub.f32 %v200, %v301
    %v359 = vsub.f32 %v203, %v301
    %v360 = vsub.f32 %v208, %v301
    %v361 = vsub.f32 %v211, %v301
    %v362 = vsub.f32 %v216, %v301
    %v363 = vsub.f32 %v219, %v301
    %v364 = vsub.f32 %v224, %v301
    %v365 = vsub.f32 %v227, %v301
    %v366 = vsub.f32 %v232, %v301
    %v367 = vsub.f32 %v235, %v301
    %v368 = vsub.f32 %v240, %v301
    %v369 = vsub.f32 %v243, %v301
    %v370 = vsub.f32 %v248, %v301
    %v371 = vsub.f32 %v251, %v301
    %v372 = vsub.f32 %v256, %v301
    %v373 = vsub.f32 %v259, %v301
    %v374 = vadd.f32 %v357, 1e-05
    %v375 = vrsqrt.pop %v374
    %v376 = vmul.f32 %v358, %v375
    %v377 = vmul.f32 %v359, %v375
    %v378 = vmul.f32 %v360, %v375
    %v379 = vmul.f32 %v361, %v375
    %v380 = vmul.f32 %v362, %v375
    %v381 = vmul.f32 %v363, %v375
    %v382 = vmul.f32 %v364, %v375
    %v383 = vmul.f32 %v365, %v375
    %v384 = vmul.f32 %v366, %v375
    %v385 = vmul.f32 %v367, %v375
    %v386 = vmul.f32 %v368, %v375
    %v387 = vmul.f32 %v369, %v375
    %v388 = vmul.f32 %v370, %v375
    %v389 = vmul.f32 %v371, %v375
    %v390 = vmul.f32 %v372, %v375
    %v391 = vmul.f32 %v373, %v375
    %v392 = vld [vmem:[%s4 + $0x1] sm:$0x1]
    %v393 = vlaneseq
    %v394 = vshrl.u32 %v393, 7
    %v395 = vsub.s32 0, %v394
    %v396 = vrot.slane %v392, %v395
    %v397 = vmul.f32 %v376, %v396
    %v398 = vmul.f32 %v377, %v396
    %v399 = vmul.f32 %v378, %v396
    %v400 = vmul.f32 %v379, %v396
    %v401 = vmul.f32 %v380, %v396
    %v402 = vmul.f32 %v381, %v396
    %v403 = vmul.f32 %v382, %v396
    %v404 = vmul.f32 %v383, %v396
    %v405 = vmul.f32 %v384, %v396
    %v406 = vmul.f32 %v385, %v396
    %v407 = vmul.f32 %v386, %v396
    %v408 = vmul.f32 %v387, %v396
    %v409 = vmul.f32 %v388, %v396
    %v410 = vmul.f32 %v389, %v396
    %v411 = vmul.f32 %v390, %v396
    %v412 = vmul.f32 %v391, %v396
    %v413 = vld [vmem:[%s4 + $0x2] sm:$0x1]
    %v414 = vlaneseq
    %v415 = vshrl.u32 %v414, 7
    %v416 = vsub.s32 0, %v415
    %v417 = vrot.slane %v413, %v416
    %v418 = vadd.f32 %v397, %v417
    %v419 = vadd.f32 %v398, %v417
    %v420 = vadd.f32 %v399, %v417
    %v421 = vadd.f32 %v400, %v417
    %v422 = vadd.f32 %v401, %v417
    %v423 = vadd.f32 %v402, %v417
    %v424 = vadd.f32 %v403, %v417
    %v425 = vadd.f32 %v404, %v417
    %v426 = vadd.f32 %v405, %v417
    %v427 = vadd.f32 %v406, %v417
    %v428 = vadd.f32 %v407, %v417
    %v429 = vadd.f32 %v408, %v417
    %v430 = vadd.f32 %v409, %v417
    %v431 = vadd.f32 %v410, %v417
    %v432 = vadd.f32 %v411, %v417
    %v433 = vadd.f32 %v412, %v417
    %vm434 = vcmp.ge.f32.partialorder %v418, 0.0
    %vm435 = vcmp.ge.f32.partialorder %v419, 0.0
    %vm436 = vcmp.ge.f32.partialorder %v420, 0.0
    %vm437 = vcmp.ge.f32.partialorder %v421, 0.0
    %vm438 = vcmp.ge.f32.partialorder %v422, 0.0
    %vm439 = vcmp.ge.f32.partialorder %v423, 0.0
    %vm440 = vcmp.ge.f32.partialorder %v424, 0.0
    %vm441 = vcmp.ge.f32.partialorder %v425, 0.0
    %vm442 = vcmp.ge.f32.partialorder %v426, 0.0
    %vm443 = vcmp.ge.f32.partialorder %v427, 0.0
    %vm444 = vcmp.ge.f32.partialorder %v428, 0.0
    %vm445 = vcmp.ge.f32.partialorder %v429, 0.0
    %vm446 = vcmp.ge.f32.partialorder %v430, 0.0
    %vm447 = vcmp.ge.f32.partialorder %v431, 0.0
    %vm448 = vcmp.ge.f32.partialorder %v432, 0.0
    %vm449 = vcmp.ge.f32.partialorder %v433, 0.0
    %v450 = vstv %s94
    %v451 = vmul.f32 %v450, %v418
    %v452 = vmul.f32 %v450, %v419
    %v453 = vmul.f32 %v450, %v420
    %v454 = vmul.f32 %v450, %v421
    %v455 = vmul.f32 %v450, %v422
    %v456 = vmul.f32 %v450, %v423
    %v457 = vmul.f32 %v450, %v424
    %v458 = vmul.f32 %v450, %v425
    %v459 = vmul.f32 %v450, %v426
    %v460 = vmul.f32 %v450, %v427
    %v461 = vmul.f32 %v450, %v428
    %v462 = vmul.f32 %v450, %v429
    %v463 = vmul.f32 %v450, %v430
    %v464 = vmul.f32 %v450, %v431
    %v465 = vmul.f32 %v450, %v432
    %v466 = vmul.f32 %v450, %v433
    %v467 = vsel %vm434, %v418, %v451
    %v468 = vsel %vm435, %v419, %v452
    %v469 = vsel %vm436, %v420, %v453
    %v470 = vsel %vm437, %v421, %v454
    %v471 = vsel %vm438, %v422, %v455
    %v472 = vsel %vm439, %v423, %v456
    %v473 = vsel %vm440, %v424, %v457
    %v474 = vsel %vm441, %v425, %v458
    %v475 = vsel %vm442, %v426, %v459
    %v476 = vsel %vm443, %v427, %v460
    %v477 = vsel %vm444, %v428, %v461
    %v478 = vsel %vm445, %v429, %v462
    %v479 = vsel %vm446, %v430, %v463
    %v480 = vsel %vm447, %v431, %v464
    %v481 = vsel %vm448, %v432, %v465
    %v482 = vsel %vm449, %v433, %v466
    %s483 = sld [smem:[#allocation2 + $0x1]]
    %v484 = vpack.c.bf16 %v468, %v467
    %v485 = vpack.c.bf16 %v470, %v469
    %v486 = vpack.c.bf16 %v472, %v471
    %v487 = vpack.c.bf16 %v474, %v473
    %v488 = vpack.c.bf16 %v476, %v475
    %v489 = vpack.c.bf16 %v478, %v477
    %v490 = vpack.c.bf16 %v480, %v479
    %v491 = vpack.c.bf16 %v482, %v481
    %v492 = vld [vmem:[%s5] sm:$0xf]
    %v493 = vld [vmem:[%s5 + $0x4] sm:$0xf]
    %v494 = vld [vmem:[%s5 + $0x8] sm:$0xf]
    %v495 = vld [vmem:[%s5 + $0xc] sm:$0xf]
    %v496 = vld [vmem:[%s6] sm:$0x1]
    %v497 = vlaneseq
    %v498 = vshrl.u32 %v497, 7
    %v499 = vsub.s32 0, %v498
    %v500 = vrot.slane %v496, %v499
    %v505 = vunpack.c.l.b16 %v492
    %v506 = vunpack.c.l.b16 %v493
    %v507 = vunpack.c.l.b16 %v494
    %v508 = vunpack.c.l.b16 %v495
    %v509 = vpack.c.b16 %v506, %v505
    %v510 = vpack.c.b16 %v508, %v507
    %v514 = vsel %vm262, %v484, 0
    %v517 = vsel %vm262, %v485, 0
    %v520 = vsel %vm262, %v486, 0
    %v523 = vsel %vm262, %v487, 0
    %v526 = vsel %vm262, %v488, 0
    %v529 = vsel %vm262, %v489, 0
    %v532 = vsel %vm262, %v490, 0
    %v535 = vsel %vm262, %v491, 0
    %537 = vmatprep.subr.bf16.mxu0 0
    %538 = vmatpush1.bf16.msra.mxu0 %v509
    %539 = vmatprep.subr.bf16.mxu0 0
    %540 = vmatpush1.bf16.msra.mxu0 %v510
    %541 = vmatprep.subr.bf16.mxu0 0
    %542 = vmatpush1.bf16.msra.mxu0 0
    %543 = vmatprep.subr.bf16.mxu0 0
    %544 = vmatpush1.bf16.msra.mxu0 0
    %545 = vmatprep.subr.bf16.mxu0 0
    %546 = vmatpush1.bf16.msra.mxu0 0
    %547 = vmatprep.subr.bf16.mxu0 0
    %548 = vmatpush1.bf16.msra.mxu0 0
    %549 = vmatprep.subr.bf16.mxu0 0
    %550 = vmatpush1.bf16.msra.mxu0 0
    %551 = vmatprep.subr.bf16.mxu0 0
    %552 = vmatpush1.bf16.msra.mxu0 0
    %553 = vmatprep.subr.bf16.mxu0 0
    %554 = vmatpush1.bf16.msra.mxu0 0
    %555 = vmatprep.subr.bf16.mxu0 0
    %556 = vmatpush1.bf16.msra.mxu0 0
    %557 = vmatprep.subr.bf16.mxu0 0
    %558 = vmatpush1.bf16.msra.mxu0 0
    %559 = vmatprep.subr.bf16.mxu0 0
    %560 = vmatpush1.bf16.msra.mxu0 0
    %561 = vmatprep.subr.bf16.mxu0 0
    %562 = vmatpush1.bf16.msra.mxu0 0
    %563 = vmatprep.subr.bf16.mxu0 0
    %564 = vmatpush1.bf16.msra.mxu0 0
    %565 = vmatprep.subr.bf16.mxu0 0
    %566 = vmatpush1.bf16.msra.mxu0 0
    %567 = vmatprep.subr.bf16.mxu0 0
    %568 = vmatpush1.bf16.msra.mxu0 0
    %569 = vmatprep.mubr.bf16.mxu0 0
    %570 = vmatmul.mubr.bf16.gmra.mrb[0].mxu0 %v514
    %v571 = vpop.f32.mrb[0].mxu0
    %v572 = vadd.f32 %v500, %v571
    %v573 = vpop.f32.mrb[0].mxu0
    %v574 = vpop.f32.mrb[0].mxu0
    %v575 = vadd.f32 %v500, %v574
    %v576 = vpop.f32.mrb[0].mxu0
    %577 = vmatprep.mubr.bf16.mxu0 0
    %578 = vmatmul.mubr.bf16.gmra.mrb[0].mxu0 %v517
    %v579 = vpop.f32.mrb[0].mxu0
    %v580 = vadd.f32 %v500, %v579
    %v581 = vpop.f32.mrb[0].mxu0
    %v582 = vpop.f32.mrb[0].mxu0
    %v583 = vadd.f32 %v500, %v582
    %v584 = vpop.f32.mrb[0].mxu0
    %585 = vmatprep.mubr.bf16.mxu0 0
    %586 = vmatmul.mubr.bf16.gmra.mrb[0].mxu0 %v520
    %v587 = vpop.f32.mrb[0].mxu0
    %v588 = vadd.f32 %v500, %v587
    %v589 = vpop.f32.mrb[0].mxu0
    %v590 = vpop.f32.mrb[0].mxu0
    %v591 = vadd.f32 %v500, %v590
    %v592 = vpop.f32.mrb[0].mxu0
    %593 = vmatprep.mubr.bf16.mxu0 0
    %594 = vmatmul.mubr.bf16.gmra.mrb[0].mxu0 %v523
    %v595 = vpop.f32.mrb[0].mxu0
    %v596 = vadd.f32 %v500, %v595
    %v597 = vpop.f32.mrb[0].mxu0
    %v598 = vpop.f32.mrb[0].mxu0
    %v599 = vadd.f32 %v500, %v598
    %v600 = vpop.f32.mrb[0].mxu0
    %601 = vmatprep.mubr.bf16.mxu0 0
    %602 = vmatmul.mubr.bf16.gmra.mrb[0].mxu0 %v526
    %v603 = vpop.f32.mrb[0].mxu0
    %v604 = vadd.f32 %v500, %v603
    %v605 = vpop.f32.mrb[0].mxu0
    %v606 = vpop.f32.mrb[0].mxu0
    %v607 = vadd.f32 %v500, %v606
    %v608 = vpop.f32.mrb[0].mxu0
    %609 = vmatprep.mubr.bf16.mxu0 0
    %610 = vmatmul.mubr.bf16.gmra.mrb[0].mxu0 %v529
    %v611 = vpop.f32.mrb[0].mxu0
    %v612 = vadd.f32 %v500, %v611
    %v613 = vpop.f32.mrb[0].mxu0
    %v614 = vpop.f32.mrb[0].mxu0
    %v615 = vadd.f32 %v500, %v614
    %v616 = vpop.f32.mrb[0].mxu0
    %617 = vmatprep.mubr.bf16.mxu0 0
    %618 = vmatmul.mubr.bf16.gmra.mrb[0].mxu0 %v532
    %v619 = vpop.f32.mrb[0].mxu0
    %v620 = vadd.f32 %v500, %v619
    %v621 = vpop.f32.mrb[0].mxu0
    %v622 = vpop.f32.mrb[0].mxu0
    %v623 = vadd.f32 %v500, %v622
    %v624 = vpop.f32.mrb[0].mxu0
    %625 = vmatprep.mubr.bf16.mxu0 0
    %626 = vmatmul.mubr.bf16.gmra.mrb[0].mxu0 %v535
    %v627 = vpop.f32.mrb[0].mxu0
    %v628 = vadd.f32 %v500, %v627
    %v629 = vpop.f32.mrb[0].mxu0
    %v630 = vpop.f32.mrb[0].mxu0
    %v631 = vadd.f32 %v500, %v630
    %v632 = vpop.f32.mrb[0].mxu0
    %633 = vdwg.mxu0
    %v634 = vsel %vm140, %v572, 0.0
    %v635 = vsel %vm140, %v575, 0.0
    %v636 = vadd.f32 %v634, %v635
    %v637 = vsel %vm140, %v580, 0.0
    %v638 = vadd.f32 %v636, %v637
    %v639 = vsel %vm140, %v583, 0.0
    %v640 = vadd.f32 %v638, %v639
    %v641 = vsel %vm140, %v588, 0.0
    %v642 = vadd.f32 %v640, %v641
    %v643 = vsel %vm140, %v591, 0.0
    %v644 = vadd.f32 %v642, %v643
    %v645 = vsel %vm140, %v596, 0.0
    %v646 = vadd.f32 %v644, %v645
    %v647 = vsel %vm140, %v599, 0.0
    %v648 = vadd.f32 %v646, %v647
    %v649 = vsel %vm140, %v604, 0.0
    %v650 = vadd.f32 %v648, %v649
    %v651 = vsel %vm140, %v607, 0.0
    %v652 = vadd.f32 %v650, %v651
    %v653 = vsel %vm140, %v612, 0.0
    %v654 = vadd.f32 %v652, %v653
    %v655 = vsel %vm140, %v615, 0.0
    %v656 = vadd.f32 %v654, %v655
    %v657 = vsel %vm140, %v620, 0.0
    %v658 = vadd.f32 %v656, %v657
    %v659 = vsel %vm140, %v623, 0.0
    %v660 = vadd.f32 %v658, %v659
    %v661 = vsel %vm140, %v628, 0.0
    %v662 = vadd.f32 %v660, %v661
    %v663 = vsel %vm140, %v631, 0.0
    %v664 = vadd.f32 %v662, %v663
    %v665 = vrot.slane %v664, 4
    %v666 = vadd.f32 %v664, %v665
    %v667 = vrot.slane %v666, 2
    %v668 = vadd.f32 %v666, %v667
    %v669 = vrot.slane %v668, 1
    %v670 = vadd.f32 %v668, %v669
    %v671 = vmul.f32 %v670, %v300
    %v672 = vmul.f32 %v572, %v572
    %v673 = vmul.f32 %v575, %v575
    %v674 = vmul.f32 %v580, %v580
    %v675 = vmul.f32 %v583, %v583
    %v676 = vmul.f32 %v588, %v588
    %v677 = vmul.f32 %v591, %v591
    %v678 = vmul.f32 %v596, %v596
    %v679 = vmul.f32 %v599, %v599
    %v680 = vmul.f32 %v604, %v604
    %v681 = vmul.f32 %v607, %v607
    %v682 = vmul.f32 %v612, %v612
    %v683 = vmul.f32 %v615, %v615
    %v684 = vmul.f32 %v620, %v620
    %v685 = vmul.f32 %v623, %v623
    %v686 = vmul.f32 %v628, %v628
    %v687 = vmul.f32 %v631, %v631
    %v688 = vsel %vm140, %v672, 0.0
    %v689 = vsel %vm140, %v673, 0.0
    %v690 = vadd.f32 %v688, %v689
    %v691 = vsel %vm140, %v674, 0.0
    %v692 = vadd.f32 %v690, %v691
    %v693 = vsel %vm140, %v675, 0.0
    %v694 = vadd.f32 %v692, %v693
    %v695 = vsel %vm140, %v676, 0.0
    %v696 = vadd.f32 %v694, %v695
    %v697 = vsel %vm140, %v677, 0.0
    %v698 = vadd.f32 %v696, %v697
    %v699 = vsel %vm140, %v678, 0.0
    %v700 = vadd.f32 %v698, %v699
    %v701 = vsel %vm140, %v679, 0.0
    %v702 = vadd.f32 %v700, %v701
    %v703 = vsel %vm140, %v680, 0.0
    %v704 = vadd.f32 %v702, %v703
    %v705 = vsel %vm140, %v681, 0.0
    %v706 = vadd.f32 %v704, %v705
    %v707 = vsel %vm140, %v682, 0.0
    %v708 = vadd.f32 %v706, %v707
    %v709 = vsel %vm140, %v683, 0.0
    %v710 = vadd.f32 %v708, %v709
    %v711 = vsel %vm140, %v684, 0.0
    %v712 = vadd.f32 %v710, %v711
    %v713 = vsel %vm140, %v685, 0.0
    %v714 = vadd.f32 %v712, %v713
    %v715 = vsel %vm140, %v686, 0.0
    %v716 = vadd.f32 %v714, %v715
    %v717 = vsel %vm140, %v687, 0.0
    %v718 = vadd.f32 %v716, %v717
    %v719 = vrot.slane %v718, 4
    %v720 = vadd.f32 %v718, %v719
    %v721 = vrot.slane %v720, 2
    %v722 = vadd.f32 %v720, %v721
    %v723 = vrot.slane %v722, 1
    %v724 = vadd.f32 %v722, %v723
    %v725 = vmul.f32 %v724, %v300
    %v726 = vmul.f32 %v671, %v671
    %v727 = vsub.f32 %v725, %v726
    %v728 = vsub.f32 %v572, %v671
    %v729 = vsub.f32 %v575, %v671
    %v730 = vsub.f32 %v580, %v671
    %v731 = vsub.f32 %v583, %v671
    %v732 = vsub.f32 %v588, %v671
    %v733 = vsub.f32 %v591, %v671
    %v734 = vsub.f32 %v596, %v671
    %v735 = vsub.f32 %v599, %v671
    %v736 = vsub.f32 %v604, %v671
    %v737 = vsub.f32 %v607, %v671
    %v738 = vsub.f32 %v612, %v671
    %v739 = vsub.f32 %v615, %v671
    %v740 = vsub.f32 %v620, %v671
    %v741 = vsub.f32 %v623, %v671
    %v742 = vsub.f32 %v628, %v671
    %v743 = vsub.f32 %v631, %v671
    %v744 = vadd.f32 %v727, 1e-05
    %v745 = vrsqrt.pop %v744
    %v746 = vmul.f32 %v728, %v745
    %v747 = vmul.f32 %v729, %v745
    %v748 = vmul.f32 %v730, %v745
    %v749 = vmul.f32 %v731, %v745
    %v750 = vmul.f32 %v732, %v745
    %v751 = vmul.f32 %v733, %v745
    %v752 = vmul.f32 %v734, %v745
    %v753 = vmul.f32 %v735, %v745
    %v754 = vmul.f32 %v736, %v745
    %v755 = vmul.f32 %v737, %v745
    %v756 = vmul.f32 %v738, %v745
    %v757 = vmul.f32 %v739, %v745
    %v758 = vmul.f32 %v740, %v745
    %v759 = vmul.f32 %v741, %v745
    %v760 = vmul.f32 %v742, %v745
    %v761 = vmul.f32 %v743, %v745
    %v762 = vld [vmem:[%s6 + $0x1] sm:$0x1]
    %v763 = vlaneseq
    %v764 = vshrl.u32 %v763, 7
    %v765 = vsub.s32 0, %v764
    %v766 = vrot.slane %v762, %v765
    %v767 = vmul.f32 %v746, %v766
    %v768 = vmul.f32 %v747, %v766
    %v769 = vmul.f32 %v748, %v766
    %v770 = vmul.f32 %v749, %v766
    %v771 = vmul.f32 %v750, %v766
    %v772 = vmul.f32 %v751, %v766
    %v773 = vmul.f32 %v752, %v766
    %v774 = vmul.f32 %v753, %v766
    %v775 = vmul.f32 %v754, %v766
    %v776 = vmul.f32 %v755, %v766
    %v777 = vmul.f32 %v756, %v766
    %v778 = vmul.f32 %v757, %v766
    %v779 = vmul.f32 %v758, %v766
    %v780 = vmul.f32 %v759, %v766
    %v781 = vmul.f32 %v760, %v766
    %v782 = vmul.f32 %v761, %v766
    %v783 = vld [vmem:[%s6 + $0x2] sm:$0x1]
    %v784 = vlaneseq
    %v785 = vshrl.u32 %v784, 7
    %v786 = vsub.s32 0, %v785
    %v787 = vrot.slane %v783, %v786
    %v788 = vadd.f32 %v767, %v787
    %v789 = vadd.f32 %v768, %v787
    %v790 = vadd.f32 %v769, %v787
    %v791 = vadd.f32 %v770, %v787
    %v792 = vadd.f32 %v771, %v787
    %v793 = vadd.f32 %v772, %v787
    %v794 = vadd.f32 %v773, %v787
    %v795 = vadd.f32 %v774, %v787
    %v796 = vadd.f32 %v775, %v787
    %v797 = vadd.f32 %v776, %v787
    %v798 = vadd.f32 %v777, %v787
    %v799 = vadd.f32 %v778, %v787
    %v800 = vadd.f32 %v779, %v787
    %v801 = vadd.f32 %v780, %v787
    %v802 = vadd.f32 %v781, %v787
    %v803 = vadd.f32 %v782, %v787
    %vm804 = vcmp.ge.f32.partialorder %v788, 0.0
    %vm805 = vcmp.ge.f32.partialorder %v789, 0.0
    %vm806 = vcmp.ge.f32.partialorder %v790, 0.0
    %vm807 = vcmp.ge.f32.partialorder %v791, 0.0
    %vm808 = vcmp.ge.f32.partialorder %v792, 0.0
    %vm809 = vcmp.ge.f32.partialorder %v793, 0.0
    %vm810 = vcmp.ge.f32.partialorder %v794, 0.0
    %vm811 = vcmp.ge.f32.partialorder %v795, 0.0
    %vm812 = vcmp.ge.f32.partialorder %v796, 0.0
    %vm813 = vcmp.ge.f32.partialorder %v797, 0.0
    %vm814 = vcmp.ge.f32.partialorder %v798, 0.0
    %vm815 = vcmp.ge.f32.partialorder %v799, 0.0
    %vm816 = vcmp.ge.f32.partialorder %v800, 0.0
    %vm817 = vcmp.ge.f32.partialorder %v801, 0.0
    %vm818 = vcmp.ge.f32.partialorder %v802, 0.0
    %vm819 = vcmp.ge.f32.partialorder %v803, 0.0
    %v820 = vstv %s483
    %v821 = vmul.f32 %v820, %v788
    %v822 = vmul.f32 %v820, %v789
    %v823 = vmul.f32 %v820, %v790
    %v824 = vmul.f32 %v820, %v791
    %v825 = vmul.f32 %v820, %v792
    %v826 = vmul.f32 %v820, %v793
    %v827 = vmul.f32 %v820, %v794
    %v828 = vmul.f32 %v820, %v795
    %v829 = vmul.f32 %v820, %v796
    %v830 = vmul.f32 %v820, %v797
    %v831 = vmul.f32 %v820, %v798
    %v832 = vmul.f32 %v820, %v799
    %v833 = vmul.f32 %v820, %v800
    %v834 = vmul.f32 %v820, %v801
    %v835 = vmul.f32 %v820, %v802
    %v836 = vmul.f32 %v820, %v803
    %v837 = vsel %vm804, %v788, %v821
    %v838 = vsel %vm805, %v789, %v822
    %v839 = vsel %vm806, %v790, %v823
    %v840 = vsel %vm807, %v791, %v824
    %v841 = vsel %vm808, %v792, %v825
    %v842 = vsel %vm809, %v793, %v826
    %v843 = vsel %vm810, %v794, %v827
    %v844 = vsel %vm811, %v795, %v828
    %v845 = vsel %vm812, %v796, %v829
    %v846 = vsel %vm813, %v797, %v830
    %v847 = vsel %vm814, %v798, %v831
    %v848 = vsel %vm815, %v799, %v832
    %v849 = vsel %vm816, %v800, %v833
    %v850 = vsel %vm817, %v801, %v834
    %v851 = vsel %vm818, %v802, %v835
    %v852 = vsel %vm819, %v803, %v836
    %s853 = sld [smem:[#allocation2 + $0x2]]
    %v854 = vpack.c.bf16 %v838, %v837
    %v855 = vpack.c.bf16 %v840, %v839
    %v856 = vpack.c.bf16 %v842, %v841
    %v857 = vpack.c.bf16 %v844, %v843
    %v858 = vpack.c.bf16 %v846, %v845
    %v859 = vpack.c.bf16 %v848, %v847
    %v860 = vpack.c.bf16 %v850, %v849
    %v861 = vpack.c.bf16 %v852, %v851
    %v862 = vld [vmem:[%s7] sm:$0xf]
    %v863 = vld [vmem:[%s7 + $0x4] sm:$0xf]
    %v864 = vld [vmem:[%s7 + $0x8] sm:$0xf]
    %v865 = vld [vmem:[%s7 + $0xc] sm:$0xf]
    %v866 = vld [vmem:[%s7 + $0x10] sm:$0xf]
    %v867 = vld [vmem:[%s7 + $0x14] sm:$0xf]
    %v868 = vld [vmem:[%s7 + $0x18] sm:$0xf]
    %v869 = vld [vmem:[%s7 + $0x1c] sm:$0xf]
    %v870 = vld [vmem:[%s8] sm:$0x1]
    %v871 = vlaneseq
    %v872 = vshrl.u32 %v871, 7
    %v873 = vsub.s32 0, %v872
    %v874 = vrot.slane %v870, %v873
    %v883 = vunpack.c.l.b16 %v862
    %v884 = vunpack.c.l.b16 %v863
    %v885 = vunpack.c.l.b16 %v864
    %v886 = vunpack.c.l.b16 %v865
    %v887 = vunpack.c.l.b16 %v866
    %v888 = vunpack.c.l.b16 %v867
    %v889 = vunpack.c.l.b16 %v868
    %v890 = vunpack.c.l.b16 %v869
    %v891 = vpack.c.b16 %v884, %v883
    %v892 = vpack.c.b16 %v886, %v885
    %v893 = vpack.c.b16 %v888, %v887
    %v894 = vpack.c.b16 %v890, %v889
    %v900 = vsel %vm140, %v854, 0
    %v903 = vsel %vm140, %v855, 0
    %v906 = vsel %vm140, %v856, 0
    %v909 = vsel %vm140, %v857, 0
    %v912 = vsel %vm140, %v858, 0
    %v915 = vsel %vm140, %v859, 0
    %v918 = vsel %vm140, %v860, 0
    %v921 = vsel %vm140, %v861, 0
    %923 = vmatprep.subr.bf16.mxu0 0
    %924 = vmatpush1.bf16.msra.mxu0 %v891
    %925 = vmatprep.subr.bf16.mxu0 0
    %926 = vmatpush1.bf16.msra.mxu0 %v892
    %927 = vmatprep.subr.bf16.mxu0 0
    %928 = vmatpush1.bf16.msra.mxu0 %v893
    %929 = vmatprep.subr.bf16.mxu0 0
    %930 = vmatpush1.bf16.msra.mxu0 %v894
    %931 = vmatprep.subr.bf16.mxu0 0
    %932 = vmatpush1.bf16.msra.mxu0 0
    %933 = vmatprep.subr.bf16.mxu0 0
    %934 = vmatpush1.bf16.msra.mxu0 0
    %935 = vmatprep.subr.bf16.mxu0 0
    %936 = vmatpush1.bf16.msra.mxu0 0
    %937 = vmatprep.subr.bf16.mxu0 0
    %938 = vmatpush1.bf16.msra.mxu0 0
    %939 = vmatprep.subr.bf16.mxu0 0
    %940 = vmatpush1.bf16.msra.mxu0 0
    %941 = vmatprep.subr.bf16.mxu0 0
    %942 = vmatpush1.bf16.msra.mxu0 0
    %943 = vmatprep.subr.bf16.mxu0 0
    %944 = vmatpush1.bf16.msra.mxu0 0
    %945 = vmatprep.subr.bf16.mxu0 0
    %946 = vmatpush1.bf16.msra.mxu0 0
    %947 = vmatprep.subr.bf16.mxu0 0
    %948 = vmatpush1.bf16.msra.mxu0 0
    %949 = vmatprep.subr.bf16.mxu0 0
    %950 = vmatpush1.bf16.msra.mxu0 0
    %951 = vmatprep.subr.bf16.mxu0 0
    %952 = vmatpush1.bf16.msra.mxu0 0
    %953 = vmatprep.subr.bf16.mxu0 0
    %954 = vmatpush1.bf16.msra.mxu0 0
    %955 = vmatprep.mubr.bf16.mxu0 0
    %956 = vmatmul.mubr.bf16.gmra.mrb[0].mxu0 %v900
    %v957 = vpop.f32.mrb[0].mxu0
    %v958 = vadd.f32 %v874, %v957
    %v959 = vpop.f32.mrb[0].mxu0
    %v960 = vpop.f32.mrb[0].mxu0
    %v961 = vadd.f32 %v874, %v960
    %v962 = vpop.f32.mrb[0].mxu0
    %963 = vmatprep.mubr.bf16.mxu0 0
    %964 = vmatmul.mubr.bf16.gmra.mrb[0].mxu0 %v903
    %v965 = vpop.f32.mrb[0].mxu0
    %v966 = vadd.f32 %v874, %v965
    %v967 = vpop.f32.mrb[0].mxu0
    %v968 = vpop.f32.mrb[0].mxu0
    %v969 = vadd.f32 %v874, %v968
    %v970 = vpop.f32.mrb[0].mxu0
    %971 = vmatprep.mubr.bf16.mxu0 0
    %972 = vmatmul.mubr.bf16.gmra.mrb[0].mxu0 %v906
    %v973 = vpop.f32.mrb[0].mxu0
    %v974 = vadd.f32 %v874, %v973
    %v975 = vpop.f32.mrb[0].mxu0
    %v976 = vpop.f32.mrb[0].mxu0
    %v977 = vadd.f32 %v874, %v976
    %v978 = vpop.f32.mrb[0].mxu0
    %979 = vmatprep.mubr.bf16.mxu0 0
    %980 = vmatmul.mubr.bf16.gmra.mrb[0].mxu0 %v909
    %v981 = vpop.f32.mrb[0].mxu0
    %v982 = vadd.f32 %v874, %v981
    %v983 = vpop.f32.mrb[0].mxu0
    %v984 = vpop.f32.mrb[0].mxu0
    %v985 = vadd.f32 %v874, %v984
    %v986 = vpop.f32.mrb[0].mxu0
    %987 = vmatprep.mubr.bf16.mxu0 0
    %988 = vmatmul.mubr.bf16.gmra.mrb[0].mxu0 %v912
    %v989 = vpop.f32.mrb[0].mxu0
    %v990 = vadd.f32 %v874, %v989
    %v991 = vpop.f32.mrb[0].mxu0
    %v992 = vpop.f32.mrb[0].mxu0
    %v993 = vadd.f32 %v874, %v992
    %v994 = vpop.f32.mrb[0].mxu0
    %995 = vmatprep.mubr.bf16.mxu0 0
    %996 = vmatmul.mubr.bf16.gmra.mrb[0].mxu0 %v915
    %v997 = vpop.f32.mrb[0].mxu0
    %v998 = vadd.f32 %v874, %v997
    %v999 = vpop.f32.mrb[0].mxu0
    %v1000 = vpop.f32.mrb[0].mxu0
    %v1001 = vadd.f32 %v874, %v1000
    %v1002 = vpop.f32.mrb[0].mxu0
    %1003 = vmatprep.mubr.bf16.mxu0 0
    %1004 = vmatmul.mubr.bf16.gmra.mrb[0].mxu0 %v918
    %v1005 = vpop.f32.mrb[0].mxu0
    %v1006 = vadd.f32 %v874, %v1005
    %v1007 = vpop.f32.mrb[0].mxu0
    %v1008 = vpop.f32.mrb[0].mxu0
    %v1009 = vadd.f32 %v874, %v1008
    %v1010 = vpop.f32.mrb[0].mxu0
    %1011 = vmatprep.mubr.bf16.mxu0 0
    %1012 = vmatmul.mubr.bf16.gmra.mrb[0].mxu0 %v921
    %v1013 = vpop.f32.mrb[0].mxu0
    %v1014 = vadd.f32 %v874, %v1013
    %v1015 = vpop.f32.mrb[0].mxu0
    %v1016 = vpop.f32.mrb[0].mxu0
    %v1017 = vadd.f32 %v874, %v1016
    %v1018 = vpop.f32.mrb[0].mxu0
    %1019 = vdwg.mxu0
    %v1020 = vadd.f32 %v958, %v961
    %v1021 = vadd.f32 %v1020, %v966
    %v1022 = vadd.f32 %v1021, %v969
    %v1023 = vadd.f32 %v1022, %v974
    %v1024 = vadd.f32 %v1023, %v977
    %v1025 = vadd.f32 %v1024, %v982
    %v1026 = vadd.f32 %v1025, %v985
    %v1027 = vadd.f32 %v1026, %v990
    %v1028 = vadd.f32 %v1027, %v993
    %v1029 = vadd.f32 %v1028, %v998
    %v1030 = vadd.f32 %v1029, %v1001
    %v1031 = vadd.f32 %v1030, %v1006
    %v1032 = vadd.f32 %v1031, %v1009
    %v1033 = vadd.f32 %v1032, %v1014
    %v1034 = vadd.f32 %v1033, %v1017
    %v1035 = vrot.slane %v1034, 4
    %v1036 = vadd.f32 %v1034, %v1035
    %v1037 = vrot.slane %v1036, 2
    %v1038 = vadd.f32 %v1036, %v1037
    %v1039 = vrot.slane %v1038, 1
    %v1040 = vadd.f32 %v1038, %v1039
    %v1041 = vmul.f32 %v1040, %v300
    %v1042 = vmul.f32 %v958, %v958
    %v1043 = vmul.f32 %v961, %v961
    %v1044 = vmul.f32 %v966, %v966
    %v1045 = vmul.f32 %v969, %v969
    %v1046 = vmul.f32 %v974, %v974
    %v1047 = vmul.f32 %v977, %v977
    %v1048 = vmul.f32 %v982, %v982
    %v1049 = vmul.f32 %v985, %v985
    %v1050 = vmul.f32 %v990, %v990
    %v1051 = vmul.f32 %v993, %v993
    %v1052 = vmul.f32 %v998, %v998
    %v1053 = vmul.f32 %v1001, %v1001
    %v1054 = vmul.f32 %v1006, %v1006
    %v1055 = vmul.f32 %v1009, %v1009
    %v1056 = vmul.f32 %v1014, %v1014
    %v1057 = vmul.f32 %v1017, %v1017
    %v1058 = vadd.f32 %v1042, %v1043
    %v1059 = vadd.f32 %v1058, %v1044
    %v1060 = vadd.f32 %v1059, %v1045
    %v1061 = vadd.f32 %v1060, %v1046
    %v1062 = vadd.f32 %v1061, %v1047
    %v1063 = vadd.f32 %v1062, %v1048
    %v1064 = vadd.f32 %v1063, %v1049
    %v1065 = vadd.f32 %v1064, %v1050
    %v1066 = vadd.f32 %v1065, %v1051
    %v1067 = vadd.f32 %v1066, %v1052
    %v1068 = vadd.f32 %v1067, %v1053
    %v1069 = vadd.f32 %v1068, %v1054
    %v1070 = vadd.f32 %v1069, %v1055
    %v1071 = vadd.f32 %v1070, %v1056
    %v1072 = vadd.f32 %v1071, %v1057
    %v1073 = vrot.slane %v1072, 4
    %v1074 = vadd.f32 %v1072, %v1073
    %v1075 = vrot.slane %v1074, 2
    %v1076 = vadd.f32 %v1074, %v1075
    %v1077 = vrot.slane %v1076, 1
    %v1078 = vadd.f32 %v1076, %v1077
    %v1079 = vmul.f32 %v1078, %v300
    %v1080 = vmul.f32 %v1041, %v1041
    %v1081 = vsub.f32 %v1079, %v1080
    %v1082 = vsub.f32 %v958, %v1041
    %v1083 = vsub.f32 %v961, %v1041
    %v1084 = vsub.f32 %v966, %v1041
    %v1085 = vsub.f32 %v969, %v1041
    %v1086 = vsub.f32 %v974, %v1041
    %v1087 = vsub.f32 %v977, %v1041
    %v1088 = vsub.f32 %v982, %v1041
    %v1089 = vsub.f32 %v985, %v1041
    %v1090 = vsub.f32 %v990, %v1041
    %v1091 = vsub.f32 %v993, %v1041
    %v1092 = vsub.f32 %v998, %v1041
    %v1093 = vsub.f32 %v1001, %v1041
    %v1094 = vsub.f32 %v1006, %v1041
    %v1095 = vsub.f32 %v1009, %v1041
    %v1096 = vsub.f32 %v1014, %v1041
    %v1097 = vsub.f32 %v1017, %v1041
    %v1098 = vadd.f32 %v1081, 1e-05
    %v1099 = vrsqrt.pop %v1098
    %v1100 = vmul.f32 %v1082, %v1099
    %v1101 = vmul.f32 %v1083, %v1099
    %v1102 = vmul.f32 %v1084, %v1099
    %v1103 = vmul.f32 %v1085, %v1099
    %v1104 = vmul.f32 %v1086, %v1099
    %v1105 = vmul.f32 %v1087, %v1099
    %v1106 = vmul.f32 %v1088, %v1099
    %v1107 = vmul.f32 %v1089, %v1099
    %v1108 = vmul.f32 %v1090, %v1099
    %v1109 = vmul.f32 %v1091, %v1099
    %v1110 = vmul.f32 %v1092, %v1099
    %v1111 = vmul.f32 %v1093, %v1099
    %v1112 = vmul.f32 %v1094, %v1099
    %v1113 = vmul.f32 %v1095, %v1099
    %v1114 = vmul.f32 %v1096, %v1099
    %v1115 = vmul.f32 %v1097, %v1099
    %v1116 = vld [vmem:[%s8 + $0x1] sm:$0x1]
    %v1117 = vlaneseq
    %v1118 = vshrl.u32 %v1117, 7
    %v1119 = vsub.s32 0, %v1118
    %v1120 = vrot.slane %v1116, %v1119
    %v1121 = vmul.f32 %v1100, %v1120
    %v1122 = vmul.f32 %v1101, %v1120
    %v1123 = vmul.f32 %v1102, %v1120
    %v1124 = vmul.f32 %v1103, %v1120
    %v1125 = vmul.f32 %v1104, %v1120
    %v1126 = vmul.f32 %v1105, %v1120
    %v1127 = vmul.f32 %v1106, %v1120
    %v1128 = vmul.f32 %v1107, %v1120
    %v1129 = vmul.f32 %v1108, %v1120
    %v1130 = vmul.f32 %v1109, %v1120
    %v1131 = vmul.f32 %v1110, %v1120
    %v1132 = vmul.f32 %v1111, %v1120
    %v1133 = vmul.f32 %v1112, %v1120
    %v1134 = vmul.f32 %v1113, %v1120
    %v1135 = vmul.f32 %v1114, %v1120
    %v1136 = vmul.f32 %v1115, %v1120
    %v1137 = vld [vmem:[%s8 + $0x2] sm:$0x1]
    %v1138 = vlaneseq
    %v1139 = vshrl.u32 %v1138, 7
    %v1140 = vsub.s32 0, %v1139
    %v1141 = vrot.slane %v1137, %v1140
    %v1142 = vadd.f32 %v1121, %v1141
    %v1143 = vadd.f32 %v1122, %v1141
    %v1144 = vadd.f32 %v1123, %v1141
    %v1145 = vadd.f32 %v1124, %v1141
    %v1146 = vadd.f32 %v1125, %v1141
    %v1147 = vadd.f32 %v1126, %v1141
    %v1148 = vadd.f32 %v1127, %v1141
    %v1149 = vadd.f32 %v1128, %v1141
    %v1150 = vadd.f32 %v1129, %v1141
    %v1151 = vadd.f32 %v1130, %v1141
    %v1152 = vadd.f32 %v1131, %v1141
    %v1153 = vadd.f32 %v1132, %v1141
    %v1154 = vadd.f32 %v1133, %v1141
    %v1155 = vadd.f32 %v1134, %v1141
    %v1156 = vadd.f32 %v1135, %v1141
    %v1157 = vadd.f32 %v1136, %v1141
    %vm1158 = vcmp.ge.f32.partialorder %v1142, 0.0
    %vm1159 = vcmp.ge.f32.partialorder %v1143, 0.0
    %vm1160 = vcmp.ge.f32.partialorder %v1144, 0.0
    %vm1161 = vcmp.ge.f32.partialorder %v1145, 0.0
    %vm1162 = vcmp.ge.f32.partialorder %v1146, 0.0
    %vm1163 = vcmp.ge.f32.partialorder %v1147, 0.0
    %vm1164 = vcmp.ge.f32.partialorder %v1148, 0.0
    %vm1165 = vcmp.ge.f32.partialorder %v1149, 0.0
    %vm1166 = vcmp.ge.f32.partialorder %v1150, 0.0
    %vm1167 = vcmp.ge.f32.partialorder %v1151, 0.0
    %vm1168 = vcmp.ge.f32.partialorder %v1152, 0.0
    %vm1169 = vcmp.ge.f32.partialorder %v1153, 0.0
    %vm1170 = vcmp.ge.f32.partialorder %v1154, 0.0
    %vm1171 = vcmp.ge.f32.partialorder %v1155, 0.0
    %vm1172 = vcmp.ge.f32.partialorder %v1156, 0.0
    %vm1173 = vcmp.ge.f32.partialorder %v1157, 0.0
    %v1174 = vstv %s853
    %v1175 = vmul.f32 %v1174, %v1142
    %v1176 = vmul.f32 %v1174, %v1143
    %v1177 = vmul.f32 %v1174, %v1144
    %v1178 = vmul.f32 %v1174, %v1145
    %v1179 = vmul.f32 %v1174, %v1146
    %v1180 = vmul.f32 %v1174, %v1147
    %v1181 = vmul.f32 %v1174, %v1148
    %v1182 = vmul.f32 %v1174, %v1149
    %v1183 = vmul.f32 %v1174, %v1150
    %v1184 = vmul.f32 %v1174, %v1151
    %v1185 = vmul.f32 %v1174, %v1152
    %v1186 = vmul.f32 %v1174, %v1153
    %v1187 = vmul.f32 %v1174, %v1154
    %v1188 = vmul.f32 %v1174, %v1155
    %v1189 = vmul.f32 %v1174, %v1156
    %v1190 = vmul.f32 %v1174, %v1157
    %v1191 = vsel %vm1158, %v1142, %v1175
    %v1192 = vsel %vm1159, %v1143, %v1176
    %v1193 = vsel %vm1160, %v1144, %v1177
    %v1194 = vsel %vm1161, %v1145, %v1178
    %v1195 = vsel %vm1162, %v1146, %v1179
    %v1196 = vsel %vm1163, %v1147, %v1180
    %v1197 = vsel %vm1164, %v1148, %v1181
    %v1198 = vsel %vm1165, %v1149, %v1182
    %v1199 = vsel %vm1166, %v1150, %v1183
    %v1200 = vsel %vm1167, %v1151, %v1184
    %v1201 = vsel %vm1168, %v1152, %v1185
    %v1202 = vsel %vm1169, %v1153, %v1186
    %v1203 = vsel %vm1170, %v1154, %v1187
    %v1204 = vsel %vm1171, %v1155, %v1188
    %v1205 = vsel %vm1172, %v1156, %v1189
    %v1206 = vsel %vm1173, %v1157, %v1190
    %v1207 = vpack.c.bf16 %v1192, %v1191
    %v1208 = vpack.c.bf16 %v1194, %v1193
    %v1209 = vpack.c.bf16 %v1196, %v1195
    %v1210 = vpack.c.bf16 %v1198, %v1197
    %v1211 = vpack.c.bf16 %v1200, %v1199
    %v1212 = vpack.c.bf16 %v1202, %v1201
    %v1213 = vpack.c.bf16 %v1204, %v1203
    %v1214 = vpack.c.bf16 %v1206, %v1205
    %v1215 = vld [vmem:[%s9] sm:$0xf]
    %v1216 = vld [vmem:[%s9 + $0x4] sm:$0xf]
    %v1217 = vld [vmem:[%s9 + $0x8] sm:$0xf]
    %v1218 = vld [vmem:[%s9 + $0xc] sm:$0xf]
    %v1219 = vld [vmem:[%s9 + $0x10] sm:$0xf]
    %v1220 = vld [vmem:[%s9 + $0x14] sm:$0xf]
    %v1221 = vld [vmem:[%s9 + $0x18] sm:$0xf]
    %v1222 = vld [vmem:[%s9 + $0x1c] sm:$0xf]
    %v1223 = vld [vmem:[%s9 + $0x20] sm:$0xf]
    %v1224 = vld [vmem:[%s9 + $0x24] sm:$0xf]
    %v1225 = vld [vmem:[%s9 + $0x28] sm:$0xf]
    %v1226 = vld [vmem:[%s9 + $0x2c] sm:$0xf]
    %v1227 = vld [vmem:[%s9 + $0x30] sm:$0xf]
    %v1228 = vld [vmem:[%s9 + $0x34] sm:$0xf]
    %v1229 = vld [vmem:[%s9 + $0x38] sm:$0xf]
    %v1230 = vld [vmem:[%s9 + $0x3c] sm:$0xf]
    %v1231 = vld [vmem:[%s10] sm:$0x1]
    %v1233 = vlaneseq
    %v1234 = vshrl.u32 %v1233, 7
    %v1235 = vsub.s32 0, %v1234
    %v1236 = vrot.slane %v1231, %v1235
    %v1254 = vunpack.c.l.b16 %v1215
    %v1255 = vunpack.c.l.b16 %v1216
    %v1256 = vunpack.c.l.b16 %v1217
    %v1257 = vunpack.c.l.b16 %v1218
    %v1258 = vunpack.c.l.b16 %v1219
    %v1259 = vunpack.c.l.b16 %v1220
    %v1260 = vunpack.c.l.b16 %v1221
    %v1261 = vunpack.c.l.b16 %v1222
    %v1262 = vunpack.c.l.b16 %v1223
    %v1263 = vunpack.c.l.b16 %v1224
    %v1264 = vunpack.c.l.b16 %v1225
    %v1265 = vunpack.c.l.b16 %v1226
    %v1266 = vunpack.c.l.b16 %v1227
    %v1267 = vunpack.c.l.b16 %v1228
    %v1268 = vunpack.c.l.b16 %v1229
    %v1269 = vunpack.c.l.b16 %v1230
    %v1270 = vpack.c.b16 %v1255, %v1254
    %v1271 = vpack.c.b16 %v1257, %v1256
    %v1272 = vpack.c.b16 %v1259, %v1258
    %v1273 = vpack.c.b16 %v1261, %v1260
    %v1274 = vpack.c.b16 %v1263, %v1262
    %v1275 = vpack.c.b16 %v1265, %v1264
    %v1276 = vpack.c.b16 %v1267, %v1266
    %v1277 = vpack.c.b16 %v1269, %v1268
    %1286 = vmatprep.subr.bf16.mxu0 0
    %1287 = vmatpush1.bf16.msra.mxu0 %v1270
    %1288 = vmatprep.subr.bf16.mxu0 0
    %1289 = vmatpush1.bf16.msra.mxu0 %v1271
    %1290 = vmatprep.subr.bf16.mxu0 0
    %1291 = vmatpush1.bf16.msra.mxu0 %v1272
    %1292 = vmatprep.subr.bf16.mxu0 0
    %1293 = vmatpush1.bf16.msra.mxu0 %v1273
    %1294 = vmatprep.subr.bf16.mxu0 0
    %1295 = vmatpush1.bf16.msra.mxu0 %v1274
    %1296 = vmatprep.subr.bf16.mxu0 0
    %1297 = vmatpush1.bf16.msra.mxu0 %v1275
    %1298 = vmatprep.subr.bf16.mxu0 0
    %1299 = vmatpush1.bf16.msra.mxu0 %v1276
    %1300 = vmatprep.subr.bf16.mxu0 0
    %1301 = vmatpush1.bf16.msra.mxu0 %v1277
    %1302 = vmatprep.subr.bf16.mxu0 0
    %1303 = vmatpush1.bf16.msra.mxu0 0
    %1304 = vmatprep.subr.bf16.mxu0 0
    %1305 = vmatpush1.bf16.msra.mxu0 0
    %1306 = vmatprep.subr.bf16.mxu0 0
    %1307 = vmatpush1.bf16.msra.mxu0 0
    %1308 = vmatprep.subr.bf16.mxu0 0
    %1309 = vmatpush1.bf16.msra.mxu0 0
    %1310 = vmatprep.subr.bf16.mxu0 0
    %1311 = vmatpush1.bf16.msra.mxu0 0
    %1312 = vmatprep.subr.bf16.mxu0 0
    %1313 = vmatpush1.bf16.msra.mxu0 0
    %1314 = vmatprep.subr.bf16.mxu0 0
    %1315 = vmatpush1.bf16.msra.mxu0 0
    %1316 = vmatprep.subr.bf16.mxu0 0
    %1317 = vmatpush1.bf16.msra.mxu0 0
    %1318 = vmatprep.mubr.bf16.mxu0 0
    %1319 = vmatmul.mubr.bf16.gmra.mrb[0].mxu0 %v1207
    %v1320 = vpop.f32.mrb[0].mxu0
    %v1321 = vadd.f32 %v1236, %v1320
    %v1322 = vpop.f32.mrb[0].mxu0
    %v1323 = vpop.f32.mrb[0].mxu0
    %v1324 = vadd.f32 %v1236, %v1323
    %v1325 = vpop.f32.mrb[0].mxu0
    %1326 = vmatprep.mubr.bf16.mxu0 0
    %1327 = vmatmul.mubr.bf16.gmra.mrb[0].mxu0 %v1208
    %v1328 = vpop.f32.mrb[0].mxu0
    %v1329 = vadd.f32 %v1236, %v1328
    %v1330 = vpop.f32.mrb[0].mxu0
    %v1331 = vpop.f32.mrb[0].mxu0
    %v1332 = vadd.f32 %v1236, %v1331
    %v1333 = vpop.f32.mrb[0].mxu0
    %1334 = vmatprep.mubr.bf16.mxu0 0
    %1335 = vmatmul.mubr.bf16.gmra.mrb[0].mxu0 %v1209
    %v1336 = vpop.f32.mrb[0].mxu0
    %v1337 = vadd.f32 %v1236, %v1336
    %v1338 = vpop.f32.mrb[0].mxu0
    %v1339 = vpop.f32.mrb[0].mxu0
    %v1340 = vadd.f32 %v1236, %v1339
    %v1341 = vpop.f32.mrb[0].mxu0
    %1342 = vmatprep.mubr.bf16.mxu0 0
    %1343 = vmatmul.mubr.bf16.gmra.mrb[0].mxu0 %v1210
    %v1344 = vpop.f32.mrb[0].mxu0
    %v1345 = vadd.f32 %v1236, %v1344
    %v1346 = vpop.f32.mrb[0].mxu0
    %v1347 = vpop.f32.mrb[0].mxu0
    %v1348 = vadd.f32 %v1236, %v1347
    %v1349 = vpop.f32.mrb[0].mxu0
    %1350 = vmatprep.mubr.bf16.mxu0 0
    %1351 = vmatmul.mubr.bf16.gmra.mrb[0].mxu0 %v1211
    %v1352 = vpop.f32.mrb[0].mxu0
    %v1353 = vadd.f32 %v1236, %v1352
    %v1354 = vpop.f32.mrb[0].mxu0
    %v1355 = vpop.f32.mrb[0].mxu0
    %v1356 = vadd.f32 %v1236, %v1355
    %v1357 = vpop.f32.mrb[0].mxu0
    %1358 = vmatprep.mubr.bf16.mxu0 0
    %1359 = vmatmul.mubr.bf16.gmra.mrb[0].mxu0 %v1212
    %v1360 = vpop.f32.mrb[0].mxu0
    %v1361 = vadd.f32 %v1236, %v1360
    %v1362 = vpop.f32.mrb[0].mxu0
    %v1363 = vpop.f32.mrb[0].mxu0
    %v1364 = vadd.f32 %v1236, %v1363
    %v1365 = vpop.f32.mrb[0].mxu0
    %1366 = vmatprep.mubr.bf16.mxu0 0
    %1367 = vmatmul.mubr.bf16.gmra.mrb[0].mxu0 %v1213
    %v1368 = vpop.f32.mrb[0].mxu0
    %v1369 = vadd.f32 %v1236, %v1368
    %v1370 = vpop.f32.mrb[0].mxu0
    %v1371 = vpop.f32.mrb[0].mxu0
    %v1372 = vadd.f32 %v1236, %v1371
    %v1373 = vpop.f32.mrb[0].mxu0
    %1374 = vmatprep.mubr.bf16.mxu0 0
    %1375 = vmatmul.mubr.bf16.gmra.mrb[0].mxu0 %v1214
    %v1376 = vpop.f32.mrb[0].mxu0
    %v1377 = vadd.f32 %v1236, %v1376
    %v1378 = vpop.f32.mrb[0].mxu0
    %v1379 = vpop.f32.mrb[0].mxu0
    %v1380 = vadd.f32 %v1236, %v1379
    %v1381 = vpop.f32.mrb[0].mxu0
    %1382 = vdwg.mxu0
    %v1383 = vld [vmem:[%s1] sm:$0xff]
    %v1384 = vld [vmem:[%s1 + $0x8] sm:$0xff]
    %v1385 = vld [vmem:[%s1 + $0x10] sm:$0xff]
    %v1386 = vld [vmem:[%s1 + $0x18] sm:$0xff]
    %v1387 = vld [vmem:[%s1 + $0x20] sm:$0xff]
    %v1388 = vld [vmem:[%s1 + $0x28] sm:$0xff]
    %v1389 = vld [vmem:[%s1 + $0x30] sm:$0xff]
    %v1390 = vld [vmem:[%s1 + $0x38] sm:$0xff]
    %v1391 = vld [vmem:[%s1 + $0x40] sm:$0xff]
    %v1392 = vld [vmem:[%s1 + $0x48] sm:$0xff]
    %v1393 = vld [vmem:[%s1 + $0x50] sm:$0xff]
    %v1394 = vld [vmem:[%s1 + $0x58] sm:$0xff]
    %v1395 = vld [vmem:[%s1 + $0x60] sm:$0xff]
    %v1396 = vld [vmem:[%s1 + $0x68] sm:$0xff]
    %v1397 = vld [vmem:[%s1 + $0x70] sm:$0xff]
    %v1398 = vld [vmem:[%s1 + $0x78] sm:$0xff]
    %v1399 = vmul.f32 %v1321, 0.5
    %v1400 = vmul.f32 %v1324, 0.5
    %v1401 = vmul.f32 %v1329, 0.5
    %v1402 = vmul.f32 %v1332, 0.5
    %v1403 = vmul.f32 %v1337, 0.5
    %v1404 = vmul.f32 %v1340, 0.5
    %v1405 = vmul.f32 %v1345, 0.5
    %v1406 = vmul.f32 %v1348, 0.5
    %v1407 = vmul.f32 %v1353, 0.5
    %v1408 = vmul.f32 %v1356, 0.5
    %v1409 = vmul.f32 %v1361, 0.5
    %v1410 = vmul.f32 %v1364, 0.5
    %v1411 = vmul.f32 %v1369, 0.5
    %v1412 = vmul.f32 %v1372, 0.5
    %v1413 = vmul.f32 %v1377, 0.5
    %v1414 = vmul.f32 %v1380, 0.5
    %v1415 = vmul.f32 %v1399, 1.442695
    %v1416 = vpow.pop %v1415
    %v1417 = vmul.f32 %v1400, 1.442695
    %v1418 = vpow.pop %v1417
    %v1419 = vmul.f32 %v1401, 1.442695
    %v1420 = vpow.pop %v1419
    %v1421 = vmul.f32 %v1402, 1.442695
    %v1422 = vpow.pop %v1421
    %v1423 = vmul.f32 %v1403, 1.442695
    %v1424 = vpow.pop %v1423
    %v1425 = vmul.f32 %v1404, 1.442695
    %v1426 = vpow.pop %v1425
    %v1427 = vmul.f32 %v1405, 1.442695
    %v1428 = vpow.pop %v1427
    %v1429 = vmul.f32 %v1406, 1.442695
    %v1430 = vpow.pop %v1429
    %v1431 = vmul.f32 %v1407, 1.442695
    %v1432 = vpow.pop %v1431
    %v1433 = vmul.f32 %v1408, 1.442695
    %v1434 = vpow.pop %v1433
    %v1435 = vmul.f32 %v1409, 1.442695
    %v1436 = vpow.pop %v1435
    %v1437 = vmul.f32 %v1410, 1.442695
    %v1438 = vpow.pop %v1437
    %v1439 = vmul.f32 %v1411, 1.442695
    %v1440 = vpow.pop %v1439
    %v1441 = vmul.f32 %v1412, 1.442695
    %v1442 = vpow.pop %v1441
    %v1443 = vmul.f32 %v1413, 1.442695
    %v1444 = vpow.pop %v1443
    %v1445 = vmul.f32 %v1414, 1.442695
    %v1446 = vpow.pop %v1445
    %1463 = vrot.lane.b32.xlu0 %v1416, 112
    %v1464 = vpop.permute.xlu0 %1463
    %1465 = vrot.lane.b32.xlu0 %v1418, 112
    %v1466 = vpop.permute.xlu0 %1465
    %1467 = vrot.lane.b32.xlu0 %v1420, 112
    %v1468 = vpop.permute.xlu0 %1467
    %1469 = vrot.lane.b32.xlu0 %v1422, 112
    %v1470 = vpop.permute.xlu0 %1469
    %1471 = vrot.lane.b32.xlu0 %v1424, 112
    %v1472 = vpop.permute.xlu0 %1471
    %1473 = vrot.lane.b32.xlu0 %v1426, 112
    %v1474 = vpop.permute.xlu0 %1473
    %1475 = vrot.lane.b32.xlu0 %v1428, 112
    %v1476 = vpop.permute.xlu0 %1475
    %1477 = vrot.lane.b32.xlu0 %v1430, 112
    %v1478 = vpop.permute.xlu0 %1477
    %1479 = vrot.lane.b32.xlu0 %v1432, 112
    %v1480 = vpop.permute.xlu0 %1479
    %1481 = vrot.lane.b32.xlu0 %v1434, 112
    %v1482 = vpop.permute.xlu0 %1481
    %1483 = vrot.lane.b32.xlu0 %v1436, 112
    %v1484 = vpop.permute.xlu0 %1483
    %1485 = vrot.lane.b32.xlu0 %v1438, 112
    %v1486 = vpop.permute.xlu0 %1485
    %1487 = vrot.lane.b32.xlu0 %v1440, 112
    %v1488 = vpop.permute.xlu0 %1487
    %1489 = vrot.lane.b32.xlu0 %v1442, 112
    %v1490 = vpop.permute.xlu0 %1489
    %1491 = vrot.lane.b32.xlu0 %v1444, 112
    %v1492 = vpop.permute.xlu0 %1491
    %1493 = vrot.lane.b32.xlu0 %v1446, 112
    %v1494 = vpop.permute.xlu0 %1493
    %v1511 = vmul.f32 %v1383, %v1464
    %v1512 = vmul.f32 %v1384, %v1466
    %v1513 = vmul.f32 %v1385, %v1468
    %v1514 = vmul.f32 %v1386, %v1470
    %v1515 = vmul.f32 %v1387, %v1472
    %v1516 = vmul.f32 %v1388, %v1474
    %v1517 = vmul.f32 %v1389, %v1476
    %v1518 = vmul.f32 %v1390, %v1478
    %v1519 = vmul.f32 %v1391, %v1480
    %v1520 = vmul.f32 %v1392, %v1482
    %v1521 = vmul.f32 %v1393, %v1484
    %v1522 = vmul.f32 %v1394, %v1486
    %v1523 = vmul.f32 %v1395, %v1488
    %v1524 = vmul.f32 %v1396, %v1490
    %v1525 = vmul.f32 %v1397, %v1492
    %v1526 = vmul.f32 %v1398, %v1494
    %v1527 = vadd.f32 %v1321, %v1511
    %v1528 = vadd.f32 %v1324, %v1512
    %v1529 = vadd.f32 %v1329, %v1513
    %v1530 = vadd.f32 %v1332, %v1514
    %v1531 = vadd.f32 %v1337, %v1515
    %v1532 = vadd.f32 %v1340, %v1516
    %v1533 = vadd.f32 %v1345, %v1517
    %v1534 = vadd.f32 %v1348, %v1518
    %v1535 = vadd.f32 %v1353, %v1519
    %v1536 = vadd.f32 %v1356, %v1520
    %v1537 = vadd.f32 %v1361, %v1521
    %v1538 = vadd.f32 %v1364, %v1522
    %v1539 = vadd.f32 %v1369, %v1523
    %v1540 = vadd.f32 %v1372, %v1524
    %v1541 = vadd.f32 %v1377, %v1525
    %v1542 = vadd.f32 %v1380, %v1526
    %s1543 = sld [smem:[#allocation2 + $0x3]]
    %v1544 = vpack.c.bf16 %v1528, %v1527
    %v1545 = vpack.c.bf16 %v1530, %v1529
    %v1546 = vpack.c.bf16 %v1532, %v1531
    %v1547 = vpack.c.bf16 %v1534, %v1533
    %v1548 = vpack.c.bf16 %v1536, %v1535
    %v1549 = vpack.c.bf16 %v1538, %v1537
    %v1550 = vpack.c.bf16 %v1540, %v1539
    %v1551 = vpack.c.bf16 %v1542, %v1541
    %v1552 = vld [vmem:[%s11] sm:$0xf]
    %v1553 = vld [vmem:[%s11 + $0x4] sm:$0xf]
    %v1554 = vld [vmem:[%s12] sm:$0x1]
    %v1555 = vlaneseq
    %v1556 = vshrl.u32 %v1555, 7
    %v1557 = vsub.s32 0, %v1556
    %v1558 = vrot.slane %v1554, %v1557
    %v1561 = vunpack.c.l.b16 %v1552
    %v1562 = vunpack.c.l.b16 %v1553
    %v1563 = vpack.c.b16 %v1562, %v1561
    %vm1565 = vcmask 130048
    %v1567 = vsel %vm1565, %v1544, 0
    %v1570 = vsel %vm1565, %v1545, 0
    %v1573 = vsel %vm1565, %v1546, 0
    %v1576 = vsel %vm1565, %v1547, 0
    %v1579 = vsel %vm1565, %v1548, 0
    %v1582 = vsel %vm1565, %v1549, 0
    %v1585 = vsel %vm1565, %v1550, 0
    %v1588 = vsel %vm1565, %v1551, 0
    %1590 = vmatprep.subr.bf16.mxu0 0
    %1591 = vmatpush1.bf16.msra.mxu0 %v1563
    %1592 = vmatprep.subr.bf16.mxu0 0
    %1593 = vmatpush1.bf16.msra.mxu0 0
    %1594 = vmatprep.subr.bf16.mxu0 0
    %1595 = vmatpush1.bf16.msra.mxu0 0
    %1596 = vmatprep.subr.bf16.mxu0 0
    %1597 = vmatpush1.bf16.msra.mxu0 0
    %1598 = vmatprep.subr.bf16.mxu0 0
    %1599 = vmatpush1.bf16.msra.mxu0 0
    %1600 = vmatprep.subr.bf16.mxu0 0
    %1601 = vmatpush1.bf16.msra.mxu0 0
    %1602 = vmatprep.subr.bf16.mxu0 0
    %1603 = vmatpush1.bf16.msra.mxu0 0
    %1604 = vmatprep.subr.bf16.mxu0 0
    %1605 = vmatpush1.bf16.msra.mxu0 0
    %1606 = vmatprep.subr.bf16.mxu0 0
    %1607 = vmatpush1.bf16.msra.mxu0 0
    %1608 = vmatprep.subr.bf16.mxu0 0
    %1609 = vmatpush1.bf16.msra.mxu0 0
    %1610 = vmatprep.subr.bf16.mxu0 0
    %1611 = vmatpush1.bf16.msra.mxu0 0
    %1612 = vmatprep.subr.bf16.mxu0 0
    %1613 = vmatpush1.bf16.msra.mxu0 0
    %1614 = vmatprep.subr.bf16.mxu0 0
    %1615 = vmatpush1.bf16.msra.mxu0 0
    %1616 = vmatprep.subr.bf16.mxu0 0
    %1617 = vmatpush1.bf16.msra.mxu0 0
    %1618 = vmatprep.subr.bf16.mxu0 0
    %1619 = vmatpush1.bf16.msra.mxu0 0
    %1620 = vmatprep.subr.bf16.mxu0 0
    %1621 = vmatpush1.bf16.msra.mxu0 0
    %1622 = vmatprep.mubr.bf16.mxu0 0
    %1623 = vmatmul.mubr.bf16.gmra.mrb[0].mxu0 %v1567
    %v1624 = vpop.f32.mrb[0].mxu0
    %v1625 = vadd.f32 %v1558, %v1624
    %v1626 = vpop.f32.mrb[0].mxu0
    %v1627 = vpop.f32.mrb[0].mxu0
    %v1628 = vadd.f32 %v1558, %v1627
    %v1629 = vpop.f32.mrb[0].mxu0
    %1630 = vmatprep.mubr.bf16.mxu0 0
    %1631 = vmatmul.mubr.bf16.gmra.mrb[0].mxu0 %v1570
    %v1632 = vpop.f32.mrb[0].mxu0
    %v1633 = vadd.f32 %v1558, %v1632
    %v1634 = vpop.f32.mrb[0].mxu0
    %v1635 = vpop.f32.mrb[0].mxu0
    %v1636 = vadd.f32 %v1558, %v1635
    %v1637 = vpop.f32.mrb[0].mxu0
    %1638 = vmatprep.mubr.bf16.mxu0 0
    %1639 = vmatmul.mubr.bf16.gmra.mrb[0].mxu0 %v1573
    %v1640 = vpop.f32.mrb[0].mxu0
    %v1641 = vadd.f32 %v1558, %v1640
    %v1642 = vpop.f32.mrb[0].mxu0
    %v1643 = vpop.f32.mrb[0].mxu0
    %v1644 = vadd.f32 %v1558, %v1643
    %v1645 = vpop.f32.mrb[0].mxu0
    %1646 = vmatprep.mubr.bf16.mxu0 0
    %1647 = vmatmul.mubr.bf16.gmra.mrb[0].mxu0 %v1576
    %v1648 = vpop.f32.mrb[0].mxu0
    %v1649 = vadd.f32 %v1558, %v1648
    %v1650 = vpop.f32.mrb[0].mxu0
    %v1651 = vpop.f32.mrb[0].mxu0
    %v1652 = vadd.f32 %v1558, %v1651
    %v1653 = vpop.f32.mrb[0].mxu0
    %1654 = vmatprep.mubr.bf16.mxu0 0
    %1655 = vmatmul.mubr.bf16.gmra.mrb[0].mxu0 %v1579
    %v1656 = vpop.f32.mrb[0].mxu0
    %v1657 = vadd.f32 %v1558, %v1656
    %v1658 = vpop.f32.mrb[0].mxu0
    %v1659 = vpop.f32.mrb[0].mxu0
    %v1660 = vadd.f32 %v1558, %v1659
    %v1661 = vpop.f32.mrb[0].mxu0
    %1662 = vmatprep.mubr.bf16.mxu0 0
    %1663 = vmatmul.mubr.bf16.gmra.mrb[0].mxu0 %v1582
    %v1664 = vpop.f32.mrb[0].mxu0
    %v1665 = vadd.f32 %v1558, %v1664
    %v1666 = vpop.f32.mrb[0].mxu0
    %v1667 = vpop.f32.mrb[0].mxu0
    %v1668 = vadd.f32 %v1558, %v1667
    %v1669 = vpop.f32.mrb[0].mxu0
    %1670 = vmatprep.mubr.bf16.mxu0 0
    %1671 = vmatmul.mubr.bf16.gmra.mrb[0].mxu0 %v1585
    %v1672 = vpop.f32.mrb[0].mxu0
    %v1673 = vadd.f32 %v1558, %v1672
    %v1674 = vpop.f32.mrb[0].mxu0
    %v1675 = vpop.f32.mrb[0].mxu0
    %v1676 = vadd.f32 %v1558, %v1675
    %v1677 = vpop.f32.mrb[0].mxu0
    %1678 = vmatprep.mubr.bf16.mxu0 0
    %1679 = vmatmul.mubr.bf16.gmra.mrb[0].mxu0 %v1588
    %v1680 = vpop.f32.mrb[0].mxu0
    %v1681 = vadd.f32 %v1558, %v1680
    %v1682 = vpop.f32.mrb[0].mxu0
    %v1683 = vpop.f32.mrb[0].mxu0
    %v1684 = vadd.f32 %v1558, %v1683
    %v1685 = vpop.f32.mrb[0].mxu0
    %1686 = vdwg.mxu0
    %v1687 = vadd.f32 %v1625, %v1628
    %v1688 = vadd.f32 %v1687, %v1633
    %v1689 = vadd.f32 %v1688, %v1636
    %v1690 = vadd.f32 %v1689, %v1641
    %v1691 = vadd.f32 %v1690, %v1644
    %v1692 = vadd.f32 %v1691, %v1649
    %v1693 = vadd.f32 %v1692, %v1652
    %v1694 = vadd.f32 %v1693, %v1657
    %v1695 = vadd.f32 %v1694, %v1660
    %v1696 = vadd.f32 %v1695, %v1665
    %v1697 = vadd.f32 %v1696, %v1668
    %v1698 = vadd.f32 %v1697, %v1673
    %v1699 = vadd.f32 %v1698, %v1676
    %v1700 = vadd.f32 %v1699, %v1681
    %v1701 = vadd.f32 %v1700, %v1684
    %v1702 = vrot.slane %v1701, 4
    %v1703 = vadd.f32 %v1701, %v1702
    %v1704 = vrot.slane %v1703, 2
    %v1705 = vadd.f32 %v1703, %v1704
    %v1706 = vrot.slane %v1705, 1
    %v1707 = vadd.f32 %v1705, %v1706
    %v1708 = vmul.f32 %v1707, %v300
    %v1709 = vmul.f32 %v1625, %v1625
    %v1710 = vmul.f32 %v1628, %v1628
    %v1711 = vmul.f32 %v1633, %v1633
    %v1712 = vmul.f32 %v1636, %v1636
    %v1713 = vmul.f32 %v1641, %v1641
    %v1714 = vmul.f32 %v1644, %v1644
    %v1715 = vmul.f32 %v1649, %v1649
    %v1716 = vmul.f32 %v1652, %v1652
    %v1717 = vmul.f32 %v1657, %v1657
    %v1718 = vmul.f32 %v1660, %v1660
    %v1719 = vmul.f32 %v1665, %v1665
    %v1720 = vmul.f32 %v1668, %v1668
    %v1721 = vmul.f32 %v1673, %v1673
    %v1722 = vmul.f32 %v1676, %v1676
    %v1723 = vmul.f32 %v1681, %v1681
    %v1724 = vmul.f32 %v1684, %v1684
    %v1725 = vadd.f32 %v1709, %v1710
    %v1726 = vadd.f32 %v1725, %v1711
    %v1727 = vadd.f32 %v1726, %v1712
    %v1728 = vadd.f32 %v1727, %v1713
    %v1729 = vadd.f32 %v1728, %v1714
    %v1730 = vadd.f32 %v1729, %v1715
    %v1731 = vadd.f32 %v1730, %v1716
    %v1732 = vadd.f32 %v1731, %v1717
    %v1733 = vadd.f32 %v1732, %v1718
    %v1734 = vadd.f32 %v1733, %v1719
    %v1735 = vadd.f32 %v1734, %v1720
    %v1736 = vadd.f32 %v1735, %v1721
    %v1737 = vadd.f32 %v1736, %v1722
    %v1738 = vadd.f32 %v1737, %v1723
    %v1739 = vadd.f32 %v1738, %v1724
    %v1740 = vrot.slane %v1739, 4
    %v1741 = vadd.f32 %v1739, %v1740
    %v1742 = vrot.slane %v1741, 2
    %v1743 = vadd.f32 %v1741, %v1742
    %v1744 = vrot.slane %v1743, 1
    %v1745 = vadd.f32 %v1743, %v1744
    %v1746 = vmul.f32 %v1745, %v300
    %v1747 = vmul.f32 %v1708, %v1708
    %v1748 = vsub.f32 %v1746, %v1747
    %v1749 = vsub.f32 %v1625, %v1708
    %v1750 = vsub.f32 %v1628, %v1708
    %v1751 = vsub.f32 %v1633, %v1708
    %v1752 = vsub.f32 %v1636, %v1708
    %v1753 = vsub.f32 %v1641, %v1708
    %v1754 = vsub.f32 %v1644, %v1708
    %v1755 = vsub.f32 %v1649, %v1708
    %v1756 = vsub.f32 %v1652, %v1708
    %v1757 = vsub.f32 %v1657, %v1708
    %v1758 = vsub.f32 %v1660, %v1708
    %v1759 = vsub.f32 %v1665, %v1708
    %v1760 = vsub.f32 %v1668, %v1708
    %v1761 = vsub.f32 %v1673, %v1708
    %v1762 = vsub.f32 %v1676, %v1708
    %v1763 = vsub.f32 %v1681, %v1708
    %v1764 = vsub.f32 %v1684, %v1708
    %v1765 = vadd.f32 %v1748, 1e-05
    %v1766 = vrsqrt.pop %v1765
    %v1767 = vmul.f32 %v1749, %v1766
    %v1768 = vmul.f32 %v1750, %v1766
    %v1769 = vmul.f32 %v1751, %v1766
    %v1770 = vmul.f32 %v1752, %v1766
    %v1771 = vmul.f32 %v1753, %v1766
    %v1772 = vmul.f32 %v1754, %v1766
    %v1773 = vmul.f32 %v1755, %v1766
    %v1774 = vmul.f32 %v1756, %v1766
    %v1775 = vmul.f32 %v1757, %v1766
    %v1776 = vmul.f32 %v1758, %v1766
    %v1777 = vmul.f32 %v1759, %v1766
    %v1778 = vmul.f32 %v1760, %v1766
    %v1779 = vmul.f32 %v1761, %v1766
    %v1780 = vmul.f32 %v1762, %v1766
    %v1781 = vmul.f32 %v1763, %v1766
    %v1782 = vmul.f32 %v1764, %v1766
    %v1783 = vld [vmem:[%s12 + $0x1] sm:$0x1]
    %v1784 = vlaneseq
    %v1785 = vshrl.u32 %v1784, 7
    %v1786 = vsub.s32 0, %v1785
    %v1787 = vrot.slane %v1783, %v1786
    %v1788 = vmul.f32 %v1767, %v1787
    %v1789 = vmul.f32 %v1768, %v1787
    %v1790 = vmul.f32 %v1769, %v1787
    %v1791 = vmul.f32 %v1770, %v1787
    %v1792 = vmul.f32 %v1771, %v1787
    %v1793 = vmul.f32 %v1772, %v1787
    %v1794 = vmul.f32 %v1773, %v1787
    %v1795 = vmul.f32 %v1774, %v1787
    %v1796 = vmul.f32 %v1775, %v1787
    %v1797 = vmul.f32 %v1776, %v1787
    %v1798 = vmul.f32 %v1777, %v1787
    %v1799 = vmul.f32 %v1778, %v1787
    %v1800 = vmul.f32 %v1779, %v1787
    %v1801 = vmul.f32 %v1780, %v1787
    %v1802 = vmul.f32 %v1781, %v1787
    %v1803 = vmul.f32 %v1782, %v1787
    %v1804 = vld [vmem:[%s12 + $0x2] sm:$0x1]
    %v1805 = vlaneseq
    %v1806 = vshrl.u32 %v1805, 7
    %v1807 = vsub.s32 0, %v1806
    %v1808 = vrot.slane %v1804, %v1807
    %v1809 = vadd.f32 %v1788, %v1808
    %v1810 = vadd.f32 %v1789, %v1808
    %v1811 = vadd.f32 %v1790, %v1808
    %v1812 = vadd.f32 %v1791, %v1808
    %v1813 = vadd.f32 %v1792, %v1808
    %v1814 = vadd.f32 %v1793, %v1808
    %v1815 = vadd.f32 %v1794, %v1808
    %v1816 = vadd.f32 %v1795, %v1808
    %v1817 = vadd.f32 %v1796, %v1808
    %v1818 = vadd.f32 %v1797, %v1808
    %v1819 = vadd.f32 %v1798, %v1808
    %v1820 = vadd.f32 %v1799, %v1808
    %v1821 = vadd.f32 %v1800, %v1808
    %v1822 = vadd.f32 %v1801, %v1808
    %v1823 = vadd.f32 %v1802, %v1808
    %v1824 = vadd.f32 %v1803, %v1808
    %vm1825 = vcmp.ge.f32.partialorder %v1809, 0.0
    %vm1826 = vcmp.ge.f32.partialorder %v1810, 0.0
    %vm1827 = vcmp.ge.f32.partialorder %v1811, 0.0
    %vm1828 = vcmp.ge.f32.partialorder %v1812, 0.0
    %vm1829 = vcmp.ge.f32.partialorder %v1813, 0.0
    %vm1830 = vcmp.ge.f32.partialorder %v1814, 0.0
    %vm1831 = vcmp.ge.f32.partialorder %v1815, 0.0
    %vm1832 = vcmp.ge.f32.partialorder %v1816, 0.0
    %vm1833 = vcmp.ge.f32.partialorder %v1817, 0.0
    %vm1834 = vcmp.ge.f32.partialorder %v1818, 0.0
    %vm1835 = vcmp.ge.f32.partialorder %v1819, 0.0
    %vm1836 = vcmp.ge.f32.partialorder %v1820, 0.0
    %vm1837 = vcmp.ge.f32.partialorder %v1821, 0.0
    %vm1838 = vcmp.ge.f32.partialorder %v1822, 0.0
    %vm1839 = vcmp.ge.f32.partialorder %v1823, 0.0
    %vm1840 = vcmp.ge.f32.partialorder %v1824, 0.0
    %v1841 = vstv %s1543
    %v1842 = vmul.f32 %v1841, %v1809
    %v1843 = vmul.f32 %v1841, %v1810
    %v1844 = vmul.f32 %v1841, %v1811
    %v1845 = vmul.f32 %v1841, %v1812
    %v1846 = vmul.f32 %v1841, %v1813
    %v1847 = vmul.f32 %v1841, %v1814
    %v1848 = vmul.f32 %v1841, %v1815
    %v1849 = vmul.f32 %v1841, %v1816
    %v1850 = vmul.f32 %v1841, %v1817
    %v1851 = vmul.f32 %v1841, %v1818
    %v1852 = vmul.f32 %v1841, %v1819
    %v1853 = vmul.f32 %v1841, %v1820
    %v1854 = vmul.f32 %v1841, %v1821
    %v1855 = vmul.f32 %v1841, %v1822
    %v1856 = vmul.f32 %v1841, %v1823
    %v1857 = vmul.f32 %v1841, %v1824
    %v1858 = vsel %vm1825, %v1809, %v1842
    %v1859 = vsel %vm1826, %v1810, %v1843
    %v1860 = vsel %vm1827, %v1811, %v1844
    %v1861 = vsel %vm1828, %v1812, %v1845
    %v1862 = vsel %vm1829, %v1813, %v1846
    %v1863 = vsel %vm1830, %v1814, %v1847
    %v1864 = vsel %vm1831, %v1815, %v1848
    %v1865 = vsel %vm1832, %v1816, %v1849
    %v1866 = vsel %vm1833, %v1817, %v1850
    %v1867 = vsel %vm1834, %v1818, %v1851
    %v1868 = vsel %vm1835, %v1819, %v1852
    %v1869 = vsel %vm1836, %v1820, %v1853
    %v1870 = vsel %vm1837, %v1821, %v1854
    %v1871 = vsel %vm1838, %v1822, %v1855
    %v1872 = vsel %vm1839, %v1823, %v1856
    %v1873 = vsel %vm1840, %v1824, %v1857
    %s1874 = sld [smem:[#allocation2 + $0x4]]
    %v1875 = vpack.c.bf16 %v1859, %v1858
    %v1876 = vpack.c.bf16 %v1861, %v1860
    %v1877 = vpack.c.bf16 %v1863, %v1862
    %v1878 = vpack.c.bf16 %v1865, %v1864
    %v1879 = vpack.c.bf16 %v1867, %v1866
    %v1880 = vpack.c.bf16 %v1869, %v1868
    %v1881 = vpack.c.bf16 %v1871, %v1870
    %v1882 = vpack.c.bf16 %v1873, %v1872
    %v1883 = vld [vmem:[%s13] sm:$0xf]
    %v1884 = vld [vmem:[%s13 + $0x4] sm:$0xf]
    %v1885 = vld [vmem:[%s13 + $0x8] sm:$0xf]
    %v1886 = vld [vmem:[%s13 + $0xc] sm:$0xf]
    %v1887 = vld [vmem:[%s13 + $0x10] sm:$0xf]
    %v1888 = vld [vmem:[%s13 + $0x14] sm:$0xf]
    %v1889 = vld [vmem:[%s13 + $0x18] sm:$0xf]
    %v1890 = vld [vmem:[%s13 + $0x1c] sm:$0xf]
    %v1891 = vld [vmem:[%s13 + $0x20] sm:$0xf]
    %v1892 = vld [vmem:[%s13 + $0x24] sm:$0xf]
    %v1893 = vld [vmem:[%s13 + $0x28] sm:$0xf]
    %v1894 = vld [vmem:[%s13 + $0x2c] sm:$0xf]
    %v1895 = vld [vmem:[%s13 + $0x30] sm:$0xf]
    %v1896 = vld [vmem:[%s13 + $0x34] sm:$0xf]
    %v1897 = vld [vmem:[%s13 + $0x38] sm:$0xf]
    %v1898 = vld [vmem:[%s13 + $0x3c] sm:$0xf]
    %v1899 = vld [vmem:[%s14] sm:$0x1]
    %v1900 = vlaneseq
    %v1901 = vshrl.u32 %v1900, 7
    %v1902 = vsub.s32 0, %v1901
    %v1903 = vrot.slane %v1899, %v1902
    %v1920 = vunpack.c.l.b16 %v1883
    %v1921 = vunpack.c.l.b16 %v1884
    %v1922 = vunpack.c.l.b16 %v1885
    %v1923 = vunpack.c.l.b16 %v1886
    %v1924 = vunpack.c.l.b16 %v1887
    %v1925 = vunpack.c.l.b16 %v1888
    %v1926 = vunpack.c.l.b16 %v1889
    %v1927 = vunpack.c.l.b16 %v1890
    %v1928 = vunpack.c.l.b16 %v1891
    %v1929 = vunpack.c.l.b16 %v1892
    %v1930 = vunpack.c.l.b16 %v1893
    %v1931 = vunpack.c.l.b16 %v1894
    %v1932 = vunpack.c.l.b16 %v1895
    %v1933 = vunpack.c.l.b16 %v1896
    %v1934 = vunpack.c.l.b16 %v1897
    %v1935 = vunpack.c.l.b16 %v1898
    %v1936 = vpack.c.b16 %v1921, %v1920
    %v1937 = vpack.c.b16 %v1923, %v1922
    %v1938 = vpack.c.b16 %v1925, %v1924
    %v1939 = vpack.c.b16 %v1927, %v1926
    %v1940 = vpack.c.b16 %v1929, %v1928
    %v1941 = vpack.c.b16 %v1931, %v1930
    %v1942 = vpack.c.b16 %v1933, %v1932
    %v1943 = vpack.c.b16 %v1935, %v1934
    %1952 = vmatprep.subr.bf16.mxu0 0
    %1953 = vmatpush1.bf16.msra.mxu0 %v1936
    %1954 = vmatprep.subr.bf16.mxu0 0
    %1955 = vmatpush1.bf16.msra.mxu0 %v1937
    %1956 = vmatprep.subr.bf16.mxu0 0
    %1957 = vmatpush1.bf16.msra.mxu0 %v1938
    %1958 = vmatprep.subr.bf16.mxu0 0
    %1959 = vmatpush1.bf16.msra.mxu0 %v1939
    %1960 = vmatprep.subr.bf16.mxu0 0
    %1961 = vmatpush1.bf16.msra.mxu0 %v1940
    %1962 = vmatprep.subr.bf16.mxu0 0
    %1963 = vmatpush1.bf16.msra.mxu0 %v1941
    %1964 = vmatprep.subr.bf16.mxu0 0
    %1965 = vmatpush1.bf16.msra.mxu0 %v1942
    %1966 = vmatprep.subr.bf16.mxu0 0
    %1967 = vmatpush1.bf16.msra.mxu0 %v1943
    %1968 = vmatprep.subr.bf16.mxu0 0
    %1969 = vmatpush1.bf16.msra.mxu0 0
    %1970 = vmatprep.subr.bf16.mxu0 0
    %1971 = vmatpush1.bf16.msra.mxu0 0
    %1972 = vmatprep.subr.bf16.mxu0 0
    %1973 = vmatpush1.bf16.msra.mxu0 0
    %1974 = vmatprep.subr.bf16.mxu0 0
    %1975 = vmatpush1.bf16.msra.mxu0 0
    %1976 = vmatprep.subr.bf16.mxu0 0
    %1977 = vmatpush1.bf16.msra.mxu0 0
    %1978 = vmatprep.subr.bf16.mxu0 0
    %1979 = vmatpush1.bf16.msra.mxu0 0
    %1980 = vmatprep.subr.bf16.mxu0 0
    %1981 = vmatpush1.bf16.msra.mxu0 0
    %1982 = vmatprep.subr.bf16.mxu0 0
    %1983 = vmatpush1.bf16.msra.mxu0 0
    %1984 = vmatprep.mubr.bf16.mxu0 0
    %1985 = vmatmul.mubr.bf16.gmra.mrb[0].mxu0 %v1875
    %v1986 = vpop.f32.mrb[0].mxu0
    %v1987 = vadd.f32 %v1903, %v1986
    %v1988 = vpop.f32.mrb[0].mxu0
    %v1989 = vpop.f32.mrb[0].mxu0
    %v1990 = vadd.f32 %v1903, %v1989
    %v1991 = vpop.f32.mrb[0].mxu0
    %1992 = vmatprep.mubr.bf16.mxu0 0
    %1993 = vmatmul.mubr.bf16.gmra.mrb[0].mxu0 %v1876
    %v1994 = vpop.f32.mrb[0].mxu0
    %v1995 = vadd.f32 %v1903, %v1994
    %v1996 = vpop.f32.mrb[0].mxu0
    %v1997 = vpop.f32.mrb[0].mxu0
    %v1998 = vadd.f32 %v1903, %v1997
    %v1999 = vpop.f32.mrb[0].mxu0
    %2000 = vmatprep.mubr.bf16.mxu0 0
    %2001 = vmatmul.mubr.bf16.gmra.mrb[0].mxu0 %v1877
    %v2002 = vpop.f32.mrb[0].mxu0
    %v2003 = vadd.f32 %v1903, %v2002
    %v2004 = vpop.f32.mrb[0].mxu0
    %v2005 = vpop.f32.mrb[0].mxu0
    %v2006 = vadd.f32 %v1903, %v2005
    %v2007 = vpop.f32.mrb[0].mxu0
    %2008 = vmatprep.mubr.bf16.mxu0 0
    %2009 = vmatmul.mubr.bf16.gmra.mrb[0].mxu0 %v1878
    %v2010 = vpop.f32.mrb[0].mxu0
    %v2011 = vadd.f32 %v1903, %v2010
    %v2012 = vpop.f32.mrb[0].mxu0
    %v2013 = vpop.f32.mrb[0].mxu0
    %v2014 = vadd.f32 %v1903, %v2013
    %v2015 = vpop.f32.mrb[0].mxu0
    %2016 = vmatprep.mubr.bf16.mxu0 0
    %2017 = vmatmul.mubr.bf16.gmra.mrb[0].mxu0 %v1879
    %v2018 = vpop.f32.mrb[0].mxu0
    %v2019 = vadd.f32 %v1903, %v2018
    %v2020 = vpop.f32.mrb[0].mxu0
    %v2021 = vpop.f32.mrb[0].mxu0
    %v2022 = vadd.f32 %v1903, %v2021
    %v2023 = vpop.f32.mrb[0].mxu0
    %2024 = vmatprep.mubr.bf16.mxu0 0
    %2025 = vmatmul.mubr.bf16.gmra.mrb[0].mxu0 %v1880
    %v2026 = vpop.f32.mrb[0].mxu0
    %v2027 = vadd.f32 %v1903, %v2026
    %v2028 = vpop.f32.mrb[0].mxu0
    %v2029 = vpop.f32.mrb[0].mxu0
    %v2030 = vadd.f32 %v1903, %v2029
    %v2031 = vpop.f32.mrb[0].mxu0
    %2032 = vmatprep.mubr.bf16.mxu0 0
    %2033 = vmatmul.mubr.bf16.gmra.mrb[0].mxu0 %v1881
    %v2034 = vpop.f32.mrb[0].mxu0
    %v2035 = vadd.f32 %v1903, %v2034
    %v2036 = vpop.f32.mrb[0].mxu0
    %v2037 = vpop.f32.mrb[0].mxu0
    %v2038 = vadd.f32 %v1903, %v2037
    %v2039 = vpop.f32.mrb[0].mxu0
    %2040 = vmatprep.mubr.bf16.mxu0 0
    %2041 = vmatmul.mubr.bf16.gmra.mrb[0].mxu0 %v1882
    %v2042 = vpop.f32.mrb[0].mxu0
    %v2043 = vadd.f32 %v1903, %v2042
    %v2044 = vpop.f32.mrb[0].mxu0
    %v2045 = vpop.f32.mrb[0].mxu0
    %v2046 = vadd.f32 %v1903, %v2045
    %v2047 = vpop.f32.mrb[0].mxu0
    %2048 = vdwg.mxu0
    %v2049 = vsel %vm140, %v1987, 0.0
    %v2050 = vsel %vm140, %v1990, 0.0
    %v2051 = vadd.f32 %v2049, %v2050
    %v2052 = vsel %vm140, %v1995, 0.0
    %v2053 = vadd.f32 %v2051, %v2052
    %v2054 = vsel %vm140, %v1998, 0.0
    %v2055 = vadd.f32 %v2053, %v2054
    %v2056 = vsel %vm140, %v2003, 0.0
    %v2057 = vadd.f32 %v2055, %v2056
    %v2058 = vsel %vm140, %v2006, 0.0
    %v2059 = vadd.f32 %v2057, %v2058
    %v2060 = vsel %vm140, %v2011, 0.0
    %v2061 = vadd.f32 %v2059, %v2060
    %v2062 = vsel %vm140, %v2014, 0.0
    %v2063 = vadd.f32 %v2061, %v2062
    %v2064 = vsel %vm140, %v2019, 0.0
    %v2065 = vadd.f32 %v2063, %v2064
    %v2066 = vsel %vm140, %v2022, 0.0
    %v2067 = vadd.f32 %v2065, %v2066
    %v2068 = vsel %vm140, %v2027, 0.0
    %v2069 = vadd.f32 %v2067, %v2068
    %v2070 = vsel %vm140, %v2030, 0.0
    %v2071 = vadd.f32 %v2069, %v2070
    %v2072 = vsel %vm140, %v2035, 0.0
    %v2073 = vadd.f32 %v2071, %v2072
    %v2074 = vsel %vm140, %v2038, 0.0
    %v2075 = vadd.f32 %v2073, %v2074
    %v2076 = vsel %vm140, %v2043, 0.0
    %v2077 = vadd.f32 %v2075, %v2076
    %v2078 = vsel %vm140, %v2046, 0.0
    %v2079 = vadd.f32 %v2077, %v2078
    %v2080 = vrot.slane %v2079, 4
    %v2081 = vadd.f32 %v2079, %v2080
    %v2082 = vrot.slane %v2081, 2
    %v2083 = vadd.f32 %v2081, %v2082
    %v2084 = vrot.slane %v2083, 1
    %v2085 = vadd.f32 %v2083, %v2084
    %v2086 = vmul.f32 %v2085, %v300
    %v2087 = vmul.f32 %v1987, %v1987
    %v2088 = vmul.f32 %v1990, %v1990
    %v2089 = vmul.f32 %v1995, %v1995
    %v2090 = vmul.f32 %v1998, %v1998
    %v2091 = vmul.f32 %v2003, %v2003
    %v2092 = vmul.f32 %v2006, %v2006
    %v2093 = vmul.f32 %v2011, %v2011
    %v2094 = vmul.f32 %v2014, %v2014
    %v2095 = vmul.f32 %v2019, %v2019
    %v2096 = vmul.f32 %v2022, %v2022
    %v2097 = vmul.f32 %v2027, %v2027
    %v2098 = vmul.f32 %v2030, %v2030
    %v2099 = vmul.f32 %v2035, %v2035
    %v2100 = vmul.f32 %v2038, %v2038
    %v2101 = vmul.f32 %v2043, %v2043
    %v2102 = vmul.f32 %v2046, %v2046
    %v2103 = vsel %vm140, %v2087, 0.0
    %v2104 = vsel %vm140, %v2088, 0.0
    %v2105 = vadd.f32 %v2103, %v2104
    %v2106 = vsel %vm140, %v2089, 0.0
    %v2107 = vadd.f32 %v2105, %v2106
    %v2108 = vsel %vm140, %v2090, 0.0
    %v2109 = vadd.f32 %v2107, %v2108
    %v2110 = vsel %vm140, %v2091, 0.0
    %v2111 = vadd.f32 %v2109, %v2110
    %v2112 = vsel %vm140, %v2092, 0.0
    %v2113 = vadd.f32 %v2111, %v2112
    %v2114 = vsel %vm140, %v2093, 0.0
    %v2115 = vadd.f32 %v2113, %v2114
    %v2116 = vsel %vm140, %v2094, 0.0
    %v2117 = vadd.f32 %v2115, %v2116
    %v2118 = vsel %vm140, %v2095, 0.0
    %v2119 = vadd.f32 %v2117, %v2118
    %v2120 = vsel %vm140, %v2096, 0.0
    %v2121 = vadd.f32 %v2119, %v2120
    %v2122 = vsel %vm140, %v2097, 0.0
    %v2123 = vadd.f32 %v2121, %v2122
    %v2124 = vsel %vm140, %v2098, 0.0
    %v2125 = vadd.f32 %v2123, %v2124
    %v2126 = vsel %vm140, %v2099, 0.0
    %v2127 = vadd.f32 %v2125, %v2126
    %v2128 = vsel %vm140, %v2100, 0.0
    %v2129 = vadd.f32 %v2127, %v2128
    %v2130 = vsel %vm140, %v2101, 0.0
    %v2131 = vadd.f32 %v2129, %v2130
    %v2132 = vsel %vm140, %v2102, 0.0
    %v2133 = vadd.f32 %v2131, %v2132
    %v2134 = vrot.slane %v2133, 4
    %v2135 = vadd.f32 %v2133, %v2134
    %v2136 = vrot.slane %v2135, 2
    %v2137 = vadd.f32 %v2135, %v2136
    %v2138 = vrot.slane %v2137, 1
    %v2139 = vadd.f32 %v2137, %v2138
    %v2140 = vmul.f32 %v2139, %v300
    %v2141 = vmul.f32 %v2086, %v2086
    %v2142 = vsub.f32 %v2140, %v2141
    %v2143 = vsub.f32 %v1987, %v2086
    %v2144 = vsub.f32 %v1990, %v2086
    %v2145 = vsub.f32 %v1995, %v2086
    %v2146 = vsub.f32 %v1998, %v2086
    %v2147 = vsub.f32 %v2003, %v2086
    %v2148 = vsub.f32 %v2006, %v2086
    %v2149 = vsub.f32 %v2011, %v2086
    %v2150 = vsub.f32 %v2014, %v2086
    %v2151 = vsub.f32 %v2019, %v2086
    %v2152 = vsub.f32 %v2022, %v2086
    %v2153 = vsub.f32 %v2027, %v2086
    %v2154 = vsub.f32 %v2030, %v2086
    %v2155 = vsub.f32 %v2035, %v2086
    %v2156 = vsub.f32 %v2038, %v2086
    %v2157 = vsub.f32 %v2043, %v2086
    %v2158 = vsub.f32 %v2046, %v2086
    %v2159 = vadd.f32 %v2142, 1e-05
    %v2160 = vrsqrt.pop %v2159
    %v2161 = vmul.f32 %v2143, %v2160
    %v2162 = vmul.f32 %v2144, %v2160
    %v2163 = vmul.f32 %v2145, %v2160
    %v2164 = vmul.f32 %v2146, %v2160
    %v2165 = vmul.f32 %v2147, %v2160
    %v2166 = vmul.f32 %v2148, %v2160
    %v2167 = vmul.f32 %v2149, %v2160
    %v2168 = vmul.f32 %v2150, %v2160
    %v2169 = vmul.f32 %v2151, %v2160
    %v2170 = vmul.f32 %v2152, %v2160
    %v2171 = vmul.f32 %v2153, %v2160
    %v2172 = vmul.f32 %v2154, %v2160
    %v2173 = vmul.f32 %v2155, %v2160
    %v2174 = vmul.f32 %v2156, %v2160
    %v2175 = vmul.f32 %v2157, %v2160
    %v2176 = vmul.f32 %v2158, %v2160
    %v2177 = vld [vmem:[%s14 + $0x1] sm:$0x1]
    %v2178 = vlaneseq
    %v2179 = vshrl.u32 %v2178, 7
    %v2180 = vsub.s32 0, %v2179
    %v2181 = vrot.slane %v2177, %v2180
    %v2182 = vmul.f32 %v2161, %v2181
    %v2183 = vmul.f32 %v2162, %v2181
    %v2184 = vmul.f32 %v2163, %v2181
    %v2185 = vmul.f32 %v2164, %v2181
    %v2186 = vmul.f32 %v2165, %v2181
    %v2187 = vmul.f32 %v2166, %v2181
    %v2188 = vmul.f32 %v2167, %v2181
    %v2189 = vmul.f32 %v2168, %v2181
    %v2190 = vmul.f32 %v2169, %v2181
    %v2191 = vmul.f32 %v2170, %v2181
    %v2192 = vmul.f32 %v2171, %v2181
    %v2193 = vmul.f32 %v2172, %v2181
    %v2194 = vmul.f32 %v2173, %v2181
    %v2195 = vmul.f32 %v2174, %v2181
    %v2196 = vmul.f32 %v2175, %v2181
    %v2197 = vmul.f32 %v2176, %v2181
    %v2198 = vld [vmem:[%s14 + $0x2] sm:$0x1]
    %v2199 = vlaneseq
    %v2200 = vshrl.u32 %v2199, 7
    %v2201 = vsub.s32 0, %v2200
    %v2202 = vrot.slane %v2198, %v2201
    %v2203 = vadd.f32 %v2182, %v2202
    %v2204 = vadd.f32 %v2183, %v2202
    %v2205 = vadd.f32 %v2184, %v2202
    %v2206 = vadd.f32 %v2185, %v2202
    %v2207 = vadd.f32 %v2186, %v2202
    %v2208 = vadd.f32 %v2187, %v2202
    %v2209 = vadd.f32 %v2188, %v2202
    %v2210 = vadd.f32 %v2189, %v2202
    %v2211 = vadd.f32 %v2190, %v2202
    %v2212 = vadd.f32 %v2191, %v2202
    %v2213 = vadd.f32 %v2192, %v2202
    %v2214 = vadd.f32 %v2193, %v2202
    %v2215 = vadd.f32 %v2194, %v2202
    %v2216 = vadd.f32 %v2195, %v2202
    %v2217 = vadd.f32 %v2196, %v2202
    %v2218 = vadd.f32 %v2197, %v2202
    %vm2219 = vcmp.ge.f32.partialorder %v2203, 0.0
    %vm2220 = vcmp.ge.f32.partialorder %v2204, 0.0
    %vm2221 = vcmp.ge.f32.partialorder %v2205, 0.0
    %vm2222 = vcmp.ge.f32.partialorder %v2206, 0.0
    %vm2223 = vcmp.ge.f32.partialorder %v2207, 0.0
    %vm2224 = vcmp.ge.f32.partialorder %v2208, 0.0
    %vm2225 = vcmp.ge.f32.partialorder %v2209, 0.0
    %vm2226 = vcmp.ge.f32.partialorder %v2210, 0.0
    %vm2227 = vcmp.ge.f32.partialorder %v2211, 0.0
    %vm2228 = vcmp.ge.f32.partialorder %v2212, 0.0
    %vm2229 = vcmp.ge.f32.partialorder %v2213, 0.0
    %vm2230 = vcmp.ge.f32.partialorder %v2214, 0.0
    %vm2231 = vcmp.ge.f32.partialorder %v2215, 0.0
    %vm2232 = vcmp.ge.f32.partialorder %v2216, 0.0
    %vm2233 = vcmp.ge.f32.partialorder %v2217, 0.0
    %vm2234 = vcmp.ge.f32.partialorder %v2218, 0.0
    %v2235 = vstv %s1874
    %v2236 = vmul.f32 %v2235, %v2203
    %v2237 = vmul.f32 %v2235, %v2204
    %v2238 = vmul.f32 %v2235, %v2205
    %v2239 = vmul.f32 %v2235, %v2206
    %v2240 = vmul.f32 %v2235, %v2207
    %v2241 = vmul.f32 %v2235, %v2208
    %v2242 = vmul.f32 %v2235, %v2209
    %v2243 = vmul.f32 %v2235, %v2210
    %v2244 = vmul.f32 %v2235, %v2211
    %v2245 = vmul.f32 %v2235, %v2212
    %v2246 = vmul.f32 %v2235, %v2213
    %v2247 = vmul.f32 %v2235, %v2214
    %v2248 = vmul.f32 %v2235, %v2215
    %v2249 = vmul.f32 %v2235, %v2216
    %v2250 = vmul.f32 %v2235, %v2217
    %v2251 = vmul.f32 %v2235, %v2218
    %v2252 = vsel %vm2219, %v2203, %v2236
    %v2253 = vsel %vm2220, %v2204, %v2237
    %v2254 = vsel %vm2221, %v2205, %v2238
    %v2255 = vsel %vm2222, %v2206, %v2239
    %v2256 = vsel %vm2223, %v2207, %v2240
    %v2257 = vsel %vm2224, %v2208, %v2241
    %v2258 = vsel %vm2225, %v2209, %v2242
    %v2259 = vsel %vm2226, %v2210, %v2243
    %v2260 = vsel %vm2227, %v2211, %v2244
    %v2261 = vsel %vm2228, %v2212, %v2245
    %v2262 = vsel %vm2229, %v2213, %v2246
    %v2263 = vsel %vm2230, %v2214, %v2247
    %v2264 = vsel %vm2231, %v2215, %v2248
    %v2265 = vsel %vm2232, %v2216, %v2249
    %v2266 = vsel %vm2233, %v2217, %v2250
    %v2267 = vsel %vm2234, %v2218, %v2251
    %s2268 = sld [smem:[#allocation2 + $0x5]]
    %v2269 = vpack.c.bf16 %v2253, %v2252
    %v2270 = vpack.c.bf16 %v2255, %v2254
    %v2271 = vpack.c.bf16 %v2257, %v2256
    %v2272 = vpack.c.bf16 %v2259, %v2258
    %v2273 = vpack.c.bf16 %v2261, %v2260
    %v2274 = vpack.c.bf16 %v2263, %v2262
    %v2275 = vpack.c.bf16 %v2265, %v2264
    %v2276 = vpack.c.bf16 %v2267, %v2266
    %v2277 = vld [vmem:[%s15] sm:$0xf]
    %v2278 = vld [vmem:[%s15 + $0x4] sm:$0xf]
    %v2279 = vld [vmem:[%s15 + $0x8] sm:$0xf]
    %v2280 = vld [vmem:[%s15 + $0xc] sm:$0xf]
    %v2281 = vld [vmem:[%s15 + $0x10] sm:$0xf]
    %v2282 = vld [vmem:[%s15 + $0x14] sm:$0xf]
    %v2283 = vld [vmem:[%s15 + $0x18] sm:$0xf]
    %v2284 = vld [vmem:[%s15 + $0x1c] sm:$0xf]
    %v2285 = vld [vmem:[%s16] sm:$0x1]
    %v2286 = vlaneseq
    %v2287 = vshrl.u32 %v2286, 7
    %v2288 = vsub.s32 0, %v2287
    %v2289 = vrot.slane %v2285, %v2288
    %v2298 = vunpack.c.l.b16 %v2277
    %v2299 = vunpack.c.l.b16 %v2278
    %v2300 = vunpack.c.l.b16 %v2279
    %v2301 = vunpack.c.l.b16 %v2280
    %v2302 = vunpack.c.l.b16 %v2281
    %v2303 = vunpack.c.l.b16 %v2282
    %v2304 = vunpack.c.l.b16 %v2283
    %v2305 = vunpack.c.l.b16 %v2284
    %v2306 = vpack.c.b16 %v2299, %v2298
    %v2307 = vpack.c.b16 %v2301, %v2300
    %v2308 = vpack.c.b16 %v2303, %v2302
    %v2309 = vpack.c.b16 %v2305, %v2304
    %v2315 = vsel %vm140, %v2269, 0
    %v2318 = vsel %vm140, %v2270, 0
    %v2321 = vsel %vm140, %v2271, 0
    %v2324 = vsel %vm140, %v2272, 0
    %v2327 = vsel %vm140, %v2273, 0
    %v2330 = vsel %vm140, %v2274, 0
    %v2333 = vsel %vm140, %v2275, 0
    %v2336 = vsel %vm140, %v2276, 0
    %2338 = vmatprep.subr.bf16.mxu0 0
    %2339 = vmatpush1.bf16.msra.mxu0 %v2306
    %2340 = vmatprep.subr.bf16.mxu0 0
    %2341 = vmatpush1.bf16.msra.mxu0 %v2307
    %2342 = vmatprep.subr.bf16.mxu0 0
    %2343 = vmatpush1.bf16.msra.mxu0 %v2308
    %2344 = vmatprep.subr.bf16.mxu0 0
    %2345 = vmatpush1.bf16.msra.mxu0 %v2309
    %2346 = vmatprep.subr.bf16.mxu0 0
    %2347 = vmatpush1.bf16.msra.mxu0 0
    %2348 = vmatprep.subr.bf16.mxu0 0
    %2349 = vmatpush1.bf16.msra.mxu0 0
    %2350 = vmatprep.subr.bf16.mxu0 0
    %2351 = vmatpush1.bf16.msra.mxu0 0
    %2352 = vmatprep.subr.bf16.mxu0 0
    %2353 = vmatpush1.bf16.msra.mxu0 0
    %2354 = vmatprep.subr.bf16.mxu0 0
    %2355 = vmatpush1.bf16.msra.mxu0 0
    %2356 = vmatprep.subr.bf16.mxu0 0
    %2357 = vmatpush1.bf16.msra.mxu0 0
    %2358 = vmatprep.subr.bf16.mxu0 0
    %2359 = vmatpush1.bf16.msra.mxu0 0
    %2360 = vmatprep.subr.bf16.mxu0 0
    %2361 = vmatpush1.bf16.msra.mxu0 0
    %2362 = vmatprep.subr.bf16.mxu0 0
    %2363 = vmatpush1.bf16.msra.mxu0 0
    %2364 = vmatprep.subr.bf16.mxu0 0
    %2365 = vmatpush1.bf16.msra.mxu0 0
    %2366 = vmatprep.subr.bf16.mxu0 0
    %2367 = vmatpush1.bf16.msra.mxu0 0
    %2368 = vmatprep.subr.bf16.mxu0 0
    %2369 = vmatpush1.bf16.msra.mxu0 0
    %2370 = vmatprep.mubr.bf16.mxu0 0
    %2371 = vmatmul.mubr.bf16.gmra.mrb[0].mxu0 %v2315
    %v2372 = vpop.f32.mrb[0].mxu0
    %v2373 = vadd.f32 %v2289, %v2372
    %v2374 = vpop.f32.mrb[0].mxu0
    %v2375 = vpop.f32.mrb[0].mxu0
    %v2376 = vadd.f32 %v2289, %v2375
    %v2377 = vpop.f32.mrb[0].mxu0
    %2378 = vmatprep.mubr.bf16.mxu0 0
    %2379 = vmatmul.mubr.bf16.gmra.mrb[0].mxu0 %v2318
    %v2380 = vpop.f32.mrb[0].mxu0
    %v2381 = vadd.f32 %v2289, %v2380
    %v2382 = vpop.f32.mrb[0].mxu0
    %v2383 = vpop.f32.mrb[0].mxu0
    %v2384 = vadd.f32 %v2289, %v2383
    %v2385 = vpop.f32.mrb[0].mxu0
    %2386 = vmatprep.mubr.bf16.mxu0 0
    %2387 = vmatmul.mubr.bf16.gmra.mrb[0].mxu0 %v2321
    %v2388 = vpop.f32.mrb[0].mxu0
    %v2389 = vadd.f32 %v2289, %v2388
    %v2390 = vpop.f32.mrb[0].mxu0
    %v2391 = vpop.f32.mrb[0].mxu0
    %v2392 = vadd.f32 %v2289, %v2391
    %v2393 = vpop.f32.mrb[0].mxu0
    %2394 = vmatprep.mubr.bf16.mxu0 0
    %2395 = vmatmul.mubr.bf16.gmra.mrb[0].mxu0 %v2324
    %v2396 = vpop.f32.mrb[0].mxu0
    %v2397 = vadd.f32 %v2289, %v2396
    %v2398 = vpop.f32.mrb[0].mxu0
    %v2399 = vpop.f32.mrb[0].mxu0
    %v2400 = vadd.f32 %v2289, %v2399
    %v2401 = vpop.f32.mrb[0].mxu0
    %2402 = vmatprep.mubr.bf16.mxu0 0
    %2403 = vmatmul.mubr.bf16.gmra.mrb[0].mxu0 %v2327
    %v2404 = vpop.f32.mrb[0].mxu0
    %v2405 = vadd.f32 %v2289, %v2404
    %v2406 = vpop.f32.mrb[0].mxu0
    %v2407 = vpop.f32.mrb[0].mxu0
    %v2408 = vadd.f32 %v2289, %v2407
    %v2409 = vpop.f32.mrb[0].mxu0
    %2410 = vmatprep.mubr.bf16.mxu0 0
    %2411 = vmatmul.mubr.bf16.gmra.mrb[0].mxu0 %v2330
    %v2412 = vpop.f32.mrb[0].mxu0
    %v2413 = vadd.f32 %v2289, %v2412
    %v2414 = vpop.f32.mrb[0].mxu0
    %v2415 = vpop.f32.mrb[0].mxu0
    %v2416 = vadd.f32 %v2289, %v2415
    %v2417 = vpop.f32.mrb[0].mxu0
    %2418 = vmatprep.mubr.bf16.mxu0 0
    %2419 = vmatmul.mubr.bf16.gmra.mrb[0].mxu0 %v2333
    %v2420 = vpop.f32.mrb[0].mxu0
    %v2421 = vadd.f32 %v2289, %v2420
    %v2422 = vpop.f32.mrb[0].mxu0
    %v2423 = vpop.f32.mrb[0].mxu0
    %v2424 = vadd.f32 %v2289, %v2423
    %v2425 = vpop.f32.mrb[0].mxu0
    %2426 = vmatprep.mubr.bf16.mxu0 0
    %2427 = vmatmul.mubr.bf16.gmra.mrb[0].mxu0 %v2336
    %v2428 = vpop.f32.mrb[0].mxu0
    %v2429 = vadd.f32 %v2289, %v2428
    %v2430 = vpop.f32.mrb[0].mxu0
    %v2431 = vpop.f32.mrb[0].mxu0
    %v2432 = vadd.f32 %v2289, %v2431
    %v2433 = vpop.f32.mrb[0].mxu0
    %2434 = vdwg.mxu0
    %v2435 = vsel %vm262, %v2373, 0.0
    %v2436 = vsel %vm262, %v2376, 0.0
    %v2437 = vadd.f32 %v2435, %v2436
    %v2438 = vsel %vm262, %v2381, 0.0
    %v2439 = vadd.f32 %v2437, %v2438
    %v2440 = vsel %vm262, %v2384, 0.0
    %v2441 = vadd.f32 %v2439, %v2440
    %v2442 = vsel %vm262, %v2389, 0.0
    %v2443 = vadd.f32 %v2441, %v2442
    %v2444 = vsel %vm262, %v2392, 0.0
    %v2445 = vadd.f32 %v2443, %v2444
    %v2446 = vsel %vm262, %v2397, 0.0
    %v2447 = vadd.f32 %v2445, %v2446
    %v2448 = vsel %vm262, %v2400, 0.0
    %v2449 = vadd.f32 %v2447, %v2448
    %v2450 = vsel %vm262, %v2405, 0.0
    %v2451 = vadd.f32 %v2449, %v2450
    %v2452 = vsel %vm262, %v2408, 0.0
    %v2453 = vadd.f32 %v2451, %v2452
    %v2454 = vsel %vm262, %v2413, 0.0
    %v2455 = vadd.f32 %v2453, %v2454
    %v2456 = vsel %vm262, %v2416, 0.0
    %v2457 = vadd.f32 %v2455, %v2456
    %v2458 = vsel %vm262, %v2421, 0.0
    %v2459 = vadd.f32 %v2457, %v2458
    %v2460 = vsel %vm262, %v2424, 0.0
    %v2461 = vadd.f32 %v2459, %v2460
    %v2462 = vsel %vm262, %v2429, 0.0
    %v2463 = vadd.f32 %v2461, %v2462
    %v2464 = vsel %vm262, %v2432, 0.0
    %v2465 = vadd.f32 %v2463, %v2464
    %v2466 = vrot.slane %v2465, 4
    %v2467 = vadd.f32 %v2465, %v2466
    %v2468 = vrot.slane %v2467, 2
    %v2469 = vadd.f32 %v2467, %v2468
    %v2470 = vrot.slane %v2469, 1
    %v2471 = vadd.f32 %v2469, %v2470
    %v2472 = vmul.f32 %v2471, %v300
    %v2473 = vmul.f32 %v2373, %v2373
    %v2474 = vmul.f32 %v2376, %v2376
    %v2475 = vmul.f32 %v2381, %v2381
    %v2476 = vmul.f32 %v2384, %v2384
    %v2477 = vmul.f32 %v2389, %v2389
    %v2478 = vmul.f32 %v2392, %v2392
    %v2479 = vmul.f32 %v2397, %v2397
    %v2480 = vmul.f32 %v2400, %v2400
    %v2481 = vmul.f32 %v2405, %v2405
    %v2482 = vmul.f32 %v2408, %v2408
    %v2483 = vmul.f32 %v2413, %v2413
    %v2484 = vmul.f32 %v2416, %v2416
    %v2485 = vmul.f32 %v2421, %v2421
    %v2486 = vmul.f32 %v2424, %v2424
    %v2487 = vmul.f32 %v2429, %v2429
    %v2488 = vmul.f32 %v2432, %v2432
    %v2489 = vsel %vm262, %v2473, 0.0
    %v2490 = vsel %vm262, %v2474, 0.0
    %v2491 = vadd.f32 %v2489, %v2490
    %v2492 = vsel %vm262, %v2475, 0.0
    %v2493 = vadd.f32 %v2491, %v2492
    %v2494 = vsel %vm262, %v2476, 0.0
    %v2495 = vadd.f32 %v2493, %v2494
    %v2496 = vsel %vm262, %v2477, 0.0
    %v2497 = vadd.f32 %v2495, %v2496
    %v2498 = vsel %vm262, %v2478, 0.0
    %v2499 = vadd.f32 %v2497, %v2498
    %v2500 = vsel %vm262, %v2479, 0.0
    %v2501 = vadd.f32 %v2499, %v2500
    %v2502 = vsel %vm262, %v2480, 0.0
    %v2503 = vadd.f32 %v2501, %v2502
    %v2504 = vsel %vm262, %v2481, 0.0
    %v2505 = vadd.f32 %v2503, %v2504
    %v2506 = vsel %vm262, %v2482, 0.0
    %v2507 = vadd.f32 %v2505, %v2506
    %v2508 = vsel %vm262, %v2483, 0.0
    %v2509 = vadd.f32 %v2507, %v2508
    %v2510 = vsel %vm262, %v2484, 0.0
    %v2511 = vadd.f32 %v2509, %v2510
    %v2512 = vsel %vm262, %v2485, 0.0
    %v2513 = vadd.f32 %v2511, %v2512
    %v2514 = vsel %vm262, %v2486, 0.0
    %v2515 = vadd.f32 %v2513, %v2514
    %v2516 = vsel %vm262, %v2487, 0.0
    %v2517 = vadd.f32 %v2515, %v2516
    %v2518 = vsel %vm262, %v2488, 0.0
    %v2519 = vadd.f32 %v2517, %v2518
    %v2520 = vrot.slane %v2519, 4
    %v2521 = vadd.f32 %v2519, %v2520
    %v2522 = vrot.slane %v2521, 2
    %v2523 = vadd.f32 %v2521, %v2522
    %v2524 = vrot.slane %v2523, 1
    %v2525 = vadd.f32 %v2523, %v2524
    %v2526 = vmul.f32 %v2525, %v300
    %v2527 = vmul.f32 %v2472, %v2472
    %v2528 = vsub.f32 %v2526, %v2527
    %v2529 = vsub.f32 %v2373, %v2472
    %v2530 = vsub.f32 %v2376, %v2472
    %v2531 = vsub.f32 %v2381, %v2472
    %v2532 = vsub.f32 %v2384, %v2472
    %v2533 = vsub.f32 %v2389, %v2472
    %v2534 = vsub.f32 %v2392, %v2472
    %v2535 = vsub.f32 %v2397, %v2472
    %v2536 = vsub.f32 %v2400, %v2472
    %v2537 = vsub.f32 %v2405, %v2472
    %v2538 = vsub.f32 %v2408, %v2472
    %v2539 = vsub.f32 %v2413, %v2472
    %v2540 = vsub.f32 %v2416, %v2472
    %v2541 = vsub.f32 %v2421, %v2472
    %v2542 = vsub.f32 %v2424, %v2472
    %v2543 = vsub.f32 %v2429, %v2472
    %v2544 = vsub.f32 %v2432, %v2472
    %v2545 = vadd.f32 %v2528, 1e-05
    %v2546 = vrsqrt.pop %v2545
    %v2547 = vmul.f32 %v2529, %v2546
    %v2548 = vmul.f32 %v2530, %v2546
    %v2549 = vmul.f32 %v2531, %v2546
    %v2550 = vmul.f32 %v2532, %v2546
    %v2551 = vmul.f32 %v2533, %v2546
    %v2552 = vmul.f32 %v2534, %v2546
    %v2553 = vmul.f32 %v2535, %v2546
    %v2554 = vmul.f32 %v2536, %v2546
    %v2555 = vmul.f32 %v2537, %v2546
    %v2556 = vmul.f32 %v2538, %v2546
    %v2557 = vmul.f32 %v2539, %v2546
    %v2558 = vmul.f32 %v2540, %v2546
    %v2559 = vmul.f32 %v2541, %v2546
    %v2560 = vmul.f32 %v2542, %v2546
    %v2561 = vmul.f32 %v2543, %v2546
    %v2562 = vmul.f32 %v2544, %v2546
    %v2563 = vld [vmem:[%s16 + $0x1] sm:$0x1]
    %v2564 = vlaneseq
    %v2565 = vshrl.u32 %v2564, 7
    %v2566 = vsub.s32 0, %v2565
    %v2567 = vrot.slane %v2563, %v2566
    %v2568 = vmul.f32 %v2547, %v2567
    %v2569 = vmul.f32 %v2548, %v2567
    %v2570 = vmul.f32 %v2549, %v2567
    %v2571 = vmul.f32 %v2550, %v2567
    %v2572 = vmul.f32 %v2551, %v2567
    %v2573 = vmul.f32 %v2552, %v2567
    %v2574 = vmul.f32 %v2553, %v2567
    %v2575 = vmul.f32 %v2554, %v2567
    %v2576 = vmul.f32 %v2555, %v2567
    %v2577 = vmul.f32 %v2556, %v2567
    %v2578 = vmul.f32 %v2557, %v2567
    %v2579 = vmul.f32 %v2558, %v2567
    %v2580 = vmul.f32 %v2559, %v2567
    %v2581 = vmul.f32 %v2560, %v2567
    %v2582 = vmul.f32 %v2561, %v2567
    %v2583 = vmul.f32 %v2562, %v2567
    %v2584 = vld [vmem:[%s16 + $0x2] sm:$0x1]
    %v2585 = vlaneseq
    %v2586 = vshrl.u32 %v2585, 7
    %v2587 = vsub.s32 0, %v2586
    %v2588 = vrot.slane %v2584, %v2587
    %v2589 = vadd.f32 %v2568, %v2588
    %v2590 = vadd.f32 %v2569, %v2588
    %v2591 = vadd.f32 %v2570, %v2588
    %v2592 = vadd.f32 %v2571, %v2588
    %v2593 = vadd.f32 %v2572, %v2588
    %v2594 = vadd.f32 %v2573, %v2588
    %v2595 = vadd.f32 %v2574, %v2588
    %v2596 = vadd.f32 %v2575, %v2588
    %v2597 = vadd.f32 %v2576, %v2588
    %v2598 = vadd.f32 %v2577, %v2588
    %v2599 = vadd.f32 %v2578, %v2588
    %v2600 = vadd.f32 %v2579, %v2588
    %v2601 = vadd.f32 %v2580, %v2588
    %v2602 = vadd.f32 %v2581, %v2588
    %v2603 = vadd.f32 %v2582, %v2588
    %v2604 = vadd.f32 %v2583, %v2588
    %vm2605 = vcmp.ge.f32.partialorder %v2589, 0.0
    %vm2606 = vcmp.ge.f32.partialorder %v2590, 0.0
    %vm2607 = vcmp.ge.f32.partialorder %v2591, 0.0
    %vm2608 = vcmp.ge.f32.partialorder %v2592, 0.0
    %vm2609 = vcmp.ge.f32.partialorder %v2593, 0.0
    %vm2610 = vcmp.ge.f32.partialorder %v2594, 0.0
    %vm2611 = vcmp.ge.f32.partialorder %v2595, 0.0
    %vm2612 = vcmp.ge.f32.partialorder %v2596, 0.0
    %vm2613 = vcmp.ge.f32.partialorder %v2597, 0.0
    %vm2614 = vcmp.ge.f32.partialorder %v2598, 0.0
    %vm2615 = vcmp.ge.f32.partialorder %v2599, 0.0
    %vm2616 = vcmp.ge.f32.partialorder %v2600, 0.0
    %vm2617 = vcmp.ge.f32.partialorder %v2601, 0.0
    %vm2618 = vcmp.ge.f32.partialorder %v2602, 0.0
    %vm2619 = vcmp.ge.f32.partialorder %v2603, 0.0
    %vm2620 = vcmp.ge.f32.partialorder %v2604, 0.0
    %v2621 = vstv %s2268
    %v2622 = vmul.f32 %v2621, %v2589
    %v2623 = vmul.f32 %v2621, %v2590
    %v2624 = vmul.f32 %v2621, %v2591
    %v2625 = vmul.f32 %v2621, %v2592
    %v2626 = vmul.f32 %v2621, %v2593
    %v2627 = vmul.f32 %v2621, %v2594
    %v2628 = vmul.f32 %v2621, %v2595
    %v2629 = vmul.f32 %v2621, %v2596
    %v2630 = vmul.f32 %v2621, %v2597
    %v2631 = vmul.f32 %v2621, %v2598
    %v2632 = vmul.f32 %v2621, %v2599
    %v2633 = vmul.f32 %v2621, %v2600
    %v2634 = vmul.f32 %v2621, %v2601
    %v2635 = vmul.f32 %v2621, %v2602
    %v2636 = vmul.f32 %v2621, %v2603
    %v2637 = vmul.f32 %v2621, %v2604
    %v2638 = vsel %vm2605, %v2589, %v2622
    %v2639 = vsel %vm2606, %v2590, %v2623
    %v2640 = vsel %vm2607, %v2591, %v2624
    %v2641 = vsel %vm2608, %v2592, %v2625
    %v2642 = vsel %vm2609, %v2593, %v2626
    %v2643 = vsel %vm2610, %v2594, %v2627
    %v2644 = vsel %vm2611, %v2595, %v2628
    %v2645 = vsel %vm2612, %v2596, %v2629
    %v2646 = vsel %vm2613, %v2597, %v2630
    %v2647 = vsel %vm2614, %v2598, %v2631
    %v2648 = vsel %vm2615, %v2599, %v2632
    %v2649 = vsel %vm2616, %v2600, %v2633
    %v2650 = vsel %vm2617, %v2601, %v2634
    %v2651 = vsel %vm2618, %v2602, %v2635
    %v2652 = vsel %vm2619, %v2603, %v2636
    %v2653 = vsel %vm2620, %v2604, %v2637
    %v2654 = vpack.c.bf16 %v2639, %v2638
    %v2655 = vpack.c.bf16 %v2641, %v2640
    %v2656 = vpack.c.bf16 %v2643, %v2642
    %v2657 = vpack.c.bf16 %v2645, %v2644
    %v2658 = vpack.c.bf16 %v2647, %v2646
    %v2659 = vpack.c.bf16 %v2649, %v2648
    %v2660 = vpack.c.bf16 %v2651, %v2650
    %v2661 = vpack.c.bf16 %v2653, %v2652
    %v2662 = vld [vmem:[%s17] sm:$0xf]
    %v2663 = vld [vmem:[%s17 + $0x4] sm:$0xf]
    %v2664 = vld [vmem:[%s17 + $0x8] sm:$0xf]
    %v2665 = vld [vmem:[%s17 + $0xc] sm:$0xf]
    %v2666 = vld [vmem:[%s18] sm:$0x1]
    %v2668 = vlaneseq
    %v2669 = vshrl.u32 %v2668, 7
    %v2670 = vsub.s32 0, %v2669
    %v2671 = vrot.slane %v2666, %v2670
    %v2677 = vunpack.c.l.b16 %v2662
    %v2678 = vunpack.c.l.b16 %v2663
    %v2679 = vunpack.c.l.b16 %v2664
    %v2680 = vunpack.c.l.b16 %v2665
    %v2681 = vpack.c.b16 %v2678, %v2677
    %v2682 = vpack.c.b16 %v2680, %v2679
    %v2686 = vsel %vm262, %v2654, 0
    %v2689 = vsel %vm262, %v2655, 0
    %v2692 = vsel %vm262, %v2656, 0
    %v2695 = vsel %vm262, %v2657, 0
    %v2698 = vsel %vm262, %v2658, 0
    %v2701 = vsel %vm262, %v2659, 0
    %v2704 = vsel %vm262, %v2660, 0
    %v2707 = vsel %vm262, %v2661, 0
    %2709 = vmatprep.subr.bf16.mxu0 0
    %2710 = vmatpush1.bf16.msra.mxu0 %v2681
    %2711 = vmatprep.subr.bf16.mxu0 0
    %2712 = vmatpush1.bf16.msra.mxu0 %v2682
    %2713 = vmatprep.subr.bf16.mxu0 0
    %2714 = vmatpush1.bf16.msra.mxu0 0
    %2715 = vmatprep.subr.bf16.mxu0 0
    %2716 = vmatpush1.bf16.msra.mxu0 0
    %2717 = vmatprep.subr.bf16.mxu0 0
    %2718 = vmatpush1.bf16.msra.mxu0 0
    %2719 = vmatprep.subr.bf16.mxu0 0
    %2720 = vmatpush1.bf16.msra.mxu0 0
    %2721 = vmatprep.subr.bf16.mxu0 0
    %2722 = vmatpush1.bf16.msra.mxu0 0
    %2723 = vmatprep.subr.bf16.mxu0 0
    %2724 = vmatpush1.bf16.msra.mxu0 0
    %2725 = vmatprep.subr.bf16.mxu0 0
    %2726 = vmatpush1.bf16.msra.mxu0 0
    %2727 = vmatprep.subr.bf16.mxu0 0
    %2728 = vmatpush1.bf16.msra.mxu0 0
    %2729 = vmatprep.subr.bf16.mxu0 0
    %2730 = vmatpush1.bf16.msra.mxu0 0
    %2731 = vmatprep.subr.bf16.mxu0 0
    %2732 = vmatpush1.bf16.msra.mxu0 0
    %2733 = vmatprep.subr.bf16.mxu0 0
    %2734 = vmatpush1.bf16.msra.mxu0 0
    %2735 = vmatprep.subr.bf16.mxu0 0
    %2736 = vmatpush1.bf16.msra.mxu0 0
    %2737 = vmatprep.subr.bf16.mxu0 0
    %2738 = vmatpush1.bf16.msra.mxu0 0
    %2739 = vmatprep.subr.bf16.mxu0 0
    %2740 = vmatpush1.bf16.msra.mxu0 0
    %2741 = vmatprep.mubr.bf16.mxu0 0
    %2742 = vmatmul.mubr.bf16.gmra.mrb[0].mxu0 %v2686
    %v2743 = vpop.f32.mrb[0].mxu0
    %v2744 = vadd.f32 %v2671, %v2743
    %v2745 = vpop.f32.mrb[0].mxu0
    %v2746 = vpop.f32.mrb[0].mxu0
    %v2747 = vadd.f32 %v2671, %v2746
    %v2748 = vpop.f32.mrb[0].mxu0
    %2749 = vmatprep.mubr.bf16.mxu0 0
    %2750 = vmatmul.mubr.bf16.gmra.mrb[0].mxu0 %v2689
    %v2751 = vpop.f32.mrb[0].mxu0
    %v2752 = vadd.f32 %v2671, %v2751
    %v2753 = vpop.f32.mrb[0].mxu0
    %v2754 = vpop.f32.mrb[0].mxu0
    %v2755 = vadd.f32 %v2671, %v2754
    %v2756 = vpop.f32.mrb[0].mxu0
    %2757 = vmatprep.mubr.bf16.mxu0 0
    %2758 = vmatmul.mubr.bf16.gmra.mrb[0].mxu0 %v2692
    %v2759 = vpop.f32.mrb[0].mxu0
    %v2760 = vadd.f32 %v2671, %v2759
    %v2761 = vpop.f32.mrb[0].mxu0
    %v2762 = vpop.f32.mrb[0].mxu0
    %v2763 = vadd.f32 %v2671, %v2762
    %v2764 = vpop.f32.mrb[0].mxu0
    %2765 = vmatprep.mubr.bf16.mxu0 0
    %2766 = vmatmul.mubr.bf16.gmra.mrb[0].mxu0 %v2695
    %v2767 = vpop.f32.mrb[0].mxu0
    %v2768 = vadd.f32 %v2671, %v2767
    %v2769 = vpop.f32.mrb[0].mxu0
    %v2770 = vpop.f32.mrb[0].mxu0
    %v2771 = vadd.f32 %v2671, %v2770
    %v2772 = vpop.f32.mrb[0].mxu0
    %2773 = vmatprep.mubr.bf16.mxu0 0
    %2774 = vmatmul.mubr.bf16.gmra.mrb[0].mxu0 %v2698
    %v2775 = vpop.f32.mrb[0].mxu0
    %v2776 = vadd.f32 %v2671, %v2775
    %v2777 = vpop.f32.mrb[0].mxu0
    %v2778 = vpop.f32.mrb[0].mxu0
    %v2779 = vadd.f32 %v2671, %v2778
    %v2780 = vpop.f32.mrb[0].mxu0
    %2781 = vmatprep.mubr.bf16.mxu0 0
    %2782 = vmatmul.mubr.bf16.gmra.mrb[0].mxu0 %v2701
    %v2783 = vpop.f32.mrb[0].mxu0
    %v2784 = vadd.f32 %v2671, %v2783
    %v2785 = vpop.f32.mrb[0].mxu0
    %v2786 = vpop.f32.mrb[0].mxu0
    %v2787 = vadd.f32 %v2671, %v2786
    %v2788 = vpop.f32.mrb[0].mxu0
    %2789 = vmatprep.mubr.bf16.mxu0 0
    %2790 = vmatmul.mubr.bf16.gmra.mrb[0].mxu0 %v2704
    %v2791 = vpop.f32.mrb[0].mxu0
    %v2792 = vadd.f32 %v2671, %v2791
    %v2793 = vpop.f32.mrb[0].mxu0
    %v2794 = vpop.f32.mrb[0].mxu0
    %v2795 = vadd.f32 %v2671, %v2794
    %v2796 = vpop.f32.mrb[0].mxu0
    %2797 = vmatprep.mubr.bf16.mxu0 0
    %2798 = vmatmul.mubr.bf16.gmra.mrb[0].mxu0 %v2707
    %v2799 = vpop.f32.mrb[0].mxu0
    %v2800 = vadd.f32 %v2671, %v2799
    %v2801 = vpop.f32.mrb[0].mxu0
    %v2802 = vpop.f32.mrb[0].mxu0
    %v2803 = vadd.f32 %v2671, %v2802
    %v2804 = vpop.f32.mrb[0].mxu0
    %2805 = vdwg.mxu0
    %v2806 = vxor.u32 %v2744, 2147483648
    %v2807 = vxor.u32 %v2747, 2147483648
    %v2808 = vxor.u32 %v2752, 2147483648
    %v2809 = vxor.u32 %v2755, 2147483648
    %v2810 = vxor.u32 %v2760, 2147483648
    %v2811 = vxor.u32 %v2763, 2147483648
    %v2812 = vxor.u32 %v2768, 2147483648
    %v2813 = vxor.u32 %v2771, 2147483648
    %v2814 = vxor.u32 %v2776, 2147483648
    %v2815 = vxor.u32 %v2779, 2147483648
    %v2816 = vxor.u32 %v2784, 2147483648
    %v2817 = vxor.u32 %v2787, 2147483648
    %v2818 = vxor.u32 %v2792, 2147483648
    %v2819 = vxor.u32 %v2795, 2147483648
    %v2820 = vxor.u32 %v2800, 2147483648
    %v2821 = vxor.u32 %v2803, 2147483648
    %v2822 = vmul.f32 %v2806, 1.442695
    %v2823 = vpow.pop %v2822
    %v2824 = vmul.f32 %v2807, 1.442695
    %v2825 = vpow.pop %v2824
    %v2826 = vmul.f32 %v2808, 1.442695
    %v2827 = vpow.pop %v2826
    %v2828 = vmul.f32 %v2809, 1.442695
    %v2829 = vpow.pop %v2828
    %v2830 = vmul.f32 %v2810, 1.442695
    %v2831 = vpow.pop %v2830
    %v2832 = vmul.f32 %v2811, 1.442695
    %v2833 = vpow.pop %v2832
    %v2834 = vmul.f32 %v2812, 1.442695
    %v2835 = vpow.pop %v2834
    %v2836 = vmul.f32 %v2813, 1.442695
    %v2837 = vpow.pop %v2836
    %v2838 = vmul.f32 %v2814, 1.442695
    %v2839 = vpow.pop %v2838
    %v2840 = vmul.f32 %v2815, 1.442695
    %v2841 = vpow.pop %v2840
    %v2842 = vmul.f32 %v2816, 1.442695
    %v2843 = vpow.pop %v2842
    %v2844 = vmul.f32 %v2817, 1.442695
    %v2845 = vpow.pop %v2844
    %v2846 = vmul.f32 %v2818, 1.442695
    %v2847 = vpow.pop %v2846
    %v2848 = vmul.f32 %v2819, 1.442695
    %v2849 = vpow.pop %v2848
    %v2850 = vmul.f32 %v2820, 1.442695
    %v2851 = vpow.pop %v2850
    %v2852 = vmul.f32 %v2821, 1.442695
    %v2853 = vpow.pop %v2852
    %v2854 = vadd.f32 %v2823, 1.0
    %v2855 = vadd.f32 %v2825, 1.0
    %v2856 = vadd.f32 %v2827, 1.0
    %v2857 = vadd.f32 %v2829, 1.0
    %v2858 = vadd.f32 %v2831, 1.0
    %v2859 = vadd.f32 %v2833, 1.0
    %v2860 = vadd.f32 %v2835, 1.0
    %v2861 = vadd.f32 %v2837, 1.0
    %v2862 = vadd.f32 %v2839, 1.0
    %v2863 = vadd.f32 %v2841, 1.0
    %v2864 = vadd.f32 %v2843, 1.0
    %v2865 = vadd.f32 %v2845, 1.0
    %v2866 = vadd.f32 %v2847, 1.0
    %v2867 = vadd.f32 %v2849, 1.0
    %v2868 = vadd.f32 %v2851, 1.0
    %v2869 = vadd.f32 %v2853, 1.0
    %v2870 = vrcp.pop %v2854
    %v2871 = vmul.f32 1.0, %v2870
    %v2872 = vrcp.pop %v2855
    %v2873 = vmul.f32 1.0, %v2872
    %v2874 = vrcp.pop %v2856
    %v2875 = vmul.f32 1.0, %v2874
    %v2876 = vrcp.pop %v2857
    %v2877 = vmul.f32 1.0, %v2876
    %v2878 = vrcp.pop %v2858
    %v2879 = vmul.f32 1.0, %v2878
    %v2880 = vrcp.pop %v2859
    %v2881 = vmul.f32 1.0, %v2880
    %v2882 = vrcp.pop %v2860
    %v2883 = vmul.f32 1.0, %v2882
    %v2884 = vrcp.pop %v2861
    %v2885 = vmul.f32 1.0, %v2884
    %v2886 = vrcp.pop %v2862
    %v2887 = vmul.f32 1.0, %v2886
    %v2888 = vrcp.pop %v2863
    %v2889 = vmul.f32 1.0, %v2888
    %v2890 = vrcp.pop %v2864
    %v2891 = vmul.f32 1.0, %v2890
    %v2892 = vrcp.pop %v2865
    %v2893 = vmul.f32 1.0, %v2892
    %v2894 = vrcp.pop %v2866
    %v2895 = vmul.f32 1.0, %v2894
    %v2896 = vrcp.pop %v2867
    %v2897 = vmul.f32 1.0, %v2896
    %v2898 = vrcp.pop %v2868
    %v2899 = vmul.f32 1.0, %v2898
    %v2900 = vrcp.pop %v2869
    %v2901 = vmul.f32 1.0, %v2900
    %2902 = vst.msk [vmem:[%s19] sm:$0xff] %vm140, %v2871
    %2903 = vst.msk [vmem:[%s19 + $0x8] sm:$0xff] %vm140, %v2873
    %2904 = vst.msk [vmem:[%s19 + $0x10] sm:$0xff] %vm140, %v2875
    %2905 = vst.msk [vmem:[%s19 + $0x18] sm:$0xff] %vm140, %v2877
    %2906 = vst.msk [vmem:[%s19 + $0x20] sm:$0xff] %vm140, %v2879
    %2907 = vst.msk [vmem:[%s19 + $0x28] sm:$0xff] %vm140, %v2881
    %2908 = vst.msk [vmem:[%s19 + $0x30] sm:$0xff] %vm140, %v2883
    %2909 = vst.msk [vmem:[%s19 + $0x38] sm:$0xff] %vm140, %v2885
    %2910 = vst.msk [vmem:[%s19 + $0x40] sm:$0xff] %vm140, %v2887
    %2911 = vst.msk [vmem:[%s19 + $0x48] sm:$0xff] %vm140, %v2889
    %2912 = vst.msk [vmem:[%s19 + $0x50] sm:$0xff] %vm140, %v2891
    %2913 = vst.msk [vmem:[%s19 + $0x58] sm:$0xff] %vm140, %v2893
    %2914 = vst.msk [vmem:[%s19 + $0x60] sm:$0xff] %vm140, %v2895
    %2915 = vst.msk [vmem:[%s19 + $0x68] sm:$0xff] %vm140, %v2897
    %2916 = vst.msk [vmem:[%s19 + $0x70] sm:$0xff] %vm140, %v2899
    %2917 = vst.msk [vmem:[%s19 + $0x78] sm:$0xff] %vm140, %v2901
    %2918 = vst.msk [vmem:[%s20] sm:$0xff] %vm262, %v1321
    %2919 = vst.msk [vmem:[%s20 + $0x8] sm:$0xff] %vm262, %v1324
    %2920 = vst.msk [vmem:[%s20 + $0x10] sm:$0xff] %vm262, %v1329
    %2921 = vst.msk [vmem:[%s20 + $0x18] sm:$0xff] %vm262, %v1332
    %2922 = vst.msk [vmem:[%s20 + $0x20] sm:$0xff] %vm262, %v1337
    %2923 = vst.msk [vmem:[%s20 + $0x28] sm:$0xff] %vm262, %v1340
    %2924 = vst.msk [vmem:[%s20 + $0x30] sm:$0xff] %vm262, %v1345
    %2925 = vst.msk [vmem:[%s20 + $0x38] sm:$0xff] %vm262, %v1348
    %2926 = vst.msk [vmem:[%s20 + $0x40] sm:$0xff] %vm262, %v1353
    %2927 = vst.msk [vmem:[%s20 + $0x48] sm:$0xff] %vm262, %v1356
    %2928 = vst.msk [vmem:[%s20 + $0x50] sm:$0xff] %vm262, %v1361
    %2929 = vst.msk [vmem:[%s20 + $0x58] sm:$0xff] %vm262, %v1364
    %2930 = vst.msk [vmem:[%s20 + $0x60] sm:$0xff] %vm262, %v1369
    %2931 = vst.msk [vmem:[%s20 + $0x68] sm:$0xff] %vm262, %v1372
    %2932 = vst.msk [vmem:[%s20 + $0x70] sm:$0xff] %vm262, %v1377
    %2933 = vst.msk [vmem:[%s20 + $0x78] sm:$0xff] %vm262, %v1380
    // Predicated region
    $region82: #{vae_forward.1} parent=1 // pred_check
      _
    $region83: #{vae_forward.1} parent=1 // pred_check_branch
      %2935 = sbr.rel (0) target = $region85
    $region84: #{vae_forward.1} parent=1 // pred_region
      _
    $region85: #{vae_forward.1} parent=1 // pred_fallthru
      _
    // Predicated region
    $region86: #{vae_forward.1} parent=1 // pred_check
      _
    $region87: #{vae_forward.1} parent=1 // pred_check_branch
      %2937 = sbr.rel (0) target = $region89
    $region88: #{vae_forward.1} parent=1 // pred_region
      _
    $region89: #{vae_forward.1} parent=1 // pred_fallthru
      _
    // Predicated region
    $region90: #{vae_forward.1} parent=1 // pred_check
      _
    $region91: #{vae_forward.1} parent=1 // pred_check_branch
      %2939 = sbr.rel (0) target = $region93
    $region92: #{vae_forward.1} parent=1 // pred_region
      _
    $region93: #{vae_forward.1} parent=1 // pred_fallthru
      _
    // Predicated region
    $region94: #{vae_forward.1} parent=1 // pred_check
      _
    $region95: #{vae_forward.1} parent=1 // pred_check_branch
      %2941 = sbr.rel (0) target = $region97
    $region96: #{vae_forward.1} parent=1 // pred_region
      _
    $region97: #{vae_forward.1} parent=1 // pred_fallthru
      _
    %2942 = vsyncpa [#allocation3], 1

</llo_original>
